<compile_context>
chip_gen: v5e
topology: v5e:2x2
jax: 0.10.0
libtpu: 0.0.40
codegen_flags: <defaults>
</compile_context>

<pallas_src>
import functools

import jax
import jax.numpy as jnp
from jax import lax
from jax.experimental import pallas as pl
from jax.experimental.pallas import tpu as pltpu

# ---------------------------------------------------------------------------
# Small, deterministic sizes consistent with the forward pass.
# ---------------------------------------------------------------------------
B = 2      # batch
T = 8      # sequence length
V = 32     # vocabulary size
D = 16     # token embedding dim
DL = 8     # label embedding dim
H = 32     # GRU hidden dim
HD = 16    # discriminator hidden dim
H3 = 3 * H
LANES = 128            # == H3 + V  (fused whh_d|wout lane width)

# ---- packed-weight buffer row layout (static offsets, 8-aligned big blocks) -
R_HDOUT = 0            # 32 rows, 128 lanes : [whh_d | wout]
R_BHDOUT = 32          # 1 row,   128 lanes : [bhh_d | bout]
R_LDW1L = 33           # 2 rows,   16 lanes : Ld @ w1l + b1
R_B2 = 35              # 1 row,     1 lane  : b2
R_LGCOMP = 36          # 2 rows,   96 lanes : L @ wih_d_l + bih_d
R_BIHE = 38            # 1 row,    96 lanes : bih_e
R_BHHE = 39            # 1 row,    96 lanes : bhh_e
R_W1H = 40             # 32 rows,  16 lanes : w1h
R_W2 = 72              # 16 rows,   1 lane  : w2
R_WECOMP = 88          # 32 rows,  96 lanes : E @ wih_e
R_WDCOMP = 120         # 32 rows,  96 lanes : E @ wih_d[:D]
R_WHHE = 152           # 32 rows,  96 lanes : whh_e
R_TOTAL = 184


# ---------------------------------------------------------------------------
# Fused CPTG forward kernel (single pallas_call, no grid — everything VMEM).
# ---------------------------------------------------------------------------
def cptg_kernel(wpk_ref,       # (R_TOTAL, 128) f32 packed weights
                x_ref,         # (T*B, 1) int32 time-major token ids of X
                lab_ref,       # (B, 1)   int32 labels
                verdict_ref,   # out (3B, 1) f32 : [y_verdict | x_verdict | x_verdict_l_]
                logits_ref):   # out (B, T, V) f32 teacher-forced logits
    f32 = jnp.float32
    bf16 = jnp.bfloat16
    dot = functools.partial(jnp.dot, preferred_element_type=f32)

    # ---- unpack weights once (static slices); matmul weights cast to bf16 ---
    W_hd_out = wpk_ref[R_HDOUT:R_HDOUT + H, :].astype(bf16)        # [whh_d|wout]
    b_hd_out = wpk_ref[R_BHDOUT:R_BHDOUT + 1, :]                   # [bhh_d|bout]
    Ldw1l = wpk_ref[R_LDW1L:R_LDW1L + 2, 0:HD].astype(bf16)        # Ld@w1l + b1
    b2 = wpk_ref[R_B2:R_B2 + 1, 0:1]
    Lg_comp = wpk_ref[R_LGCOMP:R_LGCOMP + 2, 0:H3].astype(bf16)    # L@wih_d_l + bih_d
    bih_e = wpk_ref[R_BIHE:R_BIHE + 1, 0:H3]
    bhh_e = wpk_ref[R_BHHE:R_BHHE + 1, 0:H3]
    w1h = wpk_ref[R_W1H:R_W1H + H, 0:HD].astype(bf16)
    w2 = wpk_ref[R_W2:R_W2 + HD, 0:1].astype(bf16)
    We_comp = wpk_ref[R_WECOMP:R_WECOMP + V, 0:H3].astype(bf16)    # E @ wih_e
    Wd_comp = wpk_ref[R_WDCOMP:R_WDCOMP + V, 0:H3]                 # E @ wih_d_x (f32)
    Wd_comp_b = Wd_comp.astype(bf16)
    whh_e = wpk_ref[R_WHHE:R_WHHE + H, 0:H3].astype(bf16)

    # ---- hoisted loop invariants ---------------------------------------------
    lab = lab_ref[...]                                             # (B,1) int32
    iota2 = lax.broadcasted_iota(jnp.int32, (B, 2), 1)
    oh_pos = (iota2 == lab).astype(bf16)                           # onehot(label)
    oh_neg = (iota2 == (1 - lab)).astype(bf16)                     # onehot(1-label)
    gx_lab = dot(oh_pos, Lg_comp)                                  # (B,3H), bih_d folded
    iota_v = lax.broadcasted_iota(jnp.int32, (B, V), 1)            # (B,V)

    def gru(gx_r, gx_z, gx_n, gh, h):
        # PyTorch GRUCell semantics (input/hidden biases already folded in).
        r = jax.nn.sigmoid(gx_r + gh[:, 0:H])
        z = jax.nn.sigmoid(gx_z + gh[:, H:2 * H])
        n = jnp.tanh(gx_n + r * gh[:, 2 * H:3 * H])
        return (1.0 - z) * n + z * h

    def fused_hd(h):
        # ONE MXU matmul: [gh_next | logits] = h @ [whh_d|wout] + [bhh_d|bout]
        cat = dot(h.astype(bf16), W_hd_out) + b_hd_out
        return cat[:, 0:H3], cat[:, H3:H3 + V]

    # ===== pass 1: encoder over X (input matmuls batched over all T steps) ====
    iota_tv = lax.broadcasted_iota(jnp.int32, (T * B, V), 1)
    onehot_x = (iota_tv == x_ref[...]).astype(bf16)                # (T*B, V)
    gxe1 = dot(onehot_x, We_comp) + bih_e                          # (T*B, 3H)
    gxe1_r, gxe1_z, gxe1_n = gxe1[:, 0:H], gxe1[:, H:2 * H], gxe1[:, 2 * H:H3]

    h = jnp.zeros((B, H), f32)
    for t in range(T):                                             # unrolled
        gh = (jnp.broadcast_to(bhh_e, (B, H3)) if t == 0
              else dot(h.astype(bf16), whh_e) + bhh_e)
        s = slice(t * B, (t + 1) * B)
        h = gru(gxe1_r[s], gxe1_z[s], gxe1_n[s], gh, h)

    # ===== pass 1: free-running label-conditioned decode -> onehot(Y) =========
    gh, _ = fused_hd(h)                                            # gh for step 0
    gx = gx_lab + Wd_comp[0:1, :]                                  # BOS = token 0
    sum_hy = jnp.zeros((B, H), f32)
    onehots = []
    for t in range(T):                                             # unrolled
        h = gru(gx[:, 0:H], gx[:, H:2 * H], gx[:, 2 * H:H3], gh, h)
        sum_hy = sum_hy + h
        gh, logits = fused_hd(h)
        # greedy argmax (first-max index, matching torch.argmax tie-breaking)
        mx = jnp.max(logits, axis=-1, keepdims=True)
        yt = jnp.min(jnp.where(logits >= mx, iota_v, V), axis=-1)  # (B,)
        oh = (iota_v == yt[:, None]).astype(bf16)                  # (B, V)
        onehots.append(oh)
        if t + 1 < T:
            gx = dot(oh, Wd_comp_b) + gx_lab                       # onehot @ (E@wih_d_x)

    # ===== pass 2 inputs: batched, off the recurrence ==========================
    onehot_y = jnp.concatenate(onehots, axis=0)                    # (T*B, V) time-major
    gxe2 = dot(onehot_y, We_comp) + bih_e
    gxd2 = dot(onehot_y, Wd_comp_b) + jnp.concatenate([gx_lab] * T, axis=0)
    gxe2_r, gxe2_z, gxe2_n = gxe2[:, 0:H], gxe2[:, H:2 * H], gxe2[:, 2 * H:H3]
    gxd2_r, gxd2_z, gxd2_n = gxd2[:, 0:H], gxd2[:, H:2 * H], gxd2[:, 2 * H:H3]

    # ===== pass 2: encoder over Y ==============================================
    h = jnp.zeros((B, H), f32)
    for t in range(T):                                             # unrolled
        gh = (jnp.broadcast_to(bhh_e, (B, H3)) if t == 0
              else dot(h.astype(bf16), whh_e) + bhh_e)
        s = slice(t * B, (t + 1) * B)
        h = gru(gxe2_r[s], gxe2_z[s], gxe2_n[s], gh, h)

    # ===== pass 2: teacher-forced decode -> output logits ======================
    # Step t consumes embed(Y[t]) (no shift), same as the previous version.
    gh, _ = fused_hd(h)
    sum_hx = jnp.zeros((B, H), f32)
    step_logits = []
    for t in range(T):                                             # unrolled
        s = slice(t * B, (t + 1) * B)
        h = gru(gxd2_r[s], gxd2_z[s], gxd2_n[s], gh, h)
        sum_hx = sum_hx + h
        gh, logits = fused_hd(h)
        step_logits.append(logits)

    # (t, b) -> (b, t) reorder with static row-concats; single unmasked store.
    rows = [step_logits[t][b:b + 1, :] for b in range(B) for t in range(T)]
    logits_ref[...] = jnp.concatenate(rows, axis=0).reshape(B, T, V)

    # ===== discriminator: three scores fused into one stacked evaluation ======
    pooled = (jnp.concatenate([sum_hy, sum_hx, sum_hx], axis=0)
              * (1.0 / T)).astype(bf16)                            # (3B, H)
    labs3 = jnp.concatenate([oh_neg, oh_pos, oh_neg], axis=0)      # (3B, 2)
    zd = jnp.tanh(dot(pooled, w1h) + dot(labs3, Ldw1l))            # b1 folded in Ldw1l
    verdict_ref[...] = dot(zd.astype(bf16), w2) + b2               # (3B, 1)


_VMEM = pl.BlockSpec(memory_space=pltpu.MemorySpace.VMEM)

_cptg_call = pl.pallas_call(
    cptg_kernel,
    out_shape=(
        jax.ShapeDtypeStruct((3 * B, 1), jnp.float32),   # [y | x | x_l_] verdicts
        jax.ShapeDtypeStruct((B, T, V), jnp.float32),    # teacher-forced logits
    ),
    in_specs=[_VMEM, _VMEM, _VMEM],
    out_specs=(_VMEM, _VMEM),
)


# ---------------------------------------------------------------------------
# Parameters (deterministic, in-script) + one-time packing into a single
# (R_TOTAL, 128) f32 buffer (composites E@wih_*, L@wih_d_l, Ld@w1l, fused
# whh_d|wout precomputed here so the kernel sees 1 weight DMA).
# ---------------------------------------------------------------------------
def init_params(key):
    ks = jax.random.split(key, 16)
    s = 0.1

    def n(k, shape):
        return (s * jax.random.normal(k, shape)).astype(jnp.float32)

    return dict(
        E=n(ks[0], (V, D)),                # token embedding
        L=n(ks[1], (2, DL)),               # generator label embedding
        wih_e=n(ks[2], (D, 3 * H)),
        whh_e=n(ks[3], (H, 3 * H)),
        bih_e=n(ks[4], (1, 3 * H)),
        bhh_e=n(ks[5], (1, 3 * H)),
        wih_d=n(ks[6], (D + DL, 3 * H)),
        whh_d=n(ks[7], (H, 3 * H)),
        bih_d=n(ks[8], (1, 3 * H)),
        bhh_d=n(ks[9], (1, 3 * H)),
        wout=n(ks[10], (H, V)),
        bout=n(ks[11], (1, V)),
        Ld=n(ks[12], (2, DL)),             # discriminator label embedding
        w1h=n(ks[13], (H, HD)),
        w1l=n(ks[14], (DL, HD)),
        b1=jnp.zeros((1, HD), jnp.float32),
        w2=n(ks[15], (HD, 1)),
        b2=jnp.zeros((1, 1), jnp.float32),
    )


def pack_params(p):
    hi = lax.Precision.HIGHEST
    hdot = functools.partial(jnp.dot, precision=hi)
    We_comp = hdot(p["E"], p["wih_e"])                         # (V, 3H)
    Wd_comp = hdot(p["E"], p["wih_d"][:D])                     # (V, 3H)
    Lg_comp = hdot(p["L"], p["wih_d"][D:]) + p["bih_d"]        # (2, 3H)
    Ldw1l = hdot(p["Ld"], p["w1l"]) + p["b1"]                  # (2, HD)
    W_hd_out = jnp.concatenate([p["whh_d"], p["wout"]], axis=1)    # (H, 128)
    b_hd_out = jnp.concatenate([p["bhh_d"], p["bout"]], axis=1)    # (1, 128)

    wpk = jnp.zeros((R_TOTAL, LANES), jnp.float32)
    wpk = wpk.at[R_HDOUT:R_HDOUT + H, :].set(W_hd_out)
    wpk = wpk.at[R_BHDOUT, :].set(b_hd_out[0])
    wpk = wpk.at[R_LDW1L:R_LDW1L + 2, :HD].set(Ldw1l)
    wpk = wpk.at[R_B2, 0].set(p["b2"][0, 0])
    wpk = wpk.at[R_LGCOMP:R_LGCOMP + 2, :H3].set(Lg_comp)
    wpk = wpk.at[R_BIHE, :H3].set(p["bih_e"][0])
    wpk = wpk.at[R_BHHE, :H3].set(p["bhh_e"][0])
    wpk = wpk.at[R_W1H:R_W1H + H, :HD].set(p["w1h"])
    wpk = wpk.at[R_W2:R_W2 + HD, 0:1].set(p["w2"])
    wpk = wpk.at[R_WECOMP:R_WECOMP + V, :H3].set(We_comp)
    wpk = wpk.at[R_WDCOMP:R_WDCOMP + V, :H3].set(Wd_comp)
    wpk = wpk.at[R_WHHE:R_WHHE + H, :H3].set(p["whh_e"])
    return wpk


# ---------------------------------------------------------------------------
# Host-side glue: only a tiny int transpose of X (token ids) and the
# slicing of the stacked verdict buffer remain outside the kernel.
# ---------------------------------------------------------------------------
@jax.jit
def cptg_forward(wpk, X, label):
    # X: (B, T) int32 token ids, label: (B,) int32
    x_tm = jnp.transpose(X).reshape(T * B, 1)          # time-major token ids
    lab = label.reshape(B, 1)
    verdicts, output_logits = _cptg_call(wpk, x_tm, lab)
    y_verdict = verdicts[0:B]
    x_verdict = verdicts[B:2 * B]
    x_verdict_l_ = verdicts[2 * B:3 * B]
    return x_verdict, y_verdict, x_verdict_l_, output_logits


# ---------------------------------------------------------------------------
if __name__ == "__main__":
    key = jax.random.PRNGKey(0)
    pkey, xkey = jax.random.split(key)
    params = init_params(pkey)
    wpk = pack_params(params)

    X = jax.random.randint(xkey, (B, T), 0, V, dtype=jnp.int32)   # token ids
    label = jnp.array([0, 1], dtype=jnp.int32)                    # sentiment

    x_verdict, y_verdict, x_verdict_l_, output_logits = cptg_forward(
        wpk, X, label)

    jax.block_until_ready((x_verdict, y_verdict, x_verdict_l_, output_logits))

    assert x_verdict.shape == (B, 1)
    assert y_verdict.shape == (B, 1)
    assert x_verdict_l_.shape == (B, 1)
    assert output_logits.shape == (B, T, V)
    print("KERNEL_OK")
</pallas_src>

<mosaic_0001>
module attributes {stable_mosaic.version = 11 : i64} {
  func.func @cptg_kernel(%arg0: memref<184x128xf32, #tpu.memory_space<vmem>>, %arg1: memref<16x1xi32, #tpu.memory_space<vmem>>, %arg2: memref<2x1xi32, #tpu.memory_space<vmem>>, %arg3: memref<6x1xf32, #tpu.memory_space<vmem>>, %arg4: memref<2x8x32xf32, #tpu.memory_space<vmem>>) attributes {dimension_semantics = [], scalar_prefetch = 0 : i64, scratch_operands = 0 : i64, tpu.core_type = #tpu.core_type<tc>} {
    %c0 = arith.constant 0 : index
    %c0_0 = arith.constant 0 : index
    %0 = vector.load %arg0[%c0, %c0_0] : memref<184x128xf32, #tpu.memory_space<vmem>>, vector<32x128xf32>
    %1 = arith.truncf %0 : vector<32x128xf32> to vector<32x128xbf16>
    %c32 = arith.constant 32 : index
    %c0_1 = arith.constant 0 : index
    %2 = vector.load %arg0[%c32, %c0_1] : memref<184x128xf32, #tpu.memory_space<vmem>>, vector<1x128xf32>
    %c33 = arith.constant 33 : index
    %c0_2 = arith.constant 0 : index
    %3 = vector.load %arg0[%c33, %c0_2] : memref<184x128xf32, #tpu.memory_space<vmem>>, vector<2x16xf32>
    %4 = arith.truncf %3 : vector<2x16xf32> to vector<2x16xbf16>
    %c35 = arith.constant 35 : index
    %c0_3 = arith.constant 0 : index
    %5 = vector.load %arg0[%c35, %c0_3] : memref<184x128xf32, #tpu.memory_space<vmem>>, vector<1x1xf32>
    %c36 = arith.constant 36 : index
    %c0_4 = arith.constant 0 : index
    %6 = vector.load %arg0[%c36, %c0_4] : memref<184x128xf32, #tpu.memory_space<vmem>>, vector<2x96xf32>
    %7 = arith.truncf %6 : vector<2x96xf32> to vector<2x96xbf16>
    %c38 = arith.constant 38 : index
    %c0_5 = arith.constant 0 : index
    %8 = vector.load %arg0[%c38, %c0_5] : memref<184x128xf32, #tpu.memory_space<vmem>>, vector<1x96xf32>
    %c39 = arith.constant 39 : index
    %c0_6 = arith.constant 0 : index
    %9 = vector.load %arg0[%c39, %c0_6] : memref<184x128xf32, #tpu.memory_space<vmem>>, vector<1x96xf32>
    %c40 = arith.constant 40 : index
    %c0_7 = arith.constant 0 : index
    %10 = vector.load %arg0[%c40, %c0_7] : memref<184x128xf32, #tpu.memory_space<vmem>>, vector<32x16xf32>
    %11 = arith.truncf %10 : vector<32x16xf32> to vector<32x16xbf16>
    %c72 = arith.constant 72 : index
    %c0_8 = arith.constant 0 : index
    %12 = vector.load %arg0[%c72, %c0_8] : memref<184x128xf32, #tpu.memory_space<vmem>>, vector<16x1xf32>
    %13 = arith.truncf %12 : vector<16x1xf32> to vector<16x1xbf16>
    %c88 = arith.constant 88 : index
    %c0_9 = arith.constant 0 : index
    %14 = vector.load %arg0[%c88, %c0_9] : memref<184x128xf32, #tpu.memory_space<vmem>>, vector<32x96xf32>
    %15 = arith.truncf %14 : vector<32x96xf32> to vector<32x96xbf16>
    %c120 = arith.constant 120 : index
    %c0_10 = arith.constant 0 : index
    %16 = vector.load %arg0[%c120, %c0_10] : memref<184x128xf32, #tpu.memory_space<vmem>>, vector<32x96xf32>
    %17 = arith.truncf %16 : vector<32x96xf32> to vector<32x96xbf16>
    %c152 = arith.constant 152 : index
    %c0_11 = arith.constant 0 : index
    %18 = vector.load %arg0[%c152, %c0_11] : memref<184x128xf32, #tpu.memory_space<vmem>>, vector<32x96xf32>
    %19 = arith.truncf %18 : vector<32x96xf32> to vector<32x96xbf16>
    %c0_12 = arith.constant 0 : index
    %c0_13 = arith.constant 0 : index
    %20 = vector.load %arg2[%c0_12, %c0_13] : memref<2x1xi32, #tpu.memory_space<vmem>>, vector<2x1xi32>
    %21 = tpu.iota {dimensions = array<i32: 1>} : vector<2x2xi32>
    %22 = vector.broadcast %20 : vector<2x1xi32> to vector<2x2xi32>
    %23 = arith.cmpi eq, %21, %22 : vector<2x2xi32>
    %24 = arith.extui %23 : vector<2x2xi1> to vector<2x2xi32>
    %25 = arith.sitofp %24 : vector<2x2xi32> to vector<2x2xf32>
    %26 = arith.truncf %25 : vector<2x2xf32> to vector<2x2xbf16>
    %c1_i32 = arith.constant 1 : i32
    %27 = vector.broadcast %c1_i32 : i32 to vector<2x1xi32>
    %28 = arith.subi %27, %20 : vector<2x1xi32>
    %29 = vector.broadcast %28 : vector<2x1xi32> to vector<2x2xi32>
    %30 = arith.cmpi eq, %21, %29 : vector<2x2xi32>
    %31 = arith.extui %30 : vector<2x2xi1> to vector<2x2xi32>
    %32 = arith.sitofp %31 : vector<2x2xi32> to vector<2x2xf32>
    %33 = arith.truncf %32 : vector<2x2xf32> to vector<2x2xbf16>
    %cst = arith.constant dense<0.000000e+00> : vector<2x96xf32>
    %34 = tpu.matmul %26, %7, %cst {dimension_numbers = #tpu.dot_dimension_numbers<[1], [0], [0], [1], [0, 0, 1, 1], [], []>} : vector<2x2xbf16>, vector<2x96xbf16>, vector<2x96xf32> -> vector<2x96xf32>
    %35 = tpu.iota {dimensions = array<i32: 1>} : vector<2x32xi32>
    %36 = tpu.iota {dimensions = array<i32: 1>} : vector<16x32xi32>
    %c0_14 = arith.constant 0 : index
    %c0_15 = arith.constant 0 : index
    %37 = vector.load %arg1[%c0_14, %c0_15] : memref<16x1xi32, #tpu.memory_space<vmem>>, vector<16x1xi32>
    %38 = vector.broadcast %37 : vector<16x1xi32> to vector<16x32xi32>
    %39 = arith.cmpi eq, %36, %38 : vector<16x32xi32>
    %40 = arith.extui %39 : vector<16x32xi1> to vector<16x32xi32>
    %41 = arith.sitofp %40 : vector<16x32xi32> to vector<16x32xf32>
    %42 = arith.truncf %41 : vector<16x32xf32> to vector<16x32xbf16>
    %cst_16 = arith.constant dense<0.000000e+00> : vector<16x96xf32>
    %43 = tpu.matmul %42, %15, %cst_16 {dimension_numbers = #tpu.dot_dimension_numbers<[1], [0], [0], [1], [0, 0, 1, 1], [], []>} : vector<16x32xbf16>, vector<32x96xbf16>, vector<16x96xf32> -> vector<16x96xf32>
    %44 = vector.broadcast %8 : vector<1x96xf32> to vector<16x96xf32>
    %45 = arith.addf %43, %44 : vector<16x96xf32>
    %46 = vector.extract_strided_slice %45 {offsets = [0, 0], sizes = [16, 32], strides = [1, 1]} : vector<16x96xf32> to vector<16x32xf32>
    %47 = vector.extract_strided_slice %45 {offsets = [0, 32], sizes = [16, 32], strides = [1, 1]} : vector<16x96xf32> to vector<16x32xf32>
    %48 = vector.extract_strided_slice %45 {offsets = [0, 64], sizes = [16, 32], strides = [1, 1]} : vector<16x96xf32> to vector<16x32xf32>
    %cst_17 = arith.constant 0.000000e+00 : f32
    %49 = vector.broadcast %cst_17 : f32 to vector<2x32xf32>
    %50 = vector.shape_cast %9 : vector<1x96xf32> to vector<1x96xf32>
    %51 = vector.broadcast %50 : vector<1x96xf32> to vector<2x96xf32>
    %52 = vector.extract_strided_slice %46 {offsets = [0, 0], sizes = [2, 32], strides = [1, 1]} : vector<16x32xf32> to vector<2x32xf32>
    %53 = vector.extract_strided_slice %47 {offsets = [0, 0], sizes = [2, 32], strides = [1, 1]} : vector<16x32xf32> to vector<2x32xf32>
    %54 = vector.extract_strided_slice %48 {offsets = [0, 0], sizes = [2, 32], strides = [1, 1]} : vector<16x32xf32> to vector<2x32xf32>
    %55 = vector.extract_strided_slice %51 {offsets = [0, 0], sizes = [2, 32], strides = [1, 1]} : vector<2x96xf32> to vector<2x32xf32>
    %56 = arith.addf %52, %55 : vector<2x32xf32>
    %57 = arith.negf %56 : vector<2x32xf32>
    %58 = math.exp %57 : vector<2x32xf32>
    %cst_18 = arith.constant 1.000000e+00 : f32
    %59 = vector.broadcast %cst_18 : f32 to vector<2x32xf32>
    %60 = arith.addf %59, %58 : vector<2x32xf32>
    %61 = arith.divf %59, %60 : vector<2x32xf32>
    %62 = vector.extract_strided_slice %51 {offsets = [0, 32], sizes = [2, 32], strides = [1, 1]} : vector<2x96xf32> to vector<2x32xf32>
    %63 = arith.addf %53, %62 : vector<2x32xf32>
    %64 = arith.negf %63 : vector<2x32xf32>
    %65 = math.exp %64 : vector<2x32xf32>
    %cst_19 = arith.constant 1.000000e+00 : f32
    %66 = vector.broadcast %cst_19 : f32 to vector<2x32xf32>
    %67 = arith.addf %66, %65 : vector<2x32xf32>
    %68 = arith.divf %66, %67 : vector<2x32xf32>
    %69 = vector.extract_strided_slice %51 {offsets = [0, 64], sizes = [2, 32], strides = [1, 1]} : vector<2x96xf32> to vector<2x32xf32>
    %70 = arith.mulf %61, %69 : vector<2x32xf32>
    %71 = arith.addf %54, %70 : vector<2x32xf32>
    %72 = math.tanh %71 : vector<2x32xf32>
    %cst_20 = arith.constant 1.000000e+00 : f32
    %73 = vector.broadcast %cst_20 : f32 to vector<2x32xf32>
    %74 = arith.subf %73, %68 : vector<2x32xf32>
    %75 = arith.mulf %74, %72 : vector<2x32xf32>
    %76 = arith.mulf %68, %49 : vector<2x32xf32>
    %77 = arith.addf %75, %76 : vector<2x32xf32>
    %78 = arith.truncf %77 : vector<2x32xf32> to vector<2x32xbf16>
    %cst_21 = arith.constant dense<0.000000e+00> : vector<2x96xf32>
    %79 = tpu.matmul %78, %19, %cst_21 {dimension_numbers = #tpu.dot_dimension_numbers<[1], [0], [0], [1], [0, 0, 1, 1], [], []>} : vector<2x32xbf16>, vector<32x96xbf16>, vector<2x96xf32> -> vector<2x96xf32>
    %80 = vector.broadcast %9 : vector<1x96xf32> to vector<2x96xf32>
    %81 = arith.addf %79, %80 : vector<2x96xf32>
    %82 = vector.extract_strided_slice %46 {offsets = [2, 0], sizes = [2, 32], strides = [1, 1]} : vector<16x32xf32> to vector<2x32xf32>
    %83 = vector.extract_strided_slice %47 {offsets = [2, 0], sizes = [2, 32], strides = [1, 1]} : vector<16x32xf32> to vector<2x32xf32>
    %84 = vector.extract_strided_slice %48 {offsets = [2, 0], sizes = [2, 32], strides = [1, 1]} : vector<16x32xf32> to vector<2x32xf32>
    %85 = vector.extract_strided_slice %81 {offsets = [0, 0], sizes = [2, 32], strides = [1, 1]} : vector<2x96xf32> to vector<2x32xf32>
    %86 = arith.addf %82, %85 : vector<2x32xf32>
    %87 = arith.negf %86 : vector<2x32xf32>
    %88 = math.exp %87 : vector<2x32xf32>
    %cst_22 = arith.constant 1.000000e+00 : f32
    %89 = vector.broadcast %cst_22 : f32 to vector<2x32xf32>
    %90 = arith.addf %89, %88 : vector<2x32xf32>
    %91 = arith.divf %89, %90 : vector<2x32xf32>
    %92 = vector.extract_strided_slice %81 {offsets = [0, 32], sizes = [2, 32], strides = [1, 1]} : vector<2x96xf32> to vector<2x32xf32>
    %93 = arith.addf %83, %92 : vector<2x32xf32>
    %94 = arith.negf %93 : vector<2x32xf32>
    %95 = math.exp %94 : vector<2x32xf32>
    %cst_23 = arith.constant 1.000000e+00 : f32
    %96 = vector.broadcast %cst_23 : f32 to vector<2x32xf32>
    %97 = arith.addf %96, %95 : vector<2x32xf32>
    %98 = arith.divf %96, %97 : vector<2x32xf32>
    %99 = vector.extract_strided_slice %81 {offsets = [0, 64], sizes = [2, 32], strides = [1, 1]} : vector<2x96xf32> to vector<2x32xf32>
    %100 = arith.mulf %91, %99 : vector<2x32xf32>
    %101 = arith.addf %84, %100 : vector<2x32xf32>
    %102 = math.tanh %101 : vector<2x32xf32>
    %cst_24 = arith.constant 1.000000e+00 : f32
    %103 = vector.broadcast %cst_24 : f32 to vector<2x32xf32>
    %104 = arith.subf %103, %98 : vector<2x32xf32>
    %105 = arith.mulf %104, %102 : vector<2x32xf32>
    %106 = arith.mulf %98, %77 : vector<2x32xf32>
    %107 = arith.addf %105, %106 : vector<2x32xf32>
    %108 = arith.truncf %107 : vector<2x32xf32> to vector<2x32xbf16>
    %cst_25 = arith.constant dense<0.000000e+00> : vector<2x96xf32>
    %109 = tpu.matmul %108, %19, %cst_25 {dimension_numbers = #tpu.dot_dimension_numbers<[1], [0], [0], [1], [0, 0, 1, 1], [], []>} : vector<2x32xbf16>, vector<32x96xbf16>, vector<2x96xf32> -> vector<2x96xf32>
    %110 = vector.broadcast %9 : vector<1x96xf32> to vector<2x96xf32>
    %111 = arith.addf %109, %110 : vector<2x96xf32>
    %112 = vector.extract_strided_slice %46 {offsets = [4, 0], sizes = [2, 32], strides = [1, 1]} : vector<16x32xf32> to vector<2x32xf32>
    %113 = vector.extract_strided_slice %47 {offsets = [4, 0], sizes = [2, 32], strides = [1, 1]} : vector<16x32xf32> to vector<2x32xf32>
    %114 = vector.extract_strided_slice %48 {offsets = [4, 0], sizes = [2, 32], strides = [1, 1]} : vector<16x32xf32> to vector<2x32xf32>
    %115 = vector.extract_strided_slice %111 {offsets = [0, 0], sizes = [2, 32], strides = [1, 1]} : vector<2x96xf32> to vector<2x32xf32>
    %116 = arith.addf %112, %115 : vector<2x32xf32>
    %117 = arith.negf %116 : vector<2x32xf32>
    %118 = math.exp %117 : vector<2x32xf32>
    %cst_26 = arith.constant 1.000000e+00 : f32
    %119 = vector.broadcast %cst_26 : f32 to vector<2x32xf32>
    %120 = arith.addf %119, %118 : vector<2x32xf32>
    %121 = arith.divf %119, %120 : vector<2x32xf32>
    %122 = vector.extract_strided_slice %111 {offsets = [0, 32], sizes = [2, 32], strides = [1, 1]} : vector<2x96xf32> to vector<2x32xf32>
    %123 = arith.addf %113, %122 : vector<2x32xf32>
    %124 = arith.negf %123 : vector<2x32xf32>
    %125 = math.exp %124 : vector<2x32xf32>
    %cst_27 = arith.constant 1.000000e+00 : f32
    %126 = vector.broadcast %cst_27 : f32 to vector<2x32xf32>
    %127 = arith.addf %126, %125 : vector<2x32xf32>
    %128 = arith.divf %126, %127 : vector<2x32xf32>
    %129 = vector.extract_strided_slice %111 {offsets = [0, 64], sizes = [2, 32], strides = [1, 1]} : vector<2x96xf32> to vector<2x32xf32>
    %130 = arith.mulf %121, %129 : vector<2x32xf32>
    %131 = arith.addf %114, %130 : vector<2x32xf32>
    %132 = math.tanh %131 : vector<2x32xf32>
    %cst_28 = arith.constant 1.000000e+00 : f32
    %133 = vector.broadcast %cst_28 : f32 to vector<2x32xf32>
    %134 = arith.subf %133, %128 : vector<2x32xf32>
    %135 = arith.mulf %134, %132 : vector<2x32xf32>
    %136 = arith.mulf %128, %107 : vector<2x32xf32>
    %137 = arith.addf %135, %136 : vector<2x32xf32>
    %138 = arith.truncf %137 : vector<2x32xf32> to vector<2x32xbf16>
    %cst_29 = arith.constant dense<0.000000e+00> : vector<2x96xf32>
    %139 = tpu.matmul %138, %19, %cst_29 {dimension_numbers = #tpu.dot_dimension_numbers<[1], [0], [0], [1], [0, 0, 1, 1], [], []>} : vector<2x32xbf16>, vector<32x96xbf16>, vector<2x96xf32> -> vector<2x96xf32>
    %140 = vector.broadcast %9 : vector<1x96xf32> to vector<2x96xf32>
    %141 = arith.addf %139, %140 : vector<2x96xf32>
    %142 = vector.extract_strided_slice %46 {offsets = [6, 0], sizes = [2, 32], strides = [1, 1]} : vector<16x32xf32> to vector<2x32xf32>
    %143 = vector.extract_strided_slice %47 {offsets = [6, 0], sizes = [2, 32], strides = [1, 1]} : vector<16x32xf32> to vector<2x32xf32>
    %144 = vector.extract_strided_slice %48 {offsets = [6, 0], sizes = [2, 32], strides = [1, 1]} : vector<16x32xf32> to vector<2x32xf32>
    %145 = vector.extract_strided_slice %141 {offsets = [0, 0], sizes = [2, 32], strides = [1, 1]} : vector<2x96xf32> to vector<2x32xf32>
    %146 = arith.addf %142, %145 : vector<2x32xf32>
    %147 = arith.negf %146 : vector<2x32xf32>
    %148 = math.exp %147 : vector<2x32xf32>
    %cst_30 = arith.constant 1.000000e+00 : f32
    %149 = vector.broadcast %cst_30 : f32 to vector<2x32xf32>
    %150 = arith.addf %149, %148 : vector<2x32xf32>
    %151 = arith.divf %149, %150 : vector<2x32xf32>
    %152 = vector.extract_strided_slice %141 {offsets = [0, 32], sizes = [2, 32], strides = [1, 1]} : vector<2x96xf32> to vector<2x32xf32>
    %153 = arith.addf %143, %152 : vector<2x32xf32>
    %154 = arith.negf %153 : vector<2x32xf32>
    %155 = math.exp %154 : vector<2x32xf32>
    %cst_31 = arith.constant 1.000000e+00 : f32
    %156 = vector.broadcast %cst_31 : f32 to vector<2x32xf32>
    %157 = arith.addf %156, %155 : vector<2x32xf32>
    %158 = arith.divf %156, %157 : vector<2x32xf32>
    %159 = vector.extract_strided_slice %141 {offsets = [0, 64], sizes = [2, 32], strides = [1, 1]} : vector<2x96xf32> to vector<2x32xf32>
    %160 = arith.mulf %151, %159 : vector<2x32xf32>
    %161 = arith.addf %144, %160 : vector<2x32xf32>
    %162 = math.tanh %161 : vector<2x32xf32>
    %cst_32 = arith.constant 1.000000e+00 : f32
    %163 = vector.broadcast %cst_32 : f32 to vector<2x32xf32>
    %164 = arith.subf %163, %158 : vector<2x32xf32>
    %165 = arith.mulf %164, %162 : vector<2x32xf32>
    %166 = arith.mulf %158, %137 : vector<2x32xf32>
    %167 = arith.addf %165, %166 : vector<2x32xf32>
    %168 = arith.truncf %167 : vector<2x32xf32> to vector<2x32xbf16>
    %cst_33 = arith.constant dense<0.000000e+00> : vector<2x96xf32>
    %169 = tpu.matmul %168, %19, %cst_33 {dimension_numbers = #tpu.dot_dimension_numbers<[1], [0], [0], [1], [0, 0, 1, 1], [], []>} : vector<2x32xbf16>, vector<32x96xbf16>, vector<2x96xf32> -> vector<2x96xf32>
    %170 = vector.broadcast %9 : vector<1x96xf32> to vector<2x96xf32>
    %171 = arith.addf %169, %170 : vector<2x96xf32>
    %172 = vector.extract_strided_slice %46 {offsets = [8, 0], sizes = [2, 32], strides = [1, 1]} : vector<16x32xf32> to vector<2x32xf32>
    %173 = vector.extract_strided_slice %47 {offsets = [8, 0], sizes = [2, 32], strides = [1, 1]} : vector<16x32xf32> to vector<2x32xf32>
    %174 = vector.extract_strided_slice %48 {offsets = [8, 0], sizes = [2, 32], strides = [1, 1]} : vector<16x32xf32> to vector<2x32xf32>
    %175 = vector.extract_strided_slice %171 {offsets = [0, 0], sizes = [2, 32], strides = [1, 1]} : vector<2x96xf32> to vector<2x32xf32>
    %176 = arith.addf %172, %175 : vector<2x32xf32>
    %177 = arith.negf %176 : vector<2x32xf32>
    %178 = math.exp %177 : vector<2x32xf32>
    %cst_34 = arith.constant 1.000000e+00 : f32
    %179 = vector.broadcast %cst_34 : f32 to vector<2x32xf32>
    %180 = arith.addf %179, %178 : vector<2x32xf32>
    %181 = arith.divf %179, %180 : vector<2x32xf32>
    %182 = vector.extract_strided_slice %171 {offsets = [0, 32], sizes = [2, 32], strides = [1, 1]} : vector<2x96xf32> to vector<2x32xf32>
    %183 = arith.addf %173, %182 : vector<2x32xf32>
    %184 = arith.negf %183 : vector<2x32xf32>
    %185 = math.exp %184 : vector<2x32xf32>
    %cst_35 = arith.constant 1.000000e+00 : f32
    %186 = vector.broadcast %cst_35 : f32 to vector<2x32xf32>
    %187 = arith.addf %186, %185 : vector<2x32xf32>
    %188 = arith.divf %186, %187 : vector<2x32xf32>
    %189 = vector.extract_strided_slice %171 {offsets = [0, 64], sizes = [2, 32], strides = [1, 1]} : vector<2x96xf32> to vector<2x32xf32>
    %190 = arith.mulf %181, %189 : vector<2x32xf32>
    %191 = arith.addf %174, %190 : vector<2x32xf32>
    %192 = math.tanh %191 : vector<2x32xf32>
    %cst_36 = arith.constant 1.000000e+00 : f32
    %193 = vector.broadcast %cst_36 : f32 to vector<2x32xf32>
    %194 = arith.subf %193, %188 : vector<2x32xf32>
    %195 = arith.mulf %194, %192 : vector<2x32xf32>
    %196 = arith.mulf %188, %167 : vector<2x32xf32>
    %197 = arith.addf %195, %196 : vector<2x32xf32>
    %198 = arith.truncf %197 : vector<2x32xf32> to vector<2x32xbf16>
    %cst_37 = arith.constant dense<0.000000e+00> : vector<2x96xf32>
    %199 = tpu.matmul %198, %19, %cst_37 {dimension_numbers = #tpu.dot_dimension_numbers<[1], [0], [0], [1], [0, 0, 1, 1], [], []>} : vector<2x32xbf16>, vector<32x96xbf16>, vector<2x96xf32> -> vector<2x96xf32>
    %200 = vector.broadcast %9 : vector<1x96xf32> to vector<2x96xf32>
    %201 = arith.addf %199, %200 : vector<2x96xf32>
    %202 = vector.extract_strided_slice %46 {offsets = [10, 0], sizes = [2, 32], strides = [1, 1]} : vector<16x32xf32> to vector<2x32xf32>
    %203 = vector.extract_strided_slice %47 {offsets = [10, 0], sizes = [2, 32], strides = [1, 1]} : vector<16x32xf32> to vector<2x32xf32>
    %204 = vector.extract_strided_slice %48 {offsets = [10, 0], sizes = [2, 32], strides = [1, 1]} : vector<16x32xf32> to vector<2x32xf32>
    %205 = vector.extract_strided_slice %201 {offsets = [0, 0], sizes = [2, 32], strides = [1, 1]} : vector<2x96xf32> to vector<2x32xf32>
    %206 = arith.addf %202, %205 : vector<2x32xf32>
    %207 = arith.negf %206 : vector<2x32xf32>
    %208 = math.exp %207 : vector<2x32xf32>
    %cst_38 = arith.constant 1.000000e+00 : f32
    %209 = vector.broadcast %cst_38 : f32 to vector<2x32xf32>
    %210 = arith.addf %209, %208 : vector<2x32xf32>
    %211 = arith.divf %209, %210 : vector<2x32xf32>
    %212 = vector.extract_strided_slice %201 {offsets = [0, 32], sizes = [2, 32], strides = [1, 1]} : vector<2x96xf32> to vector<2x32xf32>
    %213 = arith.addf %203, %212 : vector<2x32xf32>
    %214 = arith.negf %213 : vector<2x32xf32>
    %215 = math.exp %214 : vector<2x32xf32>
    %cst_39 = arith.constant 1.000000e+00 : f32
    %216 = vector.broadcast %cst_39 : f32 to vector<2x32xf32>
    %217 = arith.addf %216, %215 : vector<2x32xf32>
    %218 = arith.divf %216, %217 : vector<2x32xf32>
    %219 = vector.extract_strided_slice %201 {offsets = [0, 64], sizes = [2, 32], strides = [1, 1]} : vector<2x96xf32> to vector<2x32xf32>
    %220 = arith.mulf %211, %219 : vector<2x32xf32>
    %221 = arith.addf %204, %220 : vector<2x32xf32>
    %222 = math.tanh %221 : vector<2x32xf32>
    %cst_40 = arith.constant 1.000000e+00 : f32
    %223 = vector.broadcast %cst_40 : f32 to vector<2x32xf32>
    %224 = arith.subf %223, %218 : vector<2x32xf32>
    %225 = arith.mulf %224, %222 : vector<2x32xf32>
    %226 = arith.mulf %218, %197 : vector<2x32xf32>
    %227 = arith.addf %225, %226 : vector<2x32xf32>
    %228 = arith.truncf %227 : vector<2x32xf32> to vector<2x32xbf16>
    %cst_41 = arith.constant dense<0.000000e+00> : vector<2x96xf32>
    %229 = tpu.matmul %228, %19, %cst_41 {dimension_numbers = #tpu.dot_dimension_numbers<[1], [0], [0], [1], [0, 0, 1, 1], [], []>} : vector<2x32xbf16>, vector<32x96xbf16>, vector<2x96xf32> -> vector<2x96xf32>
    %230 = vector.broadcast %9 : vector<1x96xf32> to vector<2x96xf32>
    %231 = arith.addf %229, %230 : vector<2x96xf32>
    %232 = vector.extract_strided_slice %46 {offsets = [12, 0], sizes = [2, 32], strides = [1, 1]} : vector<16x32xf32> to vector<2x32xf32>
    %233 = vector.extract_strided_slice %47 {offsets = [12, 0], sizes = [2, 32], strides = [1, 1]} : vector<16x32xf32> to vector<2x32xf32>
    %234 = vector.extract_strided_slice %48 {offsets = [12, 0], sizes = [2, 32], strides = [1, 1]} : vector<16x32xf32> to vector<2x32xf32>
    %235 = vector.extract_strided_slice %231 {offsets = [0, 0], sizes = [2, 32], strides = [1, 1]} : vector<2x96xf32> to vector<2x32xf32>
    %236 = arith.addf %232, %235 : vector<2x32xf32>
    %237 = arith.negf %236 : vector<2x32xf32>
    %238 = math.exp %237 : vector<2x32xf32>
    %cst_42 = arith.constant 1.000000e+00 : f32
    %239 = vector.broadcast %cst_42 : f32 to vector<2x32xf32>
    %240 = arith.addf %239, %238 : vector<2x32xf32>
    %241 = arith.divf %239, %240 : vector<2x32xf32>
    %242 = vector.extract_strided_slice %231 {offsets = [0, 32], sizes = [2, 32], strides = [1, 1]} : vector<2x96xf32> to vector<2x32xf32>
    %243 = arith.addf %233, %242 : vector<2x32xf32>
    %244 = arith.negf %243 : vector<2x32xf32>
    %245 = math.exp %244 : vector<2x32xf32>
    %cst_43 = arith.constant 1.000000e+00 : f32
    %246 = vector.broadcast %cst_43 : f32 to vector<2x32xf32>
    %247 = arith.addf %246, %245 : vector<2x32xf32>
    %248 = arith.divf %246, %247 : vector<2x32xf32>
    %249 = vector.extract_strided_slice %231 {offsets = [0, 64], sizes = [2, 32], strides = [1, 1]} : vector<2x96xf32> to vector<2x32xf32>
    %250 = arith.mulf %241, %249 : vector<2x32xf32>
    %251 = arith.addf %234, %250 : vector<2x32xf32>
    %252 = math.tanh %251 : vector<2x32xf32>
    %cst_44 = arith.constant 1.000000e+00 : f32
    %253 = vector.broadcast %cst_44 : f32 to vector<2x32xf32>
    %254 = arith.subf %253, %248 : vector<2x32xf32>
    %255 = arith.mulf %254, %252 : vector<2x32xf32>
    %256 = arith.mulf %248, %227 : vector<2x32xf32>
    %257 = arith.addf %255, %256 : vector<2x32xf32>
    %258 = arith.truncf %257 : vector<2x32xf32> to vector<2x32xbf16>
    %cst_45 = arith.constant dense<0.000000e+00> : vector<2x96xf32>
    %259 = tpu.matmul %258, %19, %cst_45 {dimension_numbers = #tpu.dot_dimension_numbers<[1], [0], [0], [1], [0, 0, 1, 1], [], []>} : vector<2x32xbf16>, vector<32x96xbf16>, vector<2x96xf32> -> vector<2x96xf32>
    %260 = vector.broadcast %9 : vector<1x96xf32> to vector<2x96xf32>
    %261 = arith.addf %259, %260 : vector<2x96xf32>
    %262 = vector.extract_strided_slice %46 {offsets = [14, 0], sizes = [2, 32], strides = [1, 1]} : vector<16x32xf32> to vector<2x32xf32>
    %263 = vector.extract_strided_slice %47 {offsets = [14, 0], sizes = [2, 32], strides = [1, 1]} : vector<16x32xf32> to vector<2x32xf32>
    %264 = vector.extract_strided_slice %48 {offsets = [14, 0], sizes = [2, 32], strides = [1, 1]} : vector<16x32xf32> to vector<2x32xf32>
    %265 = vector.extract_strided_slice %261 {offsets = [0, 0], sizes = [2, 32], strides = [1, 1]} : vector<2x96xf32> to vector<2x32xf32>
    %266 = arith.addf %262, %265 : vector<2x32xf32>
    %267 = arith.negf %266 : vector<2x32xf32>
    %268 = math.exp %267 : vector<2x32xf32>
    %cst_46 = arith.constant 1.000000e+00 : f32
    %269 = vector.broadcast %cst_46 : f32 to vector<2x32xf32>
    %270 = arith.addf %269, %268 : vector<2x32xf32>
    %271 = arith.divf %269, %270 : vector<2x32xf32>
    %272 = vector.extract_strided_slice %261 {offsets = [0, 32], sizes = [2, 32], strides = [1, 1]} : vector<2x96xf32> to vector<2x32xf32>
    %273 = arith.addf %263, %272 : vector<2x32xf32>
    %274 = arith.negf %273 : vector<2x32xf32>
    %275 = math.exp %274 : vector<2x32xf32>
    %cst_47 = arith.constant 1.000000e+00 : f32
    %276 = vector.broadcast %cst_47 : f32 to vector<2x32xf32>
    %277 = arith.addf %276, %275 : vector<2x32xf32>
    %278 = arith.divf %276, %277 : vector<2x32xf32>
    %279 = vector.extract_strided_slice %261 {offsets = [0, 64], sizes = [2, 32], strides = [1, 1]} : vector<2x96xf32> to vector<2x32xf32>
    %280 = arith.mulf %271, %279 : vector<2x32xf32>
    %281 = arith.addf %264, %280 : vector<2x32xf32>
    %282 = math.tanh %281 : vector<2x32xf32>
    %cst_48 = arith.constant 1.000000e+00 : f32
    %283 = vector.broadcast %cst_48 : f32 to vector<2x32xf32>
    %284 = arith.subf %283, %278 : vector<2x32xf32>
    %285 = arith.mulf %284, %282 : vector<2x32xf32>
    %286 = arith.mulf %278, %257 : vector<2x32xf32>
    %287 = arith.addf %285, %286 : vector<2x32xf32>
    %288 = arith.truncf %287 : vector<2x32xf32> to vector<2x32xbf16>
    %cst_49 = arith.constant dense<0.000000e+00> : vector<2x128xf32>
    %289 = tpu.matmul %288, %1, %cst_49 {dimension_numbers = #tpu.dot_dimension_numbers<[1], [0], [0], [1], [0, 0, 1, 1], [], []>} : vector<2x32xbf16>, vector<32x128xbf16>, vector<2x128xf32> -> vector<2x128xf32>
    %290 = vector.broadcast %2 : vector<1x128xf32> to vector<2x128xf32>
    %291 = arith.addf %289, %290 : vector<2x128xf32>
    %292 = vector.extract_strided_slice %291 {offsets = [0, 0], sizes = [2, 96], strides = [1, 1]} : vector<2x128xf32> to vector<2x96xf32>
    %293 = vector.extract_strided_slice %16 {offsets = [0, 0], sizes = [1, 96], strides = [1, 1]} : vector<32x96xf32> to vector<1x96xf32>
    %294 = vector.broadcast %293 : vector<1x96xf32> to vector<2x96xf32>
    %295 = arith.addf %34, %294 : vector<2x96xf32>
    %cst_50 = arith.constant 0.000000e+00 : f32
    %296 = vector.broadcast %cst_50 : f32 to vector<2x32xf32>
    %297 = vector.extract_strided_slice %295 {offsets = [0, 0], sizes = [2, 32], strides = [1, 1]} : vector<2x96xf32> to vector<2x32xf32>
    %298 = vector.extract_strided_slice %295 {offsets = [0, 32], sizes = [2, 32], strides = [1, 1]} : vector<2x96xf32> to vector<2x32xf32>
    %299 = vector.extract_strided_slice %295 {offsets = [0, 64], sizes = [2, 32], strides = [1, 1]} : vector<2x96xf32> to vector<2x32xf32>
    %300 = vector.extract_strided_slice %292 {offsets = [0, 0], sizes = [2, 32], strides = [1, 1]} : vector<2x96xf32> to vector<2x32xf32>
    %301 = arith.addf %297, %300 : vector<2x32xf32>
    %302 = arith.negf %301 : vector<2x32xf32>
    %303 = math.exp %302 : vector<2x32xf32>
    %cst_51 = arith.constant 1.000000e+00 : f32
    %304 = vector.broadcast %cst_51 : f32 to vector<2x32xf32>
    %305 = arith.addf %304, %303 : vector<2x32xf32>
    %306 = arith.divf %304, %305 : vector<2x32xf32>
    %307 = vector.extract_strided_slice %292 {offsets = [0, 32], sizes = [2, 32], strides = [1, 1]} : vector<2x96xf32> to vector<2x32xf32>
    %308 = arith.addf %298, %307 : vector<2x32xf32>
    %309 = arith.negf %308 : vector<2x32xf32>
    %310 = math.exp %309 : vector<2x32xf32>
    %cst_52 = arith.constant 1.000000e+00 : f32
    %311 = vector.broadcast %cst_52 : f32 to vector<2x32xf32>
    %312 = arith.addf %311, %310 : vector<2x32xf32>
    %313 = arith.divf %311, %312 : vector<2x32xf32>
    %314 = vector.extract_strided_slice %292 {offsets = [0, 64], sizes = [2, 32], strides = [1, 1]} : vector<2x96xf32> to vector<2x32xf32>
    %315 = arith.mulf %306, %314 : vector<2x32xf32>
    %316 = arith.addf %299, %315 : vector<2x32xf32>
    %317 = math.tanh %316 : vector<2x32xf32>
    %cst_53 = arith.constant 1.000000e+00 : f32
    %318 = vector.broadcast %cst_53 : f32 to vector<2x32xf32>
    %319 = arith.subf %318, %313 : vector<2x32xf32>
    %320 = arith.mulf %319, %317 : vector<2x32xf32>
    %321 = arith.mulf %313, %287 : vector<2x32xf32>
    %322 = arith.addf %320, %321 : vector<2x32xf32>
    %323 = arith.addf %296, %322 : vector<2x32xf32>
    %324 = arith.truncf %322 : vector<2x32xf32> to vector<2x32xbf16>
    %cst_54 = arith.constant dense<0.000000e+00> : vector<2x128xf32>
    %325 = tpu.matmul %324, %1, %cst_54 {dimension_numbers = #tpu.dot_dimension_numbers<[1], [0], [0], [1], [0, 0, 1, 1], [], []>} : vector<2x32xbf16>, vector<32x128xbf16>, vector<2x128xf32> -> vector<2x128xf32>
    %326 = vector.broadcast %2 : vector<1x128xf32> to vector<2x128xf32>
    %327 = arith.addf %325, %326 : vector<2x128xf32>
    %328 = vector.extract_strided_slice %327 {offsets = [0, 0], sizes = [2, 96], strides = [1, 1]} : vector<2x128xf32> to vector<2x96xf32>
    %329 = vector.extract_strided_slice %327 {offsets = [0, 96], sizes = [2, 32], strides = [1, 1]} : vector<2x128xf32> to vector<2x32xf32>
    %cst_55 = arith.constant dense<0xFF800000> : vector<2xf32>
    %330 = vector.multi_reduction <maximumf>, %329, %cst_55 [1] : vector<2x32xf32> to vector<2xf32>
    %331 = vector.shape_cast %330 : vector<2xf32> to vector<2x1xf32>
    %332 = vector.broadcast %331 : vector<2x1xf32> to vector<2x32xf32>
    %333 = arith.cmpf oge, %329, %332 : vector<2x32xf32>
    %c32_i32 = arith.constant 32 : i32
    %334 = vector.broadcast %c32_i32 : i32 to vector<2x32xi32>
    %335 = arith.select %333, %35, %334 : vector<2x32xi1>, vector<2x32xi32>
    %cst_56 = arith.constant dense<2147483647> : vector<2xi32>
    %336 = vector.multi_reduction <minsi>, %335, %cst_56 [1] : vector<2x32xi32> to vector<2xi32>
    %337 = vector.shape_cast %336 : vector<2xi32> to vector<2x1xi32>
    %338 = vector.broadcast %337 : vector<2x1xi32> to vector<2x32xi32>
    %339 = arith.cmpi eq, %35, %338 : vector<2x32xi32>
    %340 = arith.extui %339 : vector<2x32xi1> to vector<2x32xi32>
    %341 = arith.sitofp %340 : vector<2x32xi32> to vector<2x32xf32>
    %342 = arith.truncf %341 : vector<2x32xf32> to vector<2x32xbf16>
    %cst_57 = arith.constant dense<0.000000e+00> : vector<2x96xf32>
    %343 = tpu.matmul %342, %17, %cst_57 {dimension_numbers = #tpu.dot_dimension_numbers<[1], [0], [0], [1], [0, 0, 1, 1], [], []>} : vector<2x32xbf16>, vector<32x96xbf16>, vector<2x96xf32> -> vector<2x96xf32>
    %344 = arith.addf %343, %34 : vector<2x96xf32>
    %345 = vector.extract_strided_slice %344 {offsets = [0, 0], sizes = [2, 32], strides = [1, 1]} : vector<2x96xf32> to vector<2x32xf32>
    %346 = vector.extract_strided_slice %344 {offsets = [0, 32], sizes = [2, 32], strides = [1, 1]} : vector<2x96xf32> to vector<2x32xf32>
    %347 = vector.extract_strided_slice %344 {offsets = [0, 64], sizes = [2, 32], strides = [1, 1]} : vector<2x96xf32> to vector<2x32xf32>
    %348 = vector.extract_strided_slice %328 {offsets = [0, 0], sizes = [2, 32], strides = [1, 1]} : vector<2x96xf32> to vector<2x32xf32>
    %349 = arith.addf %345, %348 : vector<2x32xf32>
    %350 = arith.negf %349 : vector<2x32xf32>
    %351 = math.exp %350 : vector<2x32xf32>
    %cst_58 = arith.constant 1.000000e+00 : f32
    %352 = vector.broadcast %cst_58 : f32 to vector<2x32xf32>
    %353 = arith.addf %352, %351 : vector<2x32xf32>
    %354 = arith.divf %352, %353 : vector<2x32xf32>
    %355 = vector.extract_strided_slice %328 {offsets = [0, 32], sizes = [2, 32], strides = [1, 1]} : vector<2x96xf32> to vector<2x32xf32>
    %356 = arith.addf %346, %355 : vector<2x32xf32>
    %357 = arith.negf %356 : vector<2x32xf32>
    %358 = math.exp %357 : vector<2x32xf32>
    %cst_59 = arith.constant 1.000000e+00 : f32
    %359 = vector.broadcast %cst_59 : f32 to vector<2x32xf32>
    %360 = arith.addf %359, %358 : vector<2x32xf32>
    %361 = arith.divf %359, %360 : vector<2x32xf32>
    %362 = vector.extract_strided_slice %328 {offsets = [0, 64], sizes = [2, 32], strides = [1, 1]} : vector<2x96xf32> to vector<2x32xf32>
    %363 = arith.mulf %354, %362 : vector<2x32xf32>
    %364 = arith.addf %347, %363 : vector<2x32xf32>
    %365 = math.tanh %364 : vector<2x32xf32>
    %cst_60 = arith.constant 1.000000e+00 : f32
    %366 = vector.broadcast %cst_60 : f32 to vector<2x32xf32>
    %367 = arith.subf %366, %361 : vector<2x32xf32>
    %368 = arith.mulf %367, %365 : vector<2x32xf32>
    %369 = arith.mulf %361, %322 : vector<2x32xf32>
    %370 = arith.addf %368, %369 : vector<2x32xf32>
    %371 = arith.addf %323, %370 : vector<2x32xf32>
    %372 = arith.truncf %370 : vector<2x32xf32> to vector<2x32xbf16>
    %cst_61 = arith.constant dense<0.000000e+00> : vector<2x128xf32>
    %373 = tpu.matmul %372, %1, %cst_61 {dimension_numbers = #tpu.dot_dimension_numbers<[1], [0], [0], [1], [0, 0, 1, 1], [], []>} : vector<2x32xbf16>, vector<32x128xbf16>, vector<2x128xf32> -> vector<2x128xf32>
    %374 = vector.broadcast %2 : vector<1x128xf32> to vector<2x128xf32>
    %375 = arith.addf %373, %374 : vector<2x128xf32>
    %376 = vector.extract_strided_slice %375 {offsets = [0, 0], sizes = [2, 96], strides = [1, 1]} : vector<2x128xf32> to vector<2x96xf32>
    %377 = vector.extract_strided_slice %375 {offsets = [0, 96], sizes = [2, 32], strides = [1, 1]} : vector<2x128xf32> to vector<2x32xf32>
    %cst_62 = arith.constant dense<0xFF800000> : vector<2xf32>
    %378 = vector.multi_reduction <maximumf>, %377, %cst_62 [1] : vector<2x32xf32> to vector<2xf32>
    %379 = vector.shape_cast %378 : vector<2xf32> to vector<2x1xf32>
    %380 = vector.broadcast %379 : vector<2x1xf32> to vector<2x32xf32>
    %381 = arith.cmpf oge, %377, %380 : vector<2x32xf32>
    %c32_i32_63 = arith.constant 32 : i32
    %382 = vector.broadcast %c32_i32_63 : i32 to vector<2x32xi32>
    %383 = arith.select %381, %35, %382 : vector<2x32xi1>, vector<2x32xi32>
    %cst_64 = arith.constant dense<2147483647> : vector<2xi32>
    %384 = vector.multi_reduction <minsi>, %383, %cst_64 [1] : vector<2x32xi32> to vector<2xi32>
    %385 = vector.shape_cast %384 : vector<2xi32> to vector<2x1xi32>
    %386 = vector.broadcast %385 : vector<2x1xi32> to vector<2x32xi32>
    %387 = arith.cmpi eq, %35, %386 : vector<2x32xi32>
    %388 = arith.extui %387 : vector<2x32xi1> to vector<2x32xi32>
    %389 = arith.sitofp %388 : vector<2x32xi32> to vector<2x32xf32>
    %390 = arith.truncf %389 : vector<2x32xf32> to vector<2x32xbf16>
    %cst_65 = arith.constant dense<0.000000e+00> : vector<2x96xf32>
    %391 = tpu.matmul %390, %17, %cst_65 {dimension_numbers = #tpu.dot_dimension_numbers<[1], [0], [0], [1], [0, 0, 1, 1], [], []>} : vector<2x32xbf16>, vector<32x96xbf16>, vector<2x96xf32> -> vector<2x96xf32>
    %392 = arith.addf %391, %34 : vector<2x96xf32>
    %393 = vector.extract_strided_slice %392 {offsets = [0, 0], sizes = [2, 32], strides = [1, 1]} : vector<2x96xf32> to vector<2x32xf32>
    %394 = vector.extract_strided_slice %392 {offsets = [0, 32], sizes = [2, 32], strides = [1, 1]} : vector<2x96xf32> to vector<2x32xf32>
    %395 = vector.extract_strided_slice %392 {offsets = [0, 64], sizes = [2, 32], strides = [1, 1]} : vector<2x96xf32> to vector<2x32xf32>
    %396 = vector.extract_strided_slice %376 {offsets = [0, 0], sizes = [2, 32], strides = [1, 1]} : vector<2x96xf32> to vector<2x32xf32>
    %397 = arith.addf %393, %396 : vector<2x32xf32>
    %398 = arith.negf %397 : vector<2x32xf32>
    %399 = math.exp %398 : vector<2x32xf32>
    %cst_66 = arith.constant 1.000000e+00 : f32
    %400 = vector.broadcast %cst_66 : f32 to vector<2x32xf32>
    %401 = arith.addf %400, %399 : vector<2x32xf32>
    %402 = arith.divf %400, %401 : vector<2x32xf32>
    %403 = vector.extract_strided_slice %376 {offsets = [0, 32], sizes = [2, 32], strides = [1, 1]} : vector<2x96xf32> to vector<2x32xf32>
    %404 = arith.addf %394, %403 : vector<2x32xf32>
    %405 = arith.negf %404 : vector<2x32xf32>
    %406 = math.exp %405 : vector<2x32xf32>
    %cst_67 = arith.constant 1.000000e+00 : f32
    %407 = vector.broadcast %cst_67 : f32 to vector<2x32xf32>
    %408 = arith.addf %407, %406 : vector<2x32xf32>
    %409 = arith.divf %407, %408 : vector<2x32xf32>
    %410 = vector.extract_strided_slice %376 {offsets = [0, 64], sizes = [2, 32], strides = [1, 1]} : vector<2x96xf32> to vector<2x32xf32>
    %411 = arith.mulf %402, %410 : vector<2x32xf32>
    %412 = arith.addf %395, %411 : vector<2x32xf32>
    %413 = math.tanh %412 : vector<2x32xf32>
    %cst_68 = arith.constant 1.000000e+00 : f32
    %414 = vector.broadcast %cst_68 : f32 to vector<2x32xf32>
    %415 = arith.subf %414, %409 : vector<2x32xf32>
    %416 = arith.mulf %415, %413 : vector<2x32xf32>
    %417 = arith.mulf %409, %370 : vector<2x32xf32>
    %418 = arith.addf %416, %417 : vector<2x32xf32>
    %419 = arith.addf %371, %418 : vector<2x32xf32>
    %420 = arith.truncf %418 : vector<2x32xf32> to vector<2x32xbf16>
    %cst_69 = arith.constant dense<0.000000e+00> : vector<2x128xf32>
    %421 = tpu.matmul %420, %1, %cst_69 {dimension_numbers = #tpu.dot_dimension_numbers<[1], [0], [0], [1], [0, 0, 1, 1], [], []>} : vector<2x32xbf16>, vector<32x128xbf16>, vector<2x128xf32> -> vector<2x128xf32>
    %422 = vector.broadcast %2 : vector<1x128xf32> to vector<2x128xf32>
    %423 = arith.addf %421, %422 : vector<2x128xf32>
    %424 = vector.extract_strided_slice %423 {offsets = [0, 0], sizes = [2, 96], strides = [1, 1]} : vector<2x128xf32> to vector<2x96xf32>
    %425 = vector.extract_strided_slice %423 {offsets = [0, 96], sizes = [2, 32], strides = [1, 1]} : vector<2x128xf32> to vector<2x32xf32>
    %cst_70 = arith.constant dense<0xFF800000> : vector<2xf32>
    %426 = vector.multi_reduction <maximumf>, %425, %cst_70 [1] : vector<2x32xf32> to vector<2xf32>
    %427 = vector.shape_cast %426 : vector<2xf32> to vector<2x1xf32>
    %428 = vector.broadcast %427 : vector<2x1xf32> to vector<2x32xf32>
    %429 = arith.cmpf oge, %425, %428 : vector<2x32xf32>
    %c32_i32_71 = arith.constant 32 : i32
    %430 = vector.broadcast %c32_i32_71 : i32 to vector<2x32xi32>
    %431 = arith.select %429, %35, %430 : vector<2x32xi1>, vector<2x32xi32>
    %cst_72 = arith.constant dense<2147483647> : vector<2xi32>
    %432 = vector.multi_reduction <minsi>, %431, %cst_72 [1] : vector<2x32xi32> to vector<2xi32>
    %433 = vector.shape_cast %432 : vector<2xi32> to vector<2x1xi32>
    %434 = vector.broadcast %433 : vector<2x1xi32> to vector<2x32xi32>
    %435 = arith.cmpi eq, %35, %434 : vector<2x32xi32>
    %436 = arith.extui %435 : vector<2x32xi1> to vector<2x32xi32>
    %437 = arith.sitofp %436 : vector<2x32xi32> to vector<2x32xf32>
    %438 = arith.truncf %437 : vector<2x32xf32> to vector<2x32xbf16>
    %cst_73 = arith.constant dense<0.000000e+00> : vector<2x96xf32>
    %439 = tpu.matmul %438, %17, %cst_73 {dimension_numbers = #tpu.dot_dimension_numbers<[1], [0], [0], [1], [0, 0, 1, 1], [], []>} : vector<2x32xbf16>, vector<32x96xbf16>, vector<2x96xf32> -> vector<2x96xf32>
    %440 = arith.addf %439, %34 : vector<2x96xf32>
    %441 = vector.extract_strided_slice %440 {offsets = [0, 0], sizes = [2, 32], strides = [1, 1]} : vector<2x96xf32> to vector<2x32xf32>
    %442 = vector.extract_strided_slice %440 {offsets = [0, 32], sizes = [2, 32], strides = [1, 1]} : vector<2x96xf32> to vector<2x32xf32>
    %443 = vector.extract_strided_slice %440 {offsets = [0, 64], sizes = [2, 32], strides = [1, 1]} : vector<2x96xf32> to vector<2x32xf32>
    %444 = vector.extract_strided_slice %424 {offsets = [0, 0], sizes = [2, 32], strides = [1, 1]} : vector<2x96xf32> to vector<2x32xf32>
    %445 = arith.addf %441, %444 : vector<2x32xf32>
    %446 = arith.negf %445 : vector<2x32xf32>
    %447 = math.exp %446 : vector<2x32xf32>
    %cst_74 = arith.constant 1.000000e+00 : f32
    %448 = vector.broadcast %cst_74 : f32 to vector<2x32xf32>
    %449 = arith.addf %448, %447 : vector<2x32xf32>
    %450 = arith.divf %448, %449 : vector<2x32xf32>
    %451 = vector.extract_strided_slice %424 {offsets = [0, 32], sizes = [2, 32], strides = [1, 1]} : vector<2x96xf32> to vector<2x32xf32>
    %452 = arith.addf %442, %451 : vector<2x32xf32>
    %453 = arith.negf %452 : vector<2x32xf32>
    %454 = math.exp %453 : vector<2x32xf32>
    %cst_75 = arith.constant 1.000000e+00 : f32
    %455 = vector.broadcast %cst_75 : f32 to vector<2x32xf32>
    %456 = arith.addf %455, %454 : vector<2x32xf32>
    %457 = arith.divf %455, %456 : vector<2x32xf32>
    %458 = vector.extract_strided_slice %424 {offsets = [0, 64], sizes = [2, 32], strides = [1, 1]} : vector<2x96xf32> to vector<2x32xf32>
    %459 = arith.mulf %450, %458 : vector<2x32xf32>
    %460 = arith.addf %443, %459 : vector<2x32xf32>
    %461 = math.tanh %460 : vector<2x32xf32>
    %cst_76 = arith.constant 1.000000e+00 : f32
    %462 = vector.broadcast %cst_76 : f32 to vector<2x32xf32>
    %463 = arith.subf %462, %457 : vector<2x32xf32>
    %464 = arith.mulf %463, %461 : vector<2x32xf32>
    %465 = arith.mulf %457, %418 : vector<2x32xf32>
    %466 = arith.addf %464, %465 : vector<2x32xf32>
    %467 = arith.addf %419, %466 : vector<2x32xf32>
    %468 = arith.truncf %466 : vector<2x32xf32> to vector<2x32xbf16>
    %cst_77 = arith.constant dense<0.000000e+00> : vector<2x128xf32>
    %469 = tpu.matmul %468, %1, %cst_77 {dimension_numbers = #tpu.dot_dimension_numbers<[1], [0], [0], [1], [0, 0, 1, 1], [], []>} : vector<2x32xbf16>, vector<32x128xbf16>, vector<2x128xf32> -> vector<2x128xf32>
    %470 = vector.broadcast %2 : vector<1x128xf32> to vector<2x128xf32>
    %471 = arith.addf %469, %470 : vector<2x128xf32>
    %472 = vector.extract_strided_slice %471 {offsets = [0, 0], sizes = [2, 96], strides = [1, 1]} : vector<2x128xf32> to vector<2x96xf32>
    %473 = vector.extract_strided_slice %471 {offsets = [0, 96], sizes = [2, 32], strides = [1, 1]} : vector<2x128xf32> to vector<2x32xf32>
    %cst_78 = arith.constant dense<0xFF800000> : vector<2xf32>
    %474 = vector.multi_reduction <maximumf>, %473, %cst_78 [1] : vector<2x32xf32> to vector<2xf32>
    %475 = vector.shape_cast %474 : vector<2xf32> to vector<2x1xf32>
    %476 = vector.broadcast %475 : vector<2x1xf32> to vector<2x32xf32>
    %477 = arith.cmpf oge, %473, %476 : vector<2x32xf32>
    %c32_i32_79 = arith.constant 32 : i32
    %478 = vector.broadcast %c32_i32_79 : i32 to vector<2x32xi32>
    %479 = arith.select %477, %35, %478 : vector<2x32xi1>, vector<2x32xi32>
    %cst_80 = arith.constant dense<2147483647> : vector<2xi32>
    %480 = vector.multi_reduction <minsi>, %479, %cst_80 [1] : vector<2x32xi32> to vector<2xi32>
    %481 = vector.shape_cast %480 : vector<2xi32> to vector<2x1xi32>
    %482 = vector.broadcast %481 : vector<2x1xi32> to vector<2x32xi32>
    %483 = arith.cmpi eq, %35, %482 : vector<2x32xi32>
    %484 = arith.extui %483 : vector<2x32xi1> to vector<2x32xi32>
    %485 = arith.sitofp %484 : vector<2x32xi32> to vector<2x32xf32>
    %486 = arith.truncf %485 : vector<2x32xf32> to vector<2x32xbf16>
    %cst_81 = arith.constant dense<0.000000e+00> : vector<2x96xf32>
    %487 = tpu.matmul %486, %17, %cst_81 {dimension_numbers = #tpu.dot_dimension_numbers<[1], [0], [0], [1], [0, 0, 1, 1], [], []>} : vector<2x32xbf16>, vector<32x96xbf16>, vector<2x96xf32> -> vector<2x96xf32>
    %488 = arith.addf %487, %34 : vector<2x96xf32>
    %489 = vector.extract_strided_slice %488 {offsets = [0, 0], sizes = [2, 32], strides = [1, 1]} : vector<2x96xf32> to vector<2x32xf32>
    %490 = vector.extract_strided_slice %488 {offsets = [0, 32], sizes = [2, 32], strides = [1, 1]} : vector<2x96xf32> to vector<2x32xf32>
    %491 = vector.extract_strided_slice %488 {offsets = [0, 64], sizes = [2, 32], strides = [1, 1]} : vector<2x96xf32> to vector<2x32xf32>
    %492 = vector.extract_strided_slice %472 {offsets = [0, 0], sizes = [2, 32], strides = [1, 1]} : vector<2x96xf32> to vector<2x32xf32>
    %493 = arith.addf %489, %492 : vector<2x32xf32>
    %494 = arith.negf %493 : vector<2x32xf32>
    %495 = math.exp %494 : vector<2x32xf32>
    %cst_82 = arith.constant 1.000000e+00 : f32
    %496 = vector.broadcast %cst_82 : f32 to vector<2x32xf32>
    %497 = arith.addf %496, %495 : vector<2x32xf32>
    %498 = arith.divf %496, %497 : vector<2x32xf32>
    %499 = vector.extract_strided_slice %472 {offsets = [0, 32], sizes = [2, 32], strides = [1, 1]} : vector<2x96xf32> to vector<2x32xf32>
    %500 = arith.addf %490, %499 : vector<2x32xf32>
    %501 = arith.negf %500 : vector<2x32xf32>
    %502 = math.exp %501 : vector<2x32xf32>
    %cst_83 = arith.constant 1.000000e+00 : f32
    %503 = vector.broadcast %cst_83 : f32 to vector<2x32xf32>
    %504 = arith.addf %503, %502 : vector<2x32xf32>
    %505 = arith.divf %503, %504 : vector<2x32xf32>
    %506 = vector.extract_strided_slice %472 {offsets = [0, 64], sizes = [2, 32], strides = [1, 1]} : vector<2x96xf32> to vector<2x32xf32>
    %507 = arith.mulf %498, %506 : vector<2x32xf32>
    %508 = arith.addf %491, %507 : vector<2x32xf32>
    %509 = math.tanh %508 : vector<2x32xf32>
    %cst_84 = arith.constant 1.000000e+00 : f32
    %510 = vector.broadcast %cst_84 : f32 to vector<2x32xf32>
    %511 = arith.subf %510, %505 : vector<2x32xf32>
    %512 = arith.mulf %511, %509 : vector<2x32xf32>
    %513 = arith.mulf %505, %466 : vector<2x32xf32>
    %514 = arith.addf %512, %513 : vector<2x32xf32>
    %515 = arith.addf %467, %514 : vector<2x32xf32>
    %516 = arith.truncf %514 : vector<2x32xf32> to vector<2x32xbf16>
    %cst_85 = arith.constant dense<0.000000e+00> : vector<2x128xf32>
    %517 = tpu.matmul %516, %1, %cst_85 {dimension_numbers = #tpu.dot_dimension_numbers<[1], [0], [0], [1], [0, 0, 1, 1], [], []>} : vector<2x32xbf16>, vector<32x128xbf16>, vector<2x128xf32> -> vector<2x128xf32>
    %518 = vector.broadcast %2 : vector<1x128xf32> to vector<2x128xf32>
    %519 = arith.addf %517, %518 : vector<2x128xf32>
    %520 = vector.extract_strided_slice %519 {offsets = [0, 0], sizes = [2, 96], strides = [1, 1]} : vector<2x128xf32> to vector<2x96xf32>
    %521 = vector.extract_strided_slice %519 {offsets = [0, 96], sizes = [2, 32], strides = [1, 1]} : vector<2x128xf32> to vector<2x32xf32>
    %cst_86 = arith.constant dense<0xFF800000> : vector<2xf32>
    %522 = vector.multi_reduction <maximumf>, %521, %cst_86 [1] : vector<2x32xf32> to vector<2xf32>
    %523 = vector.shape_cast %522 : vector<2xf32> to vector<2x1xf32>
    %524 = vector.broadcast %523 : vector<2x1xf32> to vector<2x32xf32>
    %525 = arith.cmpf oge, %521, %524 : vector<2x32xf32>
    %c32_i32_87 = arith.constant 32 : i32
    %526 = vector.broadcast %c32_i32_87 : i32 to vector<2x32xi32>
    %527 = arith.select %525, %35, %526 : vector<2x32xi1>, vector<2x32xi32>
    %cst_88 = arith.constant dense<2147483647> : vector<2xi32>
    %528 = vector.multi_reduction <minsi>, %527, %cst_88 [1] : vector<2x32xi32> to vector<2xi32>
    %529 = vector.shape_cast %528 : vector<2xi32> to vector<2x1xi32>
    %530 = vector.broadcast %529 : vector<2x1xi32> to vector<2x32xi32>
    %531 = arith.cmpi eq, %35, %530 : vector<2x32xi32>
    %532 = arith.extui %531 : vector<2x32xi1> to vector<2x32xi32>
    %533 = arith.sitofp %532 : vector<2x32xi32> to vector<2x32xf32>
    %534 = arith.truncf %533 : vector<2x32xf32> to vector<2x32xbf16>
    %cst_89 = arith.constant dense<0.000000e+00> : vector<2x96xf32>
    %535 = tpu.matmul %534, %17, %cst_89 {dimension_numbers = #tpu.dot_dimension_numbers<[1], [0], [0], [1], [0, 0, 1, 1], [], []>} : vector<2x32xbf16>, vector<32x96xbf16>, vector<2x96xf32> -> vector<2x96xf32>
    %536 = arith.addf %535, %34 : vector<2x96xf32>
    %537 = vector.extract_strided_slice %536 {offsets = [0, 0], sizes = [2, 32], strides = [1, 1]} : vector<2x96xf32> to vector<2x32xf32>
    %538 = vector.extract_strided_slice %536 {offsets = [0, 32], sizes = [2, 32], strides = [1, 1]} : vector<2x96xf32> to vector<2x32xf32>
    %539 = vector.extract_strided_slice %536 {offsets = [0, 64], sizes = [2, 32], strides = [1, 1]} : vector<2x96xf32> to vector<2x32xf32>
    %540 = vector.extract_strided_slice %520 {offsets = [0, 0], sizes = [2, 32], strides = [1, 1]} : vector<2x96xf32> to vector<2x32xf32>
    %541 = arith.addf %537, %540 : vector<2x32xf32>
    %542 = arith.negf %541 : vector<2x32xf32>
    %543 = math.exp %542 : vector<2x32xf32>
    %cst_90 = arith.constant 1.000000e+00 : f32
    %544 = vector.broadcast %cst_90 : f32 to vector<2x32xf32>
    %545 = arith.addf %544, %543 : vector<2x32xf32>
    %546 = arith.divf %544, %545 : vector<2x32xf32>
    %547 = vector.extract_strided_slice %520 {offsets = [0, 32], sizes = [2, 32], strides = [1, 1]} : vector<2x96xf32> to vector<2x32xf32>
    %548 = arith.addf %538, %547 : vector<2x32xf32>
    %549 = arith.negf %548 : vector<2x32xf32>
    %550 = math.exp %549 : vector<2x32xf32>
    %cst_91 = arith.constant 1.000000e+00 : f32
    %551 = vector.broadcast %cst_91 : f32 to vector<2x32xf32>
    %552 = arith.addf %551, %550 : vector<2x32xf32>
    %553 = arith.divf %551, %552 : vector<2x32xf32>
    %554 = vector.extract_strided_slice %520 {offsets = [0, 64], sizes = [2, 32], strides = [1, 1]} : vector<2x96xf32> to vector<2x32xf32>
    %555 = arith.mulf %546, %554 : vector<2x32xf32>
    %556 = arith.addf %539, %555 : vector<2x32xf32>
    %557 = math.tanh %556 : vector<2x32xf32>
    %cst_92 = arith.constant 1.000000e+00 : f32
    %558 = vector.broadcast %cst_92 : f32 to vector<2x32xf32>
    %559 = arith.subf %558, %553 : vector<2x32xf32>
    %560 = arith.mulf %559, %557 : vector<2x32xf32>
    %561 = arith.mulf %553, %514 : vector<2x32xf32>
    %562 = arith.addf %560, %561 : vector<2x32xf32>
    %563 = arith.addf %515, %562 : vector<2x32xf32>
    %564 = arith.truncf %562 : vector<2x32xf32> to vector<2x32xbf16>
    %cst_93 = arith.constant dense<0.000000e+00> : vector<2x128xf32>
    %565 = tpu.matmul %564, %1, %cst_93 {dimension_numbers = #tpu.dot_dimension_numbers<[1], [0], [0], [1], [0, 0, 1, 1], [], []>} : vector<2x32xbf16>, vector<32x128xbf16>, vector<2x128xf32> -> vector<2x128xf32>
    %566 = vector.broadcast %2 : vector<1x128xf32> to vector<2x128xf32>
    %567 = arith.addf %565, %566 : vector<2x128xf32>
    %568 = vector.extract_strided_slice %567 {offsets = [0, 0], sizes = [2, 96], strides = [1, 1]} : vector<2x128xf32> to vector<2x96xf32>
    %569 = vector.extract_strided_slice %567 {offsets = [0, 96], sizes = [2, 32], strides = [1, 1]} : vector<2x128xf32> to vector<2x32xf32>
    %cst_94 = arith.constant dense<0xFF800000> : vector<2xf32>
    %570 = vector.multi_reduction <maximumf>, %569, %cst_94 [1] : vector<2x32xf32> to vector<2xf32>
    %571 = vector.shape_cast %570 : vector<2xf32> to vector<2x1xf32>
    %572 = vector.broadcast %571 : vector<2x1xf32> to vector<2x32xf32>
    %573 = arith.cmpf oge, %569, %572 : vector<2x32xf32>
    %c32_i32_95 = arith.constant 32 : i32
    %574 = vector.broadcast %c32_i32_95 : i32 to vector<2x32xi32>
    %575 = arith.select %573, %35, %574 : vector<2x32xi1>, vector<2x32xi32>
    %cst_96 = arith.constant dense<2147483647> : vector<2xi32>
    %576 = vector.multi_reduction <minsi>, %575, %cst_96 [1] : vector<2x32xi32> to vector<2xi32>
    %577 = vector.shape_cast %576 : vector<2xi32> to vector<2x1xi32>
    %578 = vector.broadcast %577 : vector<2x1xi32> to vector<2x32xi32>
    %579 = arith.cmpi eq, %35, %578 : vector<2x32xi32>
    %580 = arith.extui %579 : vector<2x32xi1> to vector<2x32xi32>
    %581 = arith.sitofp %580 : vector<2x32xi32> to vector<2x32xf32>
    %582 = arith.truncf %581 : vector<2x32xf32> to vector<2x32xbf16>
    %cst_97 = arith.constant dense<0.000000e+00> : vector<2x96xf32>
    %583 = tpu.matmul %582, %17, %cst_97 {dimension_numbers = #tpu.dot_dimension_numbers<[1], [0], [0], [1], [0, 0, 1, 1], [], []>} : vector<2x32xbf16>, vector<32x96xbf16>, vector<2x96xf32> -> vector<2x96xf32>
    %584 = arith.addf %583, %34 : vector<2x96xf32>
    %585 = vector.extract_strided_slice %584 {offsets = [0, 0], sizes = [2, 32], strides = [1, 1]} : vector<2x96xf32> to vector<2x32xf32>
    %586 = vector.extract_strided_slice %584 {offsets = [0, 32], sizes = [2, 32], strides = [1, 1]} : vector<2x96xf32> to vector<2x32xf32>
    %587 = vector.extract_strided_slice %584 {offsets = [0, 64], sizes = [2, 32], strides = [1, 1]} : vector<2x96xf32> to vector<2x32xf32>
    %588 = vector.extract_strided_slice %568 {offsets = [0, 0], sizes = [2, 32], strides = [1, 1]} : vector<2x96xf32> to vector<2x32xf32>
    %589 = arith.addf %585, %588 : vector<2x32xf32>
    %590 = arith.negf %589 : vector<2x32xf32>
    %591 = math.exp %590 : vector<2x32xf32>
    %cst_98 = arith.constant 1.000000e+00 : f32
    %592 = vector.broadcast %cst_98 : f32 to vector<2x32xf32>
    %593 = arith.addf %592, %591 : vector<2x32xf32>
    %594 = arith.divf %592, %593 : vector<2x32xf32>
    %595 = vector.extract_strided_slice %568 {offsets = [0, 32], sizes = [2, 32], strides = [1, 1]} : vector<2x96xf32> to vector<2x32xf32>
    %596 = arith.addf %586, %595 : vector<2x32xf32>
    %597 = arith.negf %596 : vector<2x32xf32>
    %598 = math.exp %597 : vector<2x32xf32>
    %cst_99 = arith.constant 1.000000e+00 : f32
    %599 = vector.broadcast %cst_99 : f32 to vector<2x32xf32>
    %600 = arith.addf %599, %598 : vector<2x32xf32>
    %601 = arith.divf %599, %600 : vector<2x32xf32>
    %602 = vector.extract_strided_slice %568 {offsets = [0, 64], sizes = [2, 32], strides = [1, 1]} : vector<2x96xf32> to vector<2x32xf32>
    %603 = arith.mulf %594, %602 : vector<2x32xf32>
    %604 = arith.addf %587, %603 : vector<2x32xf32>
    %605 = math.tanh %604 : vector<2x32xf32>
    %cst_100 = arith.constant 1.000000e+00 : f32
    %606 = vector.broadcast %cst_100 : f32 to vector<2x32xf32>
    %607 = arith.subf %606, %601 : vector<2x32xf32>
    %608 = arith.mulf %607, %605 : vector<2x32xf32>
    %609 = arith.mulf %601, %562 : vector<2x32xf32>
    %610 = arith.addf %608, %609 : vector<2x32xf32>
    %611 = arith.addf %563, %610 : vector<2x32xf32>
    %612 = arith.truncf %610 : vector<2x32xf32> to vector<2x32xbf16>
    %cst_101 = arith.constant dense<0.000000e+00> : vector<2x128xf32>
    %613 = tpu.matmul %612, %1, %cst_101 {dimension_numbers = #tpu.dot_dimension_numbers<[1], [0], [0], [1], [0, 0, 1, 1], [], []>} : vector<2x32xbf16>, vector<32x128xbf16>, vector<2x128xf32> -> vector<2x128xf32>
    %614 = vector.broadcast %2 : vector<1x128xf32> to vector<2x128xf32>
    %615 = arith.addf %613, %614 : vector<2x128xf32>
    %616 = vector.extract_strided_slice %615 {offsets = [0, 0], sizes = [2, 96], strides = [1, 1]} : vector<2x128xf32> to vector<2x96xf32>
    %617 = vector.extract_strided_slice %615 {offsets = [0, 96], sizes = [2, 32], strides = [1, 1]} : vector<2x128xf32> to vector<2x32xf32>
    %cst_102 = arith.constant dense<0xFF800000> : vector<2xf32>
    %618 = vector.multi_reduction <maximumf>, %617, %cst_102 [1] : vector<2x32xf32> to vector<2xf32>
    %619 = vector.shape_cast %618 : vector<2xf32> to vector<2x1xf32>
    %620 = vector.broadcast %619 : vector<2x1xf32> to vector<2x32xf32>
    %621 = arith.cmpf oge, %617, %620 : vector<2x32xf32>
    %c32_i32_103 = arith.constant 32 : i32
    %622 = vector.broadcast %c32_i32_103 : i32 to vector<2x32xi32>
    %623 = arith.select %621, %35, %622 : vector<2x32xi1>, vector<2x32xi32>
    %cst_104 = arith.constant dense<2147483647> : vector<2xi32>
    %624 = vector.multi_reduction <minsi>, %623, %cst_104 [1] : vector<2x32xi32> to vector<2xi32>
    %625 = vector.shape_cast %624 : vector<2xi32> to vector<2x1xi32>
    %626 = vector.broadcast %625 : vector<2x1xi32> to vector<2x32xi32>
    %627 = arith.cmpi eq, %35, %626 : vector<2x32xi32>
    %628 = arith.extui %627 : vector<2x32xi1> to vector<2x32xi32>
    %629 = arith.sitofp %628 : vector<2x32xi32> to vector<2x32xf32>
    %630 = arith.truncf %629 : vector<2x32xf32> to vector<2x32xbf16>
    %cst_105 = arith.constant dense<0.000000e+00> : vector<2x96xf32>
    %631 = tpu.matmul %630, %17, %cst_105 {dimension_numbers = #tpu.dot_dimension_numbers<[1], [0], [0], [1], [0, 0, 1, 1], [], []>} : vector<2x32xbf16>, vector<32x96xbf16>, vector<2x96xf32> -> vector<2x96xf32>
    %632 = arith.addf %631, %34 : vector<2x96xf32>
    %633 = vector.extract_strided_slice %632 {offsets = [0, 0], sizes = [2, 32], strides = [1, 1]} : vector<2x96xf32> to vector<2x32xf32>
    %634 = vector.extract_strided_slice %632 {offsets = [0, 32], sizes = [2, 32], strides = [1, 1]} : vector<2x96xf32> to vector<2x32xf32>
    %635 = vector.extract_strided_slice %632 {offsets = [0, 64], sizes = [2, 32], strides = [1, 1]} : vector<2x96xf32> to vector<2x32xf32>
    %636 = vector.extract_strided_slice %616 {offsets = [0, 0], sizes = [2, 32], strides = [1, 1]} : vector<2x96xf32> to vector<2x32xf32>
    %637 = arith.addf %633, %636 : vector<2x32xf32>
    %638 = arith.negf %637 : vector<2x32xf32>
    %639 = math.exp %638 : vector<2x32xf32>
    %cst_106 = arith.constant 1.000000e+00 : f32
    %640 = vector.broadcast %cst_106 : f32 to vector<2x32xf32>
    %641 = arith.addf %640, %639 : vector<2x32xf32>
    %642 = arith.divf %640, %641 : vector<2x32xf32>
    %643 = vector.extract_strided_slice %616 {offsets = [0, 32], sizes = [2, 32], strides = [1, 1]} : vector<2x96xf32> to vector<2x32xf32>
    %644 = arith.addf %634, %643 : vector<2x32xf32>
    %645 = arith.negf %644 : vector<2x32xf32>
    %646 = math.exp %645 : vector<2x32xf32>
    %cst_107 = arith.constant 1.000000e+00 : f32
    %647 = vector.broadcast %cst_107 : f32 to vector<2x32xf32>
    %648 = arith.addf %647, %646 : vector<2x32xf32>
    %649 = arith.divf %647, %648 : vector<2x32xf32>
    %650 = vector.extract_strided_slice %616 {offsets = [0, 64], sizes = [2, 32], strides = [1, 1]} : vector<2x96xf32> to vector<2x32xf32>
    %651 = arith.mulf %642, %650 : vector<2x32xf32>
    %652 = arith.addf %635, %651 : vector<2x32xf32>
    %653 = math.tanh %652 : vector<2x32xf32>
    %cst_108 = arith.constant 1.000000e+00 : f32
    %654 = vector.broadcast %cst_108 : f32 to vector<2x32xf32>
    %655 = arith.subf %654, %649 : vector<2x32xf32>
    %656 = arith.mulf %655, %653 : vector<2x32xf32>
    %657 = arith.mulf %649, %610 : vector<2x32xf32>
    %658 = arith.addf %656, %657 : vector<2x32xf32>
    %659 = arith.addf %611, %658 : vector<2x32xf32>
    %660 = arith.truncf %658 : vector<2x32xf32> to vector<2x32xbf16>
    %cst_109 = arith.constant dense<0.000000e+00> : vector<2x128xf32>
    %661 = tpu.matmul %660, %1, %cst_109 {dimension_numbers = #tpu.dot_dimension_numbers<[1], [0], [0], [1], [0, 0, 1, 1], [], []>} : vector<2x32xbf16>, vector<32x128xbf16>, vector<2x128xf32> -> vector<2x128xf32>
    %662 = vector.broadcast %2 : vector<1x128xf32> to vector<2x128xf32>
    %663 = arith.addf %661, %662 : vector<2x128xf32>
    %664 = vector.extract_strided_slice %663 {offsets = [0, 96], sizes = [2, 32], strides = [1, 1]} : vector<2x128xf32> to vector<2x32xf32>
    %cst_110 = arith.constant dense<0xFF800000> : vector<2xf32>
    %665 = vector.multi_reduction <maximumf>, %664, %cst_110 [1] : vector<2x32xf32> to vector<2xf32>
    %666 = vector.shape_cast %665 : vector<2xf32> to vector<2x1xf32>
    %667 = vector.broadcast %666 : vector<2x1xf32> to vector<2x32xf32>
    %668 = arith.cmpf oge, %664, %667 : vector<2x32xf32>
    %c32_i32_111 = arith.constant 32 : i32
    %669 = vector.broadcast %c32_i32_111 : i32 to vector<2x32xi32>
    %670 = arith.select %668, %35, %669 : vector<2x32xi1>, vector<2x32xi32>
    %cst_112 = arith.constant dense<2147483647> : vector<2xi32>
    %671 = vector.multi_reduction <minsi>, %670, %cst_112 [1] : vector<2x32xi32> to vector<2xi32>
    %672 = vector.shape_cast %671 : vector<2xi32> to vector<2x1xi32>
    %673 = vector.broadcast %672 : vector<2x1xi32> to vector<2x32xi32>
    %674 = arith.cmpi eq, %35, %673 : vector<2x32xi32>
    %675 = arith.extui %674 : vector<2x32xi1> to vector<2x32xi32>
    %676 = arith.sitofp %675 : vector<2x32xi32> to vector<2x32xf32>
    %677 = arith.truncf %676 : vector<2x32xf32> to vector<2x32xbf16>
    %678 = tpu.concatenate %342, %390, %438, %486, %534, %582, %630, %677 in 0 : vector<2x32xbf16>, vector<2x32xbf16>, vector<2x32xbf16>, vector<2x32xbf16>, vector<2x32xbf16>, vector<2x32xbf16>, vector<2x32xbf16>, vector<2x32xbf16> -> vector<16x32xbf16>
    %cst_113 = arith.constant dense<0.000000e+00> : vector<16x96xf32>
    %679 = tpu.matmul %678, %15, %cst_113 {dimension_numbers = #tpu.dot_dimension_numbers<[1], [0], [0], [1], [0, 0, 1, 1], [], []>} : vector<16x32xbf16>, vector<32x96xbf16>, vector<16x96xf32> -> vector<16x96xf32>
    %680 = vector.broadcast %8 : vector<1x96xf32> to vector<16x96xf32>
    %681 = arith.addf %679, %680 : vector<16x96xf32>
    %cst_114 = arith.constant dense<0.000000e+00> : vector<16x96xf32>
    %682 = tpu.matmul %678, %17, %cst_114 {dimension_numbers = #tpu.dot_dimension_numbers<[1], [0], [0], [1], [0, 0, 1, 1], [], []>} : vector<16x32xbf16>, vector<32x96xbf16>, vector<16x96xf32> -> vector<16x96xf32>
    %683 = tpu.concatenate %34, %34, %34, %34, %34, %34, %34, %34 in 0 : vector<2x96xf32>, vector<2x96xf32>, vector<2x96xf32>, vector<2x96xf32>, vector<2x96xf32>, vector<2x96xf32>, vector<2x96xf32>, vector<2x96xf32> -> vector<16x96xf32>
    %684 = arith.addf %682, %683 : vector<16x96xf32>
    %685 = vector.extract_strided_slice %681 {offsets = [0, 0], sizes = [16, 32], strides = [1, 1]} : vector<16x96xf32> to vector<16x32xf32>
    %686 = vector.extract_strided_slice %681 {offsets = [0, 32], sizes = [16, 32], strides = [1, 1]} : vector<16x96xf32> to vector<16x32xf32>
    %687 = vector.extract_strided_slice %681 {offsets = [0, 64], sizes = [16, 32], strides = [1, 1]} : vector<16x96xf32> to vector<16x32xf32>
    %688 = vector.extract_strided_slice %684 {offsets = [0, 0], sizes = [16, 32], strides = [1, 1]} : vector<16x96xf32> to vector<16x32xf32>
    %689 = vector.extract_strided_slice %684 {offsets = [0, 32], sizes = [16, 32], strides = [1, 1]} : vector<16x96xf32> to vector<16x32xf32>
    %690 = vector.extract_strided_slice %684 {offsets = [0, 64], sizes = [16, 32], strides = [1, 1]} : vector<16x96xf32> to vector<16x32xf32>
    %cst_115 = arith.constant 0.000000e+00 : f32
    %691 = vector.broadcast %cst_115 : f32 to vector<2x32xf32>
    %692 = vector.shape_cast %9 : vector<1x96xf32> to vector<1x96xf32>
    %693 = vector.broadcast %692 : vector<1x96xf32> to vector<2x96xf32>
    %694 = vector.extract_strided_slice %685 {offsets = [0, 0], sizes = [2, 32], strides = [1, 1]} : vector<16x32xf32> to vector<2x32xf32>
    %695 = vector.extract_strided_slice %686 {offsets = [0, 0], sizes = [2, 32], strides = [1, 1]} : vector<16x32xf32> to vector<2x32xf32>
    %696 = vector.extract_strided_slice %687 {offsets = [0, 0], sizes = [2, 32], strides = [1, 1]} : vector<16x32xf32> to vector<2x32xf32>
    %697 = vector.extract_strided_slice %693 {offsets = [0, 0], sizes = [2, 32], strides = [1, 1]} : vector<2x96xf32> to vector<2x32xf32>
    %698 = arith.addf %694, %697 : vector<2x32xf32>
    %699 = arith.negf %698 : vector<2x32xf32>
    %700 = math.exp %699 : vector<2x32xf32>
    %cst_116 = arith.constant 1.000000e+00 : f32
    %701 = vector.broadcast %cst_116 : f32 to vector<2x32xf32>
    %702 = arith.addf %701, %700 : vector<2x32xf32>
    %703 = arith.divf %701, %702 : vector<2x32xf32>
    %704 = vector.extract_strided_slice %693 {offsets = [0, 32], sizes = [2, 32], strides = [1, 1]} : vector<2x96xf32> to vector<2x32xf32>
    %705 = arith.addf %695, %704 : vector<2x32xf32>
    %706 = arith.negf %705 : vector<2x32xf32>
    %707 = math.exp %706 : vector<2x32xf32>
    %cst_117 = arith.constant 1.000000e+00 : f32
    %708 = vector.broadcast %cst_117 : f32 to vector<2x32xf32>
    %709 = arith.addf %708, %707 : vector<2x32xf32>
    %710 = arith.divf %708, %709 : vector<2x32xf32>
    %711 = vector.extract_strided_slice %693 {offsets = [0, 64], sizes = [2, 32], strides = [1, 1]} : vector<2x96xf32> to vector<2x32xf32>
    %712 = arith.mulf %703, %711 : vector<2x32xf32>
    %713 = arith.addf %696, %712 : vector<2x32xf32>
    %714 = math.tanh %713 : vector<2x32xf32>
    %cst_118 = arith.constant 1.000000e+00 : f32
    %715 = vector.broadcast %cst_118 : f32 to vector<2x32xf32>
    %716 = arith.subf %715, %710 : vector<2x32xf32>
    %717 = arith.mulf %716, %714 : vector<2x32xf32>
    %718 = arith.mulf %710, %691 : vector<2x32xf32>
    %719 = arith.addf %717, %718 : vector<2x32xf32>
    %720 = arith.truncf %719 : vector<2x32xf32> to vector<2x32xbf16>
    %cst_119 = arith.constant dense<0.000000e+00> : vector<2x96xf32>
    %721 = tpu.matmul %720, %19, %cst_119 {dimension_numbers = #tpu.dot_dimension_numbers<[1], [0], [0], [1], [0, 0, 1, 1], [], []>} : vector<2x32xbf16>, vector<32x96xbf16>, vector<2x96xf32> -> vector<2x96xf32>
    %722 = vector.broadcast %9 : vector<1x96xf32> to vector<2x96xf32>
    %723 = arith.addf %721, %722 : vector<2x96xf32>
    %724 = vector.extract_strided_slice %685 {offsets = [2, 0], sizes = [2, 32], strides = [1, 1]} : vector<16x32xf32> to vector<2x32xf32>
    %725 = vector.extract_strided_slice %686 {offsets = [2, 0], sizes = [2, 32], strides = [1, 1]} : vector<16x32xf32> to vector<2x32xf32>
    %726 = vector.extract_strided_slice %687 {offsets = [2, 0], sizes = [2, 32], strides = [1, 1]} : vector<16x32xf32> to vector<2x32xf32>
    %727 = vector.extract_strided_slice %723 {offsets = [0, 0], sizes = [2, 32], strides = [1, 1]} : vector<2x96xf32> to vector<2x32xf32>
    %728 = arith.addf %724, %727 : vector<2x32xf32>
    %729 = arith.negf %728 : vector<2x32xf32>
    %730 = math.exp %729 : vector<2x32xf32>
    %cst_120 = arith.constant 1.000000e+00 : f32
    %731 = vector.broadcast %cst_120 : f32 to vector<2x32xf32>
    %732 = arith.addf %731, %730 : vector<2x32xf32>
    %733 = arith.divf %731, %732 : vector<2x32xf32>
    %734 = vector.extract_strided_slice %723 {offsets = [0, 32], sizes = [2, 32], strides = [1, 1]} : vector<2x96xf32> to vector<2x32xf32>
    %735 = arith.addf %725, %734 : vector<2x32xf32>
    %736 = arith.negf %735 : vector<2x32xf32>
    %737 = math.exp %736 : vector<2x32xf32>
    %cst_121 = arith.constant 1.000000e+00 : f32
    %738 = vector.broadcast %cst_121 : f32 to vector<2x32xf32>
    %739 = arith.addf %738, %737 : vector<2x32xf32>
    %740 = arith.divf %738, %739 : vector<2x32xf32>
    %741 = vector.extract_strided_slice %723 {offsets = [0, 64], sizes = [2, 32], strides = [1, 1]} : vector<2x96xf32> to vector<2x32xf32>
    %742 = arith.mulf %733, %741 : vector<2x32xf32>
    %743 = arith.addf %726, %742 : vector<2x32xf32>
    %744 = math.tanh %743 : vector<2x32xf32>
    %cst_122 = arith.constant 1.000000e+00 : f32
    %745 = vector.broadcast %cst_122 : f32 to vector<2x32xf32>
    %746 = arith.subf %745, %740 : vector<2x32xf32>
    %747 = arith.mulf %746, %744 : vector<2x32xf32>
    %748 = arith.mulf %740, %719 : vector<2x32xf32>
    %749 = arith.addf %747, %748 : vector<2x32xf32>
    %750 = arith.truncf %749 : vector<2x32xf32> to vector<2x32xbf16>
    %cst_123 = arith.constant dense<0.000000e+00> : vector<2x96xf32>
    %751 = tpu.matmul %750, %19, %cst_123 {dimension_numbers = #tpu.dot_dimension_numbers<[1], [0], [0], [1], [0, 0, 1, 1], [], []>} : vector<2x32xbf16>, vector<32x96xbf16>, vector<2x96xf32> -> vector<2x96xf32>
    %752 = vector.broadcast %9 : vector<1x96xf32> to vector<2x96xf32>
    %753 = arith.addf %751, %752 : vector<2x96xf32>
    %754 = vector.extract_strided_slice %685 {offsets = [4, 0], sizes = [2, 32], strides = [1, 1]} : vector<16x32xf32> to vector<2x32xf32>
    %755 = vector.extract_strided_slice %686 {offsets = [4, 0], sizes = [2, 32], strides = [1, 1]} : vector<16x32xf32> to vector<2x32xf32>
    %756 = vector.extract_strided_slice %687 {offsets = [4, 0], sizes = [2, 32], strides = [1, 1]} : vector<16x32xf32> to vector<2x32xf32>
    %757 = vector.extract_strided_slice %753 {offsets = [0, 0], sizes = [2, 32], strides = [1, 1]} : vector<2x96xf32> to vector<2x32xf32>
    %758 = arith.addf %754, %757 : vector<2x32xf32>
    %759 = arith.negf %758 : vector<2x32xf32>
    %760 = math.exp %759 : vector<2x32xf32>
    %cst_124 = arith.constant 1.000000e+00 : f32
    %761 = vector.broadcast %cst_124 : f32 to vector<2x32xf32>
    %762 = arith.addf %761, %760 : vector<2x32xf32>
    %763 = arith.divf %761, %762 : vector<2x32xf32>
    %764 = vector.extract_strided_slice %753 {offsets = [0, 32], sizes = [2, 32], strides = [1, 1]} : vector<2x96xf32> to vector<2x32xf32>
    %765 = arith.addf %755, %764 : vector<2x32xf32>
    %766 = arith.negf %765 : vector<2x32xf32>
    %767 = math.exp %766 : vector<2x32xf32>
    %cst_125 = arith.constant 1.000000e+00 : f32
    %768 = vector.broadcast %cst_125 : f32 to vector<2x32xf32>
    %769 = arith.addf %768, %767 : vector<2x32xf32>
    %770 = arith.divf %768, %769 : vector<2x32xf32>
    %771 = vector.extract_strided_slice %753 {offsets = [0, 64], sizes = [2, 32], strides = [1, 1]} : vector<2x96xf32> to vector<2x32xf32>
    %772 = arith.mulf %763, %771 : vector<2x32xf32>
    %773 = arith.addf %756, %772 : vector<2x32xf32>
    %774 = math.tanh %773 : vector<2x32xf32>
    %cst_126 = arith.constant 1.000000e+00 : f32
    %775 = vector.broadcast %cst_126 : f32 to vector<2x32xf32>
    %776 = arith.subf %775, %770 : vector<2x32xf32>
    %777 = arith.mulf %776, %774 : vector<2x32xf32>
    %778 = arith.mulf %770, %749 : vector<2x32xf32>
    %779 = arith.addf %777, %778 : vector<2x32xf32>
    %780 = arith.truncf %779 : vector<2x32xf32> to vector<2x32xbf16>
    %cst_127 = arith.constant dense<0.000000e+00> : vector<2x96xf32>
    %781 = tpu.matmul %780, %19, %cst_127 {dimension_numbers = #tpu.dot_dimension_numbers<[1], [0], [0], [1], [0, 0, 1, 1], [], []>} : vector<2x32xbf16>, vector<32x96xbf16>, vector<2x96xf32> -> vector<2x96xf32>
    %782 = vector.broadcast %9 : vector<1x96xf32> to vector<2x96xf32>
    %783 = arith.addf %781, %782 : vector<2x96xf32>
    %784 = vector.extract_strided_slice %685 {offsets = [6, 0], sizes = [2, 32], strides = [1, 1]} : vector<16x32xf32> to vector<2x32xf32>
    %785 = vector.extract_strided_slice %686 {offsets = [6, 0], sizes = [2, 32], strides = [1, 1]} : vector<16x32xf32> to vector<2x32xf32>
    %786 = vector.extract_strided_slice %687 {offsets = [6, 0], sizes = [2, 32], strides = [1, 1]} : vector<16x32xf32> to vector<2x32xf32>
    %787 = vector.extract_strided_slice %783 {offsets = [0, 0], sizes = [2, 32], strides = [1, 1]} : vector<2x96xf32> to vector<2x32xf32>
    %788 = arith.addf %784, %787 : vector<2x32xf32>
    %789 = arith.negf %788 : vector<2x32xf32>
    %790 = math.exp %789 : vector<2x32xf32>
    %cst_128 = arith.constant 1.000000e+00 : f32
    %791 = vector.broadcast %cst_128 : f32 to vector<2x32xf32>
    %792 = arith.addf %791, %790 : vector<2x32xf32>
    %793 = arith.divf %791, %792 : vector<2x32xf32>
    %794 = vector.extract_strided_slice %783 {offsets = [0, 32], sizes = [2, 32], strides = [1, 1]} : vector<2x96xf32> to vector<2x32xf32>
    %795 = arith.addf %785, %794 : vector<2x32xf32>
    %796 = arith.negf %795 : vector<2x32xf32>
    %797 = math.exp %796 : vector<2x32xf32>
    %cst_129 = arith.constant 1.000000e+00 : f32
    %798 = vector.broadcast %cst_129 : f32 to vector<2x32xf32>
    %799 = arith.addf %798, %797 : vector<2x32xf32>
    %800 = arith.divf %798, %799 : vector<2x32xf32>
    %801 = vector.extract_strided_slice %783 {offsets = [0, 64], sizes = [2, 32], strides = [1, 1]} : vector<2x96xf32> to vector<2x32xf32>
    %802 = arith.mulf %793, %801 : vector<2x32xf32>
    %803 = arith.addf %786, %802 : vector<2x32xf32>
    %804 = math.tanh %803 : vector<2x32xf32>
    %cst_130 = arith.constant 1.000000e+00 : f32
    %805 = vector.broadcast %cst_130 : f32 to vector<2x32xf32>
    %806 = arith.subf %805, %800 : vector<2x32xf32>
    %807 = arith.mulf %806, %804 : vector<2x32xf32>
    %808 = arith.mulf %800, %779 : vector<2x32xf32>
    %809 = arith.addf %807, %808 : vector<2x32xf32>
    %810 = arith.truncf %809 : vector<2x32xf32> to vector<2x32xbf16>
    %cst_131 = arith.constant dense<0.000000e+00> : vector<2x96xf32>
    %811 = tpu.matmul %810, %19, %cst_131 {dimension_numbers = #tpu.dot_dimension_numbers<[1], [0], [0], [1], [0, 0, 1, 1], [], []>} : vector<2x32xbf16>, vector<32x96xbf16>, vector<2x96xf32> -> vector<2x96xf32>
    %812 = vector.broadcast %9 : vector<1x96xf32> to vector<2x96xf32>
    %813 = arith.addf %811, %812 : vector<2x96xf32>
    %814 = vector.extract_strided_slice %685 {offsets = [8, 0], sizes = [2, 32], strides = [1, 1]} : vector<16x32xf32> to vector<2x32xf32>
    %815 = vector.extract_strided_slice %686 {offsets = [8, 0], sizes = [2, 32], strides = [1, 1]} : vector<16x32xf32> to vector<2x32xf32>
    %816 = vector.extract_strided_slice %687 {offsets = [8, 0], sizes = [2, 32], strides = [1, 1]} : vector<16x32xf32> to vector<2x32xf32>
    %817 = vector.extract_strided_slice %813 {offsets = [0, 0], sizes = [2, 32], strides = [1, 1]} : vector<2x96xf32> to vector<2x32xf32>
    %818 = arith.addf %814, %817 : vector<2x32xf32>
    %819 = arith.negf %818 : vector<2x32xf32>
    %820 = math.exp %819 : vector<2x32xf32>
    %cst_132 = arith.constant 1.000000e+00 : f32
    %821 = vector.broadcast %cst_132 : f32 to vector<2x32xf32>
    %822 = arith.addf %821, %820 : vector<2x32xf32>
    %823 = arith.divf %821, %822 : vector<2x32xf32>
    %824 = vector.extract_strided_slice %813 {offsets = [0, 32], sizes = [2, 32], strides = [1, 1]} : vector<2x96xf32> to vector<2x32xf32>
    %825 = arith.addf %815, %824 : vector<2x32xf32>
    %826 = arith.negf %825 : vector<2x32xf32>
    %827 = math.exp %826 : vector<2x32xf32>
    %cst_133 = arith.constant 1.000000e+00 : f32
    %828 = vector.broadcast %cst_133 : f32 to vector<2x32xf32>
    %829 = arith.addf %828, %827 : vector<2x32xf32>
    %830 = arith.divf %828, %829 : vector<2x32xf32>
    %831 = vector.extract_strided_slice %813 {offsets = [0, 64], sizes = [2, 32], strides = [1, 1]} : vector<2x96xf32> to vector<2x32xf32>
    %832 = arith.mulf %823, %831 : vector<2x32xf32>
    %833 = arith.addf %816, %832 : vector<2x32xf32>
    %834 = math.tanh %833 : vector<2x32xf32>
    %cst_134 = arith.constant 1.000000e+00 : f32
    %835 = vector.broadcast %cst_134 : f32 to vector<2x32xf32>
    %836 = arith.subf %835, %830 : vector<2x32xf32>
    %837 = arith.mulf %836, %834 : vector<2x32xf32>
    %838 = arith.mulf %830, %809 : vector<2x32xf32>
    %839 = arith.addf %837, %838 : vector<2x32xf32>
    %840 = arith.truncf %839 : vector<2x32xf32> to vector<2x32xbf16>
    %cst_135 = arith.constant dense<0.000000e+00> : vector<2x96xf32>
    %841 = tpu.matmul %840, %19, %cst_135 {dimension_numbers = #tpu.dot_dimension_numbers<[1], [0], [0], [1], [0, 0, 1, 1], [], []>} : vector<2x32xbf16>, vector<32x96xbf16>, vector<2x96xf32> -> vector<2x96xf32>
    %842 = vector.broadcast %9 : vector<1x96xf32> to vector<2x96xf32>
    %843 = arith.addf %841, %842 : vector<2x96xf32>
    %844 = vector.extract_strided_slice %685 {offsets = [10, 0], sizes = [2, 32], strides = [1, 1]} : vector<16x32xf32> to vector<2x32xf32>
    %845 = vector.extract_strided_slice %686 {offsets = [10, 0], sizes = [2, 32], strides = [1, 1]} : vector<16x32xf32> to vector<2x32xf32>
    %846 = vector.extract_strided_slice %687 {offsets = [10, 0], sizes = [2, 32], strides = [1, 1]} : vector<16x32xf32> to vector<2x32xf32>
    %847 = vector.extract_strided_slice %843 {offsets = [0, 0], sizes = [2, 32], strides = [1, 1]} : vector<2x96xf32> to vector<2x32xf32>
    %848 = arith.addf %844, %847 : vector<2x32xf32>
    %849 = arith.negf %848 : vector<2x32xf32>
    %850 = math.exp %849 : vector<2x32xf32>
    %cst_136 = arith.constant 1.000000e+00 : f32
    %851 = vector.broadcast %cst_136 : f32 to vector<2x32xf32>
    %852 = arith.addf %851, %850 : vector<2x32xf32>
    %853 = arith.divf %851, %852 : vector<2x32xf32>
    %854 = vector.extract_strided_slice %843 {offsets = [0, 32], sizes = [2, 32], strides = [1, 1]} : vector<2x96xf32> to vector<2x32xf32>
    %855 = arith.addf %845, %854 : vector<2x32xf32>
    %856 = arith.negf %855 : vector<2x32xf32>
    %857 = math.exp %856 : vector<2x32xf32>
    %cst_137 = arith.constant 1.000000e+00 : f32
    %858 = vector.broadcast %cst_137 : f32 to vector<2x32xf32>
    %859 = arith.addf %858, %857 : vector<2x32xf32>
    %860 = arith.divf %858, %859 : vector<2x32xf32>
    %861 = vector.extract_strided_slice %843 {offsets = [0, 64], sizes = [2, 32], strides = [1, 1]} : vector<2x96xf32> to vector<2x32xf32>
    %862 = arith.mulf %853, %861 : vector<2x32xf32>
    %863 = arith.addf %846, %862 : vector<2x32xf32>
    %864 = math.tanh %863 : vector<2x32xf32>
    %cst_138 = arith.constant 1.000000e+00 : f32
    %865 = vector.broadcast %cst_138 : f32 to vector<2x32xf32>
    %866 = arith.subf %865, %860 : vector<2x32xf32>
    %867 = arith.mulf %866, %864 : vector<2x32xf32>
    %868 = arith.mulf %860, %839 : vector<2x32xf32>
    %869 = arith.addf %867, %868 : vector<2x32xf32>
    %870 = arith.truncf %869 : vector<2x32xf32> to vector<2x32xbf16>
    %cst_139 = arith.constant dense<0.000000e+00> : vector<2x96xf32>
    %871 = tpu.matmul %870, %19, %cst_139 {dimension_numbers = #tpu.dot_dimension_numbers<[1], [0], [0], [1], [0, 0, 1, 1], [], []>} : vector<2x32xbf16>, vector<32x96xbf16>, vector<2x96xf32> -> vector<2x96xf32>
    %872 = vector.broadcast %9 : vector<1x96xf32> to vector<2x96xf32>
    %873 = arith.addf %871, %872 : vector<2x96xf32>
    %874 = vector.extract_strided_slice %685 {offsets = [12, 0], sizes = [2, 32], strides = [1, 1]} : vector<16x32xf32> to vector<2x32xf32>
    %875 = vector.extract_strided_slice %686 {offsets = [12, 0], sizes = [2, 32], strides = [1, 1]} : vector<16x32xf32> to vector<2x32xf32>
    %876 = vector.extract_strided_slice %687 {offsets = [12, 0], sizes = [2, 32], strides = [1, 1]} : vector<16x32xf32> to vector<2x32xf32>
    %877 = vector.extract_strided_slice %873 {offsets = [0, 0], sizes = [2, 32], strides = [1, 1]} : vector<2x96xf32> to vector<2x32xf32>
    %878 = arith.addf %874, %877 : vector<2x32xf32>
    %879 = arith.negf %878 : vector<2x32xf32>
    %880 = math.exp %879 : vector<2x32xf32>
    %cst_140 = arith.constant 1.000000e+00 : f32
    %881 = vector.broadcast %cst_140 : f32 to vector<2x32xf32>
    %882 = arith.addf %881, %880 : vector<2x32xf32>
    %883 = arith.divf %881, %882 : vector<2x32xf32>
    %884 = vector.extract_strided_slice %873 {offsets = [0, 32], sizes = [2, 32], strides = [1, 1]} : vector<2x96xf32> to vector<2x32xf32>
    %885 = arith.addf %875, %884 : vector<2x32xf32>
    %886 = arith.negf %885 : vector<2x32xf32>
    %887 = math.exp %886 : vector<2x32xf32>
    %cst_141 = arith.constant 1.000000e+00 : f32
    %888 = vector.broadcast %cst_141 : f32 to vector<2x32xf32>
    %889 = arith.addf %888, %887 : vector<2x32xf32>
    %890 = arith.divf %888, %889 : vector<2x32xf32>
    %891 = vector.extract_strided_slice %873 {offsets = [0, 64], sizes = [2, 32], strides = [1, 1]} : vector<2x96xf32> to vector<2x32xf32>
    %892 = arith.mulf %883, %891 : vector<2x32xf32>
    %893 = arith.addf %876, %892 : vector<2x32xf32>
    %894 = math.tanh %893 : vector<2x32xf32>
    %cst_142 = arith.constant 1.000000e+00 : f32
    %895 = vector.broadcast %cst_142 : f32 to vector<2x32xf32>
    %896 = arith.subf %895, %890 : vector<2x32xf32>
    %897 = arith.mulf %896, %894 : vector<2x32xf32>
    %898 = arith.mulf %890, %869 : vector<2x32xf32>
    %899 = arith.addf %897, %898 : vector<2x32xf32>
    %900 = arith.truncf %899 : vector<2x32xf32> to vector<2x32xbf16>
    %cst_143 = arith.constant dense<0.000000e+00> : vector<2x96xf32>
    %901 = tpu.matmul %900, %19, %cst_143 {dimension_numbers = #tpu.dot_dimension_numbers<[1], [0], [0], [1], [0, 0, 1, 1], [], []>} : vector<2x32xbf16>, vector<32x96xbf16>, vector<2x96xf32> -> vector<2x96xf32>
    %902 = vector.broadcast %9 : vector<1x96xf32> to vector<2x96xf32>
    %903 = arith.addf %901, %902 : vector<2x96xf32>
    %904 = vector.extract_strided_slice %685 {offsets = [14, 0], sizes = [2, 32], strides = [1, 1]} : vector<16x32xf32> to vector<2x32xf32>
    %905 = vector.extract_strided_slice %686 {offsets = [14, 0], sizes = [2, 32], strides = [1, 1]} : vector<16x32xf32> to vector<2x32xf32>
    %906 = vector.extract_strided_slice %687 {offsets = [14, 0], sizes = [2, 32], strides = [1, 1]} : vector<16x32xf32> to vector<2x32xf32>
    %907 = vector.extract_strided_slice %903 {offsets = [0, 0], sizes = [2, 32], strides = [1, 1]} : vector<2x96xf32> to vector<2x32xf32>
    %908 = arith.addf %904, %907 : vector<2x32xf32>
    %909 = arith.negf %908 : vector<2x32xf32>
    %910 = math.exp %909 : vector<2x32xf32>
    %cst_144 = arith.constant 1.000000e+00 : f32
    %911 = vector.broadcast %cst_144 : f32 to vector<2x32xf32>
    %912 = arith.addf %911, %910 : vector<2x32xf32>
    %913 = arith.divf %911, %912 : vector<2x32xf32>
    %914 = vector.extract_strided_slice %903 {offsets = [0, 32], sizes = [2, 32], strides = [1, 1]} : vector<2x96xf32> to vector<2x32xf32>
    %915 = arith.addf %905, %914 : vector<2x32xf32>
    %916 = arith.negf %915 : vector<2x32xf32>
    %917 = math.exp %916 : vector<2x32xf32>
    %cst_145 = arith.constant 1.000000e+00 : f32
    %918 = vector.broadcast %cst_145 : f32 to vector<2x32xf32>
    %919 = arith.addf %918, %917 : vector<2x32xf32>
    %920 = arith.divf %918, %919 : vector<2x32xf32>
    %921 = vector.extract_strided_slice %903 {offsets = [0, 64], sizes = [2, 32], strides = [1, 1]} : vector<2x96xf32> to vector<2x32xf32>
    %922 = arith.mulf %913, %921 : vector<2x32xf32>
    %923 = arith.addf %906, %922 : vector<2x32xf32>
    %924 = math.tanh %923 : vector<2x32xf32>
    %cst_146 = arith.constant 1.000000e+00 : f32
    %925 = vector.broadcast %cst_146 : f32 to vector<2x32xf32>
    %926 = arith.subf %925, %920 : vector<2x32xf32>
    %927 = arith.mulf %926, %924 : vector<2x32xf32>
    %928 = arith.mulf %920, %899 : vector<2x32xf32>
    %929 = arith.addf %927, %928 : vector<2x32xf32>
    %930 = arith.truncf %929 : vector<2x32xf32> to vector<2x32xbf16>
    %cst_147 = arith.constant dense<0.000000e+00> : vector<2x128xf32>
    %931 = tpu.matmul %930, %1, %cst_147 {dimension_numbers = #tpu.dot_dimension_numbers<[1], [0], [0], [1], [0, 0, 1, 1], [], []>} : vector<2x32xbf16>, vector<32x128xbf16>, vector<2x128xf32> -> vector<2x128xf32>
    %932 = vector.broadcast %2 : vector<1x128xf32> to vector<2x128xf32>
    %933 = arith.addf %931, %932 : vector<2x128xf32>
    %934 = vector.extract_strided_slice %933 {offsets = [0, 0], sizes = [2, 96], strides = [1, 1]} : vector<2x128xf32> to vector<2x96xf32>
    %cst_148 = arith.constant 0.000000e+00 : f32
    %935 = vector.broadcast %cst_148 : f32 to vector<2x32xf32>
    %936 = vector.extract_strided_slice %688 {offsets = [0, 0], sizes = [2, 32], strides = [1, 1]} : vector<16x32xf32> to vector<2x32xf32>
    %937 = vector.extract_strided_slice %689 {offsets = [0, 0], sizes = [2, 32], strides = [1, 1]} : vector<16x32xf32> to vector<2x32xf32>
    %938 = vector.extract_strided_slice %690 {offsets = [0, 0], sizes = [2, 32], strides = [1, 1]} : vector<16x32xf32> to vector<2x32xf32>
    %939 = vector.extract_strided_slice %934 {offsets = [0, 0], sizes = [2, 32], strides = [1, 1]} : vector<2x96xf32> to vector<2x32xf32>
    %940 = arith.addf %936, %939 : vector<2x32xf32>
    %941 = arith.negf %940 : vector<2x32xf32>
    %942 = math.exp %941 : vector<2x32xf32>
    %cst_149 = arith.constant 1.000000e+00 : f32
    %943 = vector.broadcast %cst_149 : f32 to vector<2x32xf32>
    %944 = arith.addf %943, %942 : vector<2x32xf32>
    %945 = arith.divf %943, %944 : vector<2x32xf32>
    %946 = vector.extract_strided_slice %934 {offsets = [0, 32], sizes = [2, 32], strides = [1, 1]} : vector<2x96xf32> to vector<2x32xf32>
    %947 = arith.addf %937, %946 : vector<2x32xf32>
    %948 = arith.negf %947 : vector<2x32xf32>
    %949 = math.exp %948 : vector<2x32xf32>
    %cst_150 = arith.constant 1.000000e+00 : f32
    %950 = vector.broadcast %cst_150 : f32 to vector<2x32xf32>
    %951 = arith.addf %950, %949 : vector<2x32xf32>
    %952 = arith.divf %950, %951 : vector<2x32xf32>
    %953 = vector.extract_strided_slice %934 {offsets = [0, 64], sizes = [2, 32], strides = [1, 1]} : vector<2x96xf32> to vector<2x32xf32>
    %954 = arith.mulf %945, %953 : vector<2x32xf32>
    %955 = arith.addf %938, %954 : vector<2x32xf32>
    %956 = math.tanh %955 : vector<2x32xf32>
    %cst_151 = arith.constant 1.000000e+00 : f32
    %957 = vector.broadcast %cst_151 : f32 to vector<2x32xf32>
    %958 = arith.subf %957, %952 : vector<2x32xf32>
    %959 = arith.mulf %958, %956 : vector<2x32xf32>
    %960 = arith.mulf %952, %929 : vector<2x32xf32>
    %961 = arith.addf %959, %960 : vector<2x32xf32>
    %962 = arith.addf %935, %961 : vector<2x32xf32>
    %963 = arith.truncf %961 : vector<2x32xf32> to vector<2x32xbf16>
    %cst_152 = arith.constant dense<0.000000e+00> : vector<2x128xf32>
    %964 = tpu.matmul %963, %1, %cst_152 {dimension_numbers = #tpu.dot_dimension_numbers<[1], [0], [0], [1], [0, 0, 1, 1], [], []>} : vector<2x32xbf16>, vector<32x128xbf16>, vector<2x128xf32> -> vector<2x128xf32>
    %965 = vector.broadcast %2 : vector<1x128xf32> to vector<2x128xf32>
    %966 = arith.addf %964, %965 : vector<2x128xf32>
    %967 = vector.extract_strided_slice %966 {offsets = [0, 0], sizes = [2, 96], strides = [1, 1]} : vector<2x128xf32> to vector<2x96xf32>
    %968 = vector.extract_strided_slice %966 {offsets = [0, 96], sizes = [2, 32], strides = [1, 1]} : vector<2x128xf32> to vector<2x32xf32>
    %969 = vector.extract_strided_slice %688 {offsets = [2, 0], sizes = [2, 32], strides = [1, 1]} : vector<16x32xf32> to vector<2x32xf32>
    %970 = vector.extract_strided_slice %689 {offsets = [2, 0], sizes = [2, 32], strides = [1, 1]} : vector<16x32xf32> to vector<2x32xf32>
    %971 = vector.extract_strided_slice %690 {offsets = [2, 0], sizes = [2, 32], strides = [1, 1]} : vector<16x32xf32> to vector<2x32xf32>
    %972 = vector.extract_strided_slice %967 {offsets = [0, 0], sizes = [2, 32], strides = [1, 1]} : vector<2x96xf32> to vector<2x32xf32>
    %973 = arith.addf %969, %972 : vector<2x32xf32>
    %974 = arith.negf %973 : vector<2x32xf32>
    %975 = math.exp %974 : vector<2x32xf32>
    %cst_153 = arith.constant 1.000000e+00 : f32
    %976 = vector.broadcast %cst_153 : f32 to vector<2x32xf32>
    %977 = arith.addf %976, %975 : vector<2x32xf32>
    %978 = arith.divf %976, %977 : vector<2x32xf32>
    %979 = vector.extract_strided_slice %967 {offsets = [0, 32], sizes = [2, 32], strides = [1, 1]} : vector<2x96xf32> to vector<2x32xf32>
    %980 = arith.addf %970, %979 : vector<2x32xf32>
    %981 = arith.negf %980 : vector<2x32xf32>
    %982 = math.exp %981 : vector<2x32xf32>
    %cst_154 = arith.constant 1.000000e+00 : f32
    %983 = vector.broadcast %cst_154 : f32 to vector<2x32xf32>
    %984 = arith.addf %983, %982 : vector<2x32xf32>
    %985 = arith.divf %983, %984 : vector<2x32xf32>
    %986 = vector.extract_strided_slice %967 {offsets = [0, 64], sizes = [2, 32], strides = [1, 1]} : vector<2x96xf32> to vector<2x32xf32>
    %987 = arith.mulf %978, %986 : vector<2x32xf32>
    %988 = arith.addf %971, %987 : vector<2x32xf32>
    %989 = math.tanh %988 : vector<2x32xf32>
    %cst_155 = arith.constant 1.000000e+00 : f32
    %990 = vector.broadcast %cst_155 : f32 to vector<2x32xf32>
    %991 = arith.subf %990, %985 : vector<2x32xf32>
    %992 = arith.mulf %991, %989 : vector<2x32xf32>
    %993 = arith.mulf %985, %961 : vector<2x32xf32>
    %994 = arith.addf %992, %993 : vector<2x32xf32>
    %995 = arith.addf %962, %994 : vector<2x32xf32>
    %996 = arith.truncf %994 : vector<2x32xf32> to vector<2x32xbf16>
    %cst_156 = arith.constant dense<0.000000e+00> : vector<2x128xf32>
    %997 = tpu.matmul %996, %1, %cst_156 {dimension_numbers = #tpu.dot_dimension_numbers<[1], [0], [0], [1], [0, 0, 1, 1], [], []>} : vector<2x32xbf16>, vector<32x128xbf16>, vector<2x128xf32> -> vector<2x128xf32>
    %998 = vector.broadcast %2 : vector<1x128xf32> to vector<2x128xf32>
    %999 = arith.addf %997, %998 : vector<2x128xf32>
    %1000 = vector.extract_strided_slice %999 {offsets = [0, 0], sizes = [2, 96], strides = [1, 1]} : vector<2x128xf32> to vector<2x96xf32>
    %1001 = vector.extract_strided_slice %999 {offsets = [0, 96], sizes = [2, 32], strides = [1, 1]} : vector<2x128xf32> to vector<2x32xf32>
    %1002 = vector.extract_strided_slice %688 {offsets = [4, 0], sizes = [2, 32], strides = [1, 1]} : vector<16x32xf32> to vector<2x32xf32>
    %1003 = vector.extract_strided_slice %689 {offsets = [4, 0], sizes = [2, 32], strides = [1, 1]} : vector<16x32xf32> to vector<2x32xf32>
    %1004 = vector.extract_strided_slice %690 {offsets = [4, 0], sizes = [2, 32], strides = [1, 1]} : vector<16x32xf32> to vector<2x32xf32>
    %1005 = vector.extract_strided_slice %1000 {offsets = [0, 0], sizes = [2, 32], strides = [1, 1]} : vector<2x96xf32> to vector<2x32xf32>
    %1006 = arith.addf %1002, %1005 : vector<2x32xf32>
    %1007 = arith.negf %1006 : vector<2x32xf32>
    %1008 = math.exp %1007 : vector<2x32xf32>
    %cst_157 = arith.constant 1.000000e+00 : f32
    %1009 = vector.broadcast %cst_157 : f32 to vector<2x32xf32>
    %1010 = arith.addf %1009, %1008 : vector<2x32xf32>
    %1011 = arith.divf %1009, %1010 : vector<2x32xf32>
    %1012 = vector.extract_strided_slice %1000 {offsets = [0, 32], sizes = [2, 32], strides = [1, 1]} : vector<2x96xf32> to vector<2x32xf32>
    %1013 = arith.addf %1003, %1012 : vector<2x32xf32>
    %1014 = arith.negf %1013 : vector<2x32xf32>
    %1015 = math.exp %1014 : vector<2x32xf32>
    %cst_158 = arith.constant 1.000000e+00 : f32
    %1016 = vector.broadcast %cst_158 : f32 to vector<2x32xf32>
    %1017 = arith.addf %1016, %1015 : vector<2x32xf32>
    %1018 = arith.divf %1016, %1017 : vector<2x32xf32>
    %1019 = vector.extract_strided_slice %1000 {offsets = [0, 64], sizes = [2, 32], strides = [1, 1]} : vector<2x96xf32> to vector<2x32xf32>
    %1020 = arith.mulf %1011, %1019 : vector<2x32xf32>
    %1021 = arith.addf %1004, %1020 : vector<2x32xf32>
    %1022 = math.tanh %1021 : vector<2x32xf32>
    %cst_159 = arith.constant 1.000000e+00 : f32
    %1023 = vector.broadcast %cst_159 : f32 to vector<2x32xf32>
    %1024 = arith.subf %1023, %1018 : vector<2x32xf32>
    %1025 = arith.mulf %1024, %1022 : vector<2x32xf32>
    %1026 = arith.mulf %1018, %994 : vector<2x32xf32>
    %1027 = arith.addf %1025, %1026 : vector<2x32xf32>
    %1028 = arith.addf %995, %1027 : vector<2x32xf32>
    %1029 = arith.truncf %1027 : vector<2x32xf32> to vector<2x32xbf16>
    %cst_160 = arith.constant dense<0.000000e+00> : vector<2x128xf32>
    %1030 = tpu.matmul %1029, %1, %cst_160 {dimension_numbers = #tpu.dot_dimension_numbers<[1], [0], [0], [1], [0, 0, 1, 1], [], []>} : vector<2x32xbf16>, vector<32x128xbf16>, vector<2x128xf32> -> vector<2x128xf32>
    %1031 = vector.broadcast %2 : vector<1x128xf32> to vector<2x128xf32>
    %1032 = arith.addf %1030, %1031 : vector<2x128xf32>
    %1033 = vector.extract_strided_slice %1032 {offsets = [0, 0], sizes = [2, 96], strides = [1, 1]} : vector<2x128xf32> to vector<2x96xf32>
    %1034 = vector.extract_strided_slice %1032 {offsets = [0, 96], sizes = [2, 32], strides = [1, 1]} : vector<2x128xf32> to vector<2x32xf32>
    %1035 = vector.extract_strided_slice %688 {offsets = [6, 0], sizes = [2, 32], strides = [1, 1]} : vector<16x32xf32> to vector<2x32xf32>
    %1036 = vector.extract_strided_slice %689 {offsets = [6, 0], sizes = [2, 32], strides = [1, 1]} : vector<16x32xf32> to vector<2x32xf32>
    %1037 = vector.extract_strided_slice %690 {offsets = [6, 0], sizes = [2, 32], strides = [1, 1]} : vector<16x32xf32> to vector<2x32xf32>
    %1038 = vector.extract_strided_slice %1033 {offsets = [0, 0], sizes = [2, 32], strides = [1, 1]} : vector<2x96xf32> to vector<2x32xf32>
    %1039 = arith.addf %1035, %1038 : vector<2x32xf32>
    %1040 = arith.negf %1039 : vector<2x32xf32>
    %1041 = math.exp %1040 : vector<2x32xf32>
    %cst_161 = arith.constant 1.000000e+00 : f32
    %1042 = vector.broadcast %cst_161 : f32 to vector<2x32xf32>
    %1043 = arith.addf %1042, %1041 : vector<2x32xf32>
    %1044 = arith.divf %1042, %1043 : vector<2x32xf32>
    %1045 = vector.extract_strided_slice %1033 {offsets = [0, 32], sizes = [2, 32], strides = [1, 1]} : vector<2x96xf32> to vector<2x32xf32>
    %1046 = arith.addf %1036, %1045 : vector<2x32xf32>
    %1047 = arith.negf %1046 : vector<2x32xf32>
    %1048 = math.exp %1047 : vector<2x32xf32>
    %cst_162 = arith.constant 1.000000e+00 : f32
    %1049 = vector.broadcast %cst_162 : f32 to vector<2x32xf32>
    %1050 = arith.addf %1049, %1048 : vector<2x32xf32>
    %1051 = arith.divf %1049, %1050 : vector<2x32xf32>
    %1052 = vector.extract_strided_slice %1033 {offsets = [0, 64], sizes = [2, 32], strides = [1, 1]} : vector<2x96xf32> to vector<2x32xf32>
    %1053 = arith.mulf %1044, %1052 : vector<2x32xf32>
    %1054 = arith.addf %1037, %1053 : vector<2x32xf32>
    %1055 = math.tanh %1054 : vector<2x32xf32>
    %cst_163 = arith.constant 1.000000e+00 : f32
    %1056 = vector.broadcast %cst_163 : f32 to vector<2x32xf32>
    %1057 = arith.subf %1056, %1051 : vector<2x32xf32>
    %1058 = arith.mulf %1057, %1055 : vector<2x32xf32>
    %1059 = arith.mulf %1051, %1027 : vector<2x32xf32>
    %1060 = arith.addf %1058, %1059 : vector<2x32xf32>
    %1061 = arith.addf %1028, %1060 : vector<2x32xf32>
    %1062 = arith.truncf %1060 : vector<2x32xf32> to vector<2x32xbf16>
    %cst_164 = arith.constant dense<0.000000e+00> : vector<2x128xf32>
    %1063 = tpu.matmul %1062, %1, %cst_164 {dimension_numbers = #tpu.dot_dimension_numbers<[1], [0], [0], [1], [0, 0, 1, 1], [], []>} : vector<2x32xbf16>, vector<32x128xbf16>, vector<2x128xf32> -> vector<2x128xf32>
    %1064 = vector.broadcast %2 : vector<1x128xf32> to vector<2x128xf32>
    %1065 = arith.addf %1063, %1064 : vector<2x128xf32>
    %1066 = vector.extract_strided_slice %1065 {offsets = [0, 0], sizes = [2, 96], strides = [1, 1]} : vector<2x128xf32> to vector<2x96xf32>
    %1067 = vector.extract_strided_slice %1065 {offsets = [0, 96], sizes = [2, 32], strides = [1, 1]} : vector<2x128xf32> to vector<2x32xf32>
    %1068 = vector.extract_strided_slice %688 {offsets = [8, 0], sizes = [2, 32], strides = [1, 1]} : vector<16x32xf32> to vector<2x32xf32>
    %1069 = vector.extract_strided_slice %689 {offsets = [8, 0], sizes = [2, 32], strides = [1, 1]} : vector<16x32xf32> to vector<2x32xf32>
    %1070 = vector.extract_strided_slice %690 {offsets = [8, 0], sizes = [2, 32], strides = [1, 1]} : vector<16x32xf32> to vector<2x32xf32>
    %1071 = vector.extract_strided_slice %1066 {offsets = [0, 0], sizes = [2, 32], strides = [1, 1]} : vector<2x96xf32> to vector<2x32xf32>
    %1072 = arith.addf %1068, %1071 : vector<2x32xf32>
    %1073 = arith.negf %1072 : vector<2x32xf32>
    %1074 = math.exp %1073 : vector<2x32xf32>
    %cst_165 = arith.constant 1.000000e+00 : f32
    %1075 = vector.broadcast %cst_165 : f32 to vector<2x32xf32>
    %1076 = arith.addf %1075, %1074 : vector<2x32xf32>
    %1077 = arith.divf %1075, %1076 : vector<2x32xf32>
    %1078 = vector.extract_strided_slice %1066 {offsets = [0, 32], sizes = [2, 32], strides = [1, 1]} : vector<2x96xf32> to vector<2x32xf32>
    %1079 = arith.addf %1069, %1078 : vector<2x32xf32>
    %1080 = arith.negf %1079 : vector<2x32xf32>
    %1081 = math.exp %1080 : vector<2x32xf32>
    %cst_166 = arith.constant 1.000000e+00 : f32
    %1082 = vector.broadcast %cst_166 : f32 to vector<2x32xf32>
    %1083 = arith.addf %1082, %1081 : vector<2x32xf32>
    %1084 = arith.divf %1082, %1083 : vector<2x32xf32>
    %1085 = vector.extract_strided_slice %1066 {offsets = [0, 64], sizes = [2, 32], strides = [1, 1]} : vector<2x96xf32> to vector<2x32xf32>
    %1086 = arith.mulf %1077, %1085 : vector<2x32xf32>
    %1087 = arith.addf %1070, %1086 : vector<2x32xf32>
    %1088 = math.tanh %1087 : vector<2x32xf32>
    %cst_167 = arith.constant 1.000000e+00 : f32
    %1089 = vector.broadcast %cst_167 : f32 to vector<2x32xf32>
    %1090 = arith.subf %1089, %1084 : vector<2x32xf32>
    %1091 = arith.mulf %1090, %1088 : vector<2x32xf32>
    %1092 = arith.mulf %1084, %1060 : vector<2x32xf32>
    %1093 = arith.addf %1091, %1092 : vector<2x32xf32>
    %1094 = arith.addf %1061, %1093 : vector<2x32xf32>
    %1095 = arith.truncf %1093 : vector<2x32xf32> to vector<2x32xbf16>
    %cst_168 = arith.constant dense<0.000000e+00> : vector<2x128xf32>
    %1096 = tpu.matmul %1095, %1, %cst_168 {dimension_numbers = #tpu.dot_dimension_numbers<[1], [0], [0], [1], [0, 0, 1, 1], [], []>} : vector<2x32xbf16>, vector<32x128xbf16>, vector<2x128xf32> -> vector<2x128xf32>
    %1097 = vector.broadcast %2 : vector<1x128xf32> to vector<2x128xf32>
    %1098 = arith.addf %1096, %1097 : vector<2x128xf32>
    %1099 = vector.extract_strided_slice %1098 {offsets = [0, 0], sizes = [2, 96], strides = [1, 1]} : vector<2x128xf32> to vector<2x96xf32>
    %1100 = vector.extract_strided_slice %1098 {offsets = [0, 96], sizes = [2, 32], strides = [1, 1]} : vector<2x128xf32> to vector<2x32xf32>
    %1101 = vector.extract_strided_slice %688 {offsets = [10, 0], sizes = [2, 32], strides = [1, 1]} : vector<16x32xf32> to vector<2x32xf32>
    %1102 = vector.extract_strided_slice %689 {offsets = [10, 0], sizes = [2, 32], strides = [1, 1]} : vector<16x32xf32> to vector<2x32xf32>
    %1103 = vector.extract_strided_slice %690 {offsets = [10, 0], sizes = [2, 32], strides = [1, 1]} : vector<16x32xf32> to vector<2x32xf32>
    %1104 = vector.extract_strided_slice %1099 {offsets = [0, 0], sizes = [2, 32], strides = [1, 1]} : vector<2x96xf32> to vector<2x32xf32>
    %1105 = arith.addf %1101, %1104 : vector<2x32xf32>
    %1106 = arith.negf %1105 : vector<2x32xf32>
    %1107 = math.exp %1106 : vector<2x32xf32>
    %cst_169 = arith.constant 1.000000e+00 : f32
    %1108 = vector.broadcast %cst_169 : f32 to vector<2x32xf32>
    %1109 = arith.addf %1108, %1107 : vector<2x32xf32>
    %1110 = arith.divf %1108, %1109 : vector<2x32xf32>
    %1111 = vector.extract_strided_slice %1099 {offsets = [0, 32], sizes = [2, 32], strides = [1, 1]} : vector<2x96xf32> to vector<2x32xf32>
    %1112 = arith.addf %1102, %1111 : vector<2x32xf32>
    %1113 = arith.negf %1112 : vector<2x32xf32>
    %1114 = math.exp %1113 : vector<2x32xf32>
    %cst_170 = arith.constant 1.000000e+00 : f32
    %1115 = vector.broadcast %cst_170 : f32 to vector<2x32xf32>
    %1116 = arith.addf %1115, %1114 : vector<2x32xf32>
    %1117 = arith.divf %1115, %1116 : vector<2x32xf32>
    %1118 = vector.extract_strided_slice %1099 {offsets = [0, 64], sizes = [2, 32], strides = [1, 1]} : vector<2x96xf32> to vector<2x32xf32>
    %1119 = arith.mulf %1110, %1118 : vector<2x32xf32>
    %1120 = arith.addf %1103, %1119 : vector<2x32xf32>
    %1121 = math.tanh %1120 : vector<2x32xf32>
    %cst_171 = arith.constant 1.000000e+00 : f32
    %1122 = vector.broadcast %cst_171 : f32 to vector<2x32xf32>
    %1123 = arith.subf %1122, %1117 : vector<2x32xf32>
    %1124 = arith.mulf %1123, %1121 : vector<2x32xf32>
    %1125 = arith.mulf %1117, %1093 : vector<2x32xf32>
    %1126 = arith.addf %1124, %1125 : vector<2x32xf32>
    %1127 = arith.addf %1094, %1126 : vector<2x32xf32>
    %1128 = arith.truncf %1126 : vector<2x32xf32> to vector<2x32xbf16>
    %cst_172 = arith.constant dense<0.000000e+00> : vector<2x128xf32>
    %1129 = tpu.matmul %1128, %1, %cst_172 {dimension_numbers = #tpu.dot_dimension_numbers<[1], [0], [0], [1], [0, 0, 1, 1], [], []>} : vector<2x32xbf16>, vector<32x128xbf16>, vector<2x128xf32> -> vector<2x128xf32>
    %1130 = vector.broadcast %2 : vector<1x128xf32> to vector<2x128xf32>
    %1131 = arith.addf %1129, %1130 : vector<2x128xf32>
    %1132 = vector.extract_strided_slice %1131 {offsets = [0, 0], sizes = [2, 96], strides = [1, 1]} : vector<2x128xf32> to vector<2x96xf32>
    %1133 = vector.extract_strided_slice %1131 {offsets = [0, 96], sizes = [2, 32], strides = [1, 1]} : vector<2x128xf32> to vector<2x32xf32>
    %1134 = vector.extract_strided_slice %688 {offsets = [12, 0], sizes = [2, 32], strides = [1, 1]} : vector<16x32xf32> to vector<2x32xf32>
    %1135 = vector.extract_strided_slice %689 {offsets = [12, 0], sizes = [2, 32], strides = [1, 1]} : vector<16x32xf32> to vector<2x32xf32>
    %1136 = vector.extract_strided_slice %690 {offsets = [12, 0], sizes = [2, 32], strides = [1, 1]} : vector<16x32xf32> to vector<2x32xf32>
    %1137 = vector.extract_strided_slice %1132 {offsets = [0, 0], sizes = [2, 32], strides = [1, 1]} : vector<2x96xf32> to vector<2x32xf32>
    %1138 = arith.addf %1134, %1137 : vector<2x32xf32>
    %1139 = arith.negf %1138 : vector<2x32xf32>
    %1140 = math.exp %1139 : vector<2x32xf32>
    %cst_173 = arith.constant 1.000000e+00 : f32
    %1141 = vector.broadcast %cst_173 : f32 to vector<2x32xf32>
    %1142 = arith.addf %1141, %1140 : vector<2x32xf32>
    %1143 = arith.divf %1141, %1142 : vector<2x32xf32>
    %1144 = vector.extract_strided_slice %1132 {offsets = [0, 32], sizes = [2, 32], strides = [1, 1]} : vector<2x96xf32> to vector<2x32xf32>
    %1145 = arith.addf %1135, %1144 : vector<2x32xf32>
    %1146 = arith.negf %1145 : vector<2x32xf32>
    %1147 = math.exp %1146 : vector<2x32xf32>
    %cst_174 = arith.constant 1.000000e+00 : f32
    %1148 = vector.broadcast %cst_174 : f32 to vector<2x32xf32>
    %1149 = arith.addf %1148, %1147 : vector<2x32xf32>
    %1150 = arith.divf %1148, %1149 : vector<2x32xf32>
    %1151 = vector.extract_strided_slice %1132 {offsets = [0, 64], sizes = [2, 32], strides = [1, 1]} : vector<2x96xf32> to vector<2x32xf32>
    %1152 = arith.mulf %1143, %1151 : vector<2x32xf32>
    %1153 = arith.addf %1136, %1152 : vector<2x32xf32>
    %1154 = math.tanh %1153 : vector<2x32xf32>
    %cst_175 = arith.constant 1.000000e+00 : f32
    %1155 = vector.broadcast %cst_175 : f32 to vector<2x32xf32>
    %1156 = arith.subf %1155, %1150 : vector<2x32xf32>
    %1157 = arith.mulf %1156, %1154 : vector<2x32xf32>
    %1158 = arith.mulf %1150, %1126 : vector<2x32xf32>
    %1159 = arith.addf %1157, %1158 : vector<2x32xf32>
    %1160 = arith.addf %1127, %1159 : vector<2x32xf32>
    %1161 = arith.truncf %1159 : vector<2x32xf32> to vector<2x32xbf16>
    %cst_176 = arith.constant dense<0.000000e+00> : vector<2x128xf32>
    %1162 = tpu.matmul %1161, %1, %cst_176 {dimension_numbers = #tpu.dot_dimension_numbers<[1], [0], [0], [1], [0, 0, 1, 1], [], []>} : vector<2x32xbf16>, vector<32x128xbf16>, vector<2x128xf32> -> vector<2x128xf32>
    %1163 = vector.broadcast %2 : vector<1x128xf32> to vector<2x128xf32>
    %1164 = arith.addf %1162, %1163 : vector<2x128xf32>
    %1165 = vector.extract_strided_slice %1164 {offsets = [0, 0], sizes = [2, 96], strides = [1, 1]} : vector<2x128xf32> to vector<2x96xf32>
    %1166 = vector.extract_strided_slice %1164 {offsets = [0, 96], sizes = [2, 32], strides = [1, 1]} : vector<2x128xf32> to vector<2x32xf32>
    %1167 = vector.extract_strided_slice %688 {offsets = [14, 0], sizes = [2, 32], strides = [1, 1]} : vector<16x32xf32> to vector<2x32xf32>
    %1168 = vector.extract_strided_slice %689 {offsets = [14, 0], sizes = [2, 32], strides = [1, 1]} : vector<16x32xf32> to vector<2x32xf32>
    %1169 = vector.extract_strided_slice %690 {offsets = [14, 0], sizes = [2, 32], strides = [1, 1]} : vector<16x32xf32> to vector<2x32xf32>
    %1170 = vector.extract_strided_slice %1165 {offsets = [0, 0], sizes = [2, 32], strides = [1, 1]} : vector<2x96xf32> to vector<2x32xf32>
    %1171 = arith.addf %1167, %1170 : vector<2x32xf32>
    %1172 = arith.negf %1171 : vector<2x32xf32>
    %1173 = math.exp %1172 : vector<2x32xf32>
    %cst_177 = arith.constant 1.000000e+00 : f32
    %1174 = vector.broadcast %cst_177 : f32 to vector<2x32xf32>
    %1175 = arith.addf %1174, %1173 : vector<2x32xf32>
    %1176 = arith.divf %1174, %1175 : vector<2x32xf32>
    %1177 = vector.extract_strided_slice %1165 {offsets = [0, 32], sizes = [2, 32], strides = [1, 1]} : vector<2x96xf32> to vector<2x32xf32>
    %1178 = arith.addf %1168, %1177 : vector<2x32xf32>
    %1179 = arith.negf %1178 : vector<2x32xf32>
    %1180 = math.exp %1179 : vector<2x32xf32>
    %cst_178 = arith.constant 1.000000e+00 : f32
    %1181 = vector.broadcast %cst_178 : f32 to vector<2x32xf32>
    %1182 = arith.addf %1181, %1180 : vector<2x32xf32>
    %1183 = arith.divf %1181, %1182 : vector<2x32xf32>
    %1184 = vector.extract_strided_slice %1165 {offsets = [0, 64], sizes = [2, 32], strides = [1, 1]} : vector<2x96xf32> to vector<2x32xf32>
    %1185 = arith.mulf %1176, %1184 : vector<2x32xf32>
    %1186 = arith.addf %1169, %1185 : vector<2x32xf32>
    %1187 = math.tanh %1186 : vector<2x32xf32>
    %cst_179 = arith.constant 1.000000e+00 : f32
    %1188 = vector.broadcast %cst_179 : f32 to vector<2x32xf32>
    %1189 = arith.subf %1188, %1183 : vector<2x32xf32>
    %1190 = arith.mulf %1189, %1187 : vector<2x32xf32>
    %1191 = arith.mulf %1183, %1159 : vector<2x32xf32>
    %1192 = arith.addf %1190, %1191 : vector<2x32xf32>
    %1193 = arith.addf %1160, %1192 : vector<2x32xf32>
    %1194 = arith.truncf %1192 : vector<2x32xf32> to vector<2x32xbf16>
    %cst_180 = arith.constant dense<0.000000e+00> : vector<2x128xf32>
    %1195 = tpu.matmul %1194, %1, %cst_180 {dimension_numbers = #tpu.dot_dimension_numbers<[1], [0], [0], [1], [0, 0, 1, 1], [], []>} : vector<2x32xbf16>, vector<32x128xbf16>, vector<2x128xf32> -> vector<2x128xf32>
    %1196 = vector.broadcast %2 : vector<1x128xf32> to vector<2x128xf32>
    %1197 = arith.addf %1195, %1196 : vector<2x128xf32>
    %1198 = vector.extract_strided_slice %1197 {offsets = [0, 96], sizes = [2, 32], strides = [1, 1]} : vector<2x128xf32> to vector<2x32xf32>
    %1199 = vector.extract_strided_slice %968 {offsets = [0, 0], sizes = [1, 32], strides = [1, 1]} : vector<2x32xf32> to vector<1x32xf32>
    %1200 = vector.extract_strided_slice %1001 {offsets = [0, 0], sizes = [1, 32], strides = [1, 1]} : vector<2x32xf32> to vector<1x32xf32>
    %1201 = vector.extract_strided_slice %1034 {offsets = [0, 0], sizes = [1, 32], strides = [1, 1]} : vector<2x32xf32> to vector<1x32xf32>
    %1202 = vector.extract_strided_slice %1067 {offsets = [0, 0], sizes = [1, 32], strides = [1, 1]} : vector<2x32xf32> to vector<1x32xf32>
    %1203 = vector.extract_strided_slice %1100 {offsets = [0, 0], sizes = [1, 32], strides = [1, 1]} : vector<2x32xf32> to vector<1x32xf32>
    %1204 = vector.extract_strided_slice %1133 {offsets = [0, 0], sizes = [1, 32], strides = [1, 1]} : vector<2x32xf32> to vector<1x32xf32>
    %1205 = vector.extract_strided_slice %1166 {offsets = [0, 0], sizes = [1, 32], strides = [1, 1]} : vector<2x32xf32> to vector<1x32xf32>
    %1206 = vector.extract_strided_slice %1198 {offsets = [0, 0], sizes = [1, 32], strides = [1, 1]} : vector<2x32xf32> to vector<1x32xf32>
    %1207 = vector.extract_strided_slice %968 {offsets = [1, 0], sizes = [1, 32], strides = [1, 1]} : vector<2x32xf32> to vector<1x32xf32>
    %1208 = vector.extract_strided_slice %1001 {offsets = [1, 0], sizes = [1, 32], strides = [1, 1]} : vector<2x32xf32> to vector<1x32xf32>
    %1209 = vector.extract_strided_slice %1034 {offsets = [1, 0], sizes = [1, 32], strides = [1, 1]} : vector<2x32xf32> to vector<1x32xf32>
    %1210 = vector.extract_strided_slice %1067 {offsets = [1, 0], sizes = [1, 32], strides = [1, 1]} : vector<2x32xf32> to vector<1x32xf32>
    %1211 = vector.extract_strided_slice %1100 {offsets = [1, 0], sizes = [1, 32], strides = [1, 1]} : vector<2x32xf32> to vector<1x32xf32>
    %1212 = vector.extract_strided_slice %1133 {offsets = [1, 0], sizes = [1, 32], strides = [1, 1]} : vector<2x32xf32> to vector<1x32xf32>
    %1213 = vector.extract_strided_slice %1166 {offsets = [1, 0], sizes = [1, 32], strides = [1, 1]} : vector<2x32xf32> to vector<1x32xf32>
    %1214 = vector.extract_strided_slice %1198 {offsets = [1, 0], sizes = [1, 32], strides = [1, 1]} : vector<2x32xf32> to vector<1x32xf32>
    %1215 = tpu.concatenate %1199, %1200, %1201, %1202, %1203, %1204, %1205, %1206, %1207, %1208, %1209, %1210, %1211, %1212, %1213, %1214 in 0 : vector<1x32xf32>, vector<1x32xf32>, vector<1x32xf32>, vector<1x32xf32>, vector<1x32xf32>, vector<1x32xf32>, vector<1x32xf32>, vector<1x32xf32>, vector<1x32xf32>, vector<1x32xf32>, vector<1x32xf32>, vector<1x32xf32>, vector<1x32xf32>, vector<1x32xf32>, vector<1x32xf32>, vector<1x32xf32> -> vector<16x32xf32>
    %1216 = vector.shape_cast %1215 : vector<16x32xf32> to vector<2x8x32xf32>
    %c0_181 = arith.constant 0 : index
    %c0_182 = arith.constant 0 : index
    %c0_183 = arith.constant 0 : index
    %1217 = vector.load %arg4[%c0_181, %c0_182, %c0_183] : memref<2x8x32xf32, #tpu.memory_space<vmem>>, vector<2x8x32xf32>
    tpu.vector_store %arg4[%c0_181, %c0_182, %c0_183], %1216 {strides = array<i32>} : memref<2x8x32xf32, #tpu.memory_space<vmem>>, vector<2x8x32xf32>,
    %1218 = tpu.concatenate %659, %1193, %1193 in 0 : vector<2x32xf32>, vector<2x32xf32>, vector<2x32xf32> -> vector<6x32xf32>
    %cst_184 = arith.constant 1.250000e-01 : f32
    %1219 = vector.broadcast %cst_184 : f32 to vector<6x32xf32>
    %1220 = arith.mulf %1218, %1219 : vector<6x32xf32>
    %1221 = arith.truncf %1220 : vector<6x32xf32> to vector<6x32xbf16>
    %1222 = tpu.concatenate %33, %26, %33 in 0 : vector<2x2xbf16>, vector<2x2xbf16>, vector<2x2xbf16> -> vector<6x2xbf16>
    %cst_185 = arith.constant dense<0.000000e+00> : vector<6x16xf32>
    %1223 = tpu.matmul %1221, %11, %cst_185 {dimension_numbers = #tpu.dot_dimension_numbers<[1], [0], [0], [1], [0, 0, 1, 1], [], []>} : vector<6x32xbf16>, vector<32x16xbf16>, vector<6x16xf32> -> vector<6x16xf32>
    %cst_186 = arith.constant dense<0.000000e+00> : vector<6x16xf32>
    %1224 = tpu.matmul %1222, %4, %cst_186 {dimension_numbers = #tpu.dot_dimension_numbers<[1], [0], [0], [1], [0, 0, 1, 1], [], []>} : vector<6x2xbf16>, vector<2x16xbf16>, vector<6x16xf32> -> vector<6x16xf32>
    %1225 = arith.addf %1223, %1224 : vector<6x16xf32>
    %1226 = math.tanh %1225 : vector<6x16xf32>
    %1227 = arith.truncf %1226 : vector<6x16xf32> to vector<6x16xbf16>
    %cst_187 = arith.constant dense<0.000000e+00> : vector<6x1xf32>
    %1228 = tpu.matmul %1227, %13, %cst_187 {dimension_numbers = #tpu.dot_dimension_numbers<[1], [0], [0], [1], [0, 0, 1, 1], [], []>} : vector<6x16xbf16>, vector<16x1xbf16>, vector<6x1xf32> -> vector<6x1xf32>
    %1229 = vector.broadcast %5 : vector<1x1xf32> to vector<6x1xf32>
    %1230 = arith.addf %1228, %1229 : vector<6x1xf32>
    %c0_188 = arith.constant 0 : index
    %c0_189 = arith.constant 0 : index
    %1231 = vector.load %arg3[%c0_188, %c0_189] : memref<6x1xf32, #tpu.memory_space<vmem>>, vector<6x1xf32>
    tpu.vector_store %arg3[%c0_188, %c0_189], %1230 {strides = array<i32>} : memref<6x1xf32, #tpu.memory_space<vmem>>, vector<6x1xf32>,
    return
  }
}

</mosaic_0001>

<llo_original>
// kernel: cptg_forward.1
$region0: #{cptg_forward.1}
  #allocation0 [shape = 'u32[]', space=smem, size = 0x4, offset = 0x4, fixed_abs, tag = 'smem constant byte address 0x4 - core index']
  #allocation1 [shape = 'u32[72,128]{1,0:T(1,128)}', space=vmem, size = 0x9000, scoped, tag = 'internal scratch']
  %s0 = inlined_call_operand.hbm [shape: f32[184,128], index: 0, kind: input, shape index: {}]
  %s1 = inlined_call_operand.vmem [shape: s32[16,1], index: 1, kind: input, shape index: {}]
  %s2 = inlined_call_operand.vmem [shape: s32[2,1], index: 2, kind: input, shape index: {}]
  %s3 = inlined_call_operand.vmem [shape: f32[6,1], index: 3, kind: output, shape index: {0}]
  %s4 = inlined_call_operand.hbm [shape: f32[2,8,32], index: 4, kind: output, shape index: {1}]
  %5 = xla_tuple %s3, %s4
  %s6 = sld [smem:[#allocation0]]
  $region34: #{cptg_forward.1} parent=0
    _
  %s8 = ssub.s32 1, %s6
  %s9 = scalar_select 0, %s8, %s6
  $region1: #{cptg_forward.1} parent=0
    #allocation2 [shape = 'u8[94208]{0}', space=vmem, size = 0x17000, scoped, tag = 'input window, operand 0, single buffered']
    #allocation3 [shape = 's32[1]{0}', space=sflag, size = 0x4, scoped, tag = 'scoped memory for cptg_forward.1']
    #allocation4 [shape = 's32[1]{0}', space=sflag, size = 0x4, scoped, tag = 'scoped memory for cptg_forward.1']
    #allocation5 [shape = 'u8[8192]{0}', space=vmem, size = 0x2000, scoped, tag = 'output window, operand 1, single buffered']
    %10 = vsyncpa [#allocation3], 0
    %11 = vsyncpa [#allocation4], 0
    // Predicated region
    $region2: #{cptg_forward.1} parent=1 // pred_check
      _
    $region3: #{cptg_forward.1} parent=1 // pred_check_branch
      %13 = sbr.rel (0) target = $region5
    $region4: #{cptg_forward.1} parent=1 // pred_region
      %15 = vsyncadd [#allocation3], 0
      %s16 = sshll.u32 %s0, 4
      %s17 = int_to_ptr.hbm [resolvable:$true] %s16
      %s18 = sshll.u32 [#allocation2], 4
      %s19 = int_to_ptr.vmem [resolvable:$true] %s18
      %24 = dma.hbm_to_vmem [thread:$0]  %s17, 2944, %s19, [#allocation3], 128, 128, 8
    $region5: #{cptg_forward.1} parent=1 // pred_fallthru
      _
    // Predicated region
    $region6: #{cptg_forward.1} parent=1 // pred_check
      _
    $region7: #{cptg_forward.1} parent=1 // pred_check_branch
      %26 = sbr.rel (0) target = $region9
    $region8: #{cptg_forward.1} parent=1 // pred_region
      _
    $region9: #{cptg_forward.1} parent=1 // pred_fallthru
      _
    // Predicated region
    $region10: #{cptg_forward.1} parent=1 // pred_check
      _
    $region11: #{cptg_forward.1} parent=1 // pred_check_branch
      %28 = sbr.rel (0) target = $region13
    $region12: #{cptg_forward.1} parent=1 // pred_region
      _
    $region13: #{cptg_forward.1} parent=1 // pred_fallthru
      _
    // Predicated region
    $region14: #{cptg_forward.1} parent=1 // pred_check
      _
    $region15: #{cptg_forward.1} parent=1 // pred_check_branch
      %30 = sbr.rel (0) target = $region17
    $region16: #{cptg_forward.1} parent=1 // pred_region
      %32 = dma.done [#allocation3], 2944
    $region17: #{cptg_forward.1} parent=1 // pred_fallthru
      _
    %v34 = vld [vmem:[#allocation2] sm:$0xff]
    %v35 = vld [vmem:[#allocation2 + $0x8] sm:$0xff]
    %v36 = vld [vmem:[#allocation2 + $0x10] sm:$0xff]
    %v37 = vld [vmem:[#allocation2 + $0x18] sm:$0xff]
    %v38 = vpack.c.bf16 %v35, %v34
    %v39 = vpack.c.bf16 %v37, %v36
    %v40 = vld [vmem:[#allocation2 + $0x20] sm:$0x1]
    %v41 = vld [vmem:[#allocation2 + $0x21] sm:$0x3]
    %v42 = vpack.c.bf16 %v41, %v41
    %v43 = vld [vmem:[#allocation2 + $0x23] sm:$0x1]
    %v44 = vld [vmem:[#allocation2 + $0x24] sm:$0x3]
    %v45 = vpack.c.bf16 %v44, %v44
    %v46 = vld [vmem:[#allocation2 + $0x26] sm:$0x1]
    %v47 = vld [vmem:[#allocation2 + $0x27] sm:$0x1]
    %v48 = vld [vmem:[#allocation2 + $0x28] sm:$0xff]
    %v49 = vld [vmem:[#allocation2 + $0x30] sm:$0xff]
    %v50 = vld [vmem:[#allocation2 + $0x38] sm:$0xff]
    %v51 = vld [vmem:[#allocation2 + $0x40] sm:$0xff]
    %v52 = vpack.c.bf16 %v49, %v48
    %v53 = vpack.c.bf16 %v51, %v50
    %v54 = vld [vmem:[#allocation2 + $0x48] sm:$0xff]
    %v55 = vld [vmem:[#allocation2 + $0x50] sm:$0xff]
    %v56 = vpack.c.bf16 %v55, %v54
    %v57 = vld [vmem:[#allocation2 + $0x58] sm:$0xff]
    %v58 = vld [vmem:[#allocation2 + $0x60] sm:$0xff]
    %v59 = vld [vmem:[#allocation2 + $0x68] sm:$0xff]
    %v60 = vld [vmem:[#allocation2 + $0x70] sm:$0xff]
    %v61 = vpack.c.bf16 %v58, %v57
    %v62 = vpack.c.bf16 %v60, %v59
    %v63 = vld [vmem:[#allocation2 + $0x78] sm:$0xff]
    %v64 = vld [vmem:[#allocation2 + $0x80] sm:$0xff]
    %v65 = vld [vmem:[#allocation2 + $0x88] sm:$0xff]
    %v66 = vld [vmem:[#allocation2 + $0x90] sm:$0xff]
    %v67 = vpack.c.bf16 %v64, %v63
    %v68 = vpack.c.bf16 %v66, %v65
    %v69 = vld [vmem:[#allocation2 + $0x98] sm:$0xff]
    %v70 = vld [vmem:[#allocation2 + $0xa0] sm:$0xff]
    %v71 = vld [vmem:[#allocation2 + $0xa8] sm:$0xff]
    %v72 = vld [vmem:[#allocation2 + $0xb0] sm:$0xff]
    %v73 = vpack.c.bf16 %v70, %v69
    %v74 = vpack.c.bf16 %v72, %v71
    %v75 = vld [vmem:[%s2] sm:$0x3]
    %v76 = vlaneseq
    %v77 = vand.u32 %v76, 127
    %78 = vset.pattern.permute.xlu0 0
    %79 = vperm.xlu0 %78, %v75
    %v80 = vpop.permute.xlu0 %79
    %vm81 = vcmp.eq.s32.totalorder %v77, %v80
    %v82 = vsel %vm81, 1, 0
    %v83 = vcvt.s32.f32 %v82
    %v84 = vpack.c.bf16 %v83, %v83
    %v85 = vsub.s32 1, %v75
    %86 = vset.pattern.permute.xlu0 0
    %87 = vperm.xlu0 %86, %v85
    %v88 = vpop.permute.xlu0 %87
    %vm89 = vcmp.eq.s32.totalorder %v77, %v88
    %v90 = vsel %vm89, 1, 0
    %v91 = vcvt.s32.f32 %v90
    %v92 = vpack.c.bf16 %v91, %v91
    %vm93 = vcmask 15360
    %v95 = vsel %vm93, %v84, 0
    %vm97 = vcmask 1040384
    %v99 = vsel %vm97, %v45, 0
    %101 = vmatpush.bf16.msra.mxu0 0
    %102 = vmatpush.bf16.msra.mxu0 0
    %103 = vmatpush.bf16.msra.mxu0 0
    %104 = vmatpush.bf16.msra.mxu0 0
    %105 = vmatpush.bf16.msra.mxu0 0
    %106 = vmatpush.bf16.msra.mxu0 0
    %107 = vmatpush.bf16.msra.mxu0 0
    %108 = vmatpush.bf16.msra.mxu0 %v99
    %109 = vmatmul.bf16.gmra.mxu0 %v95
    %v110 = vpop.f32.mrf.mxu0
    %v111 = vadd.f32 0.0, %v110
    %v112 = vpop.f32.mrf.mxu0
    %113 = vdwg.mxu0
    %v114 = vld [vmem:[%s1] sm:$0xff]
    %v115 = vld [vmem:[%s1 + $0x8] sm:$0xff]
    %116 = vset.pattern.permute.xlu0 0
    %117 = vperm.xlu0 %116, %v114
    %v118 = vpop.permute.xlu0 %117
    %119 = vset.pattern.permute.xlu0 0
    %120 = vperm.xlu0 %119, %v115
    %v121 = vpop.permute.xlu0 %120
    %vm122 = vcmp.eq.s32.totalorder %v77, %v118
    %vm123 = vcmp.eq.s32.totalorder %v77, %v121
    %v124 = vsel %vm122, 1, 0
    %v125 = vsel %vm123, 1, 0
    %v126 = vcvt.s32.f32 %v124
    %v127 = vcvt.s32.f32 %v125
    %v128 = vpack.c.bf16 %v127, %v126
    %v129 = vperm.slane %v46, 0
    %vm130 = vcmask 261120
    %v132 = vsel %vm130, %v128, 0
    %134 = vmatpush.bf16.msra.mxu0 0
    %135 = vmatpush.bf16.msra.mxu0 0
    %136 = vmatpush.bf16.msra.mxu0 0
    %137 = vmatpush.bf16.msra.mxu0 0
    %138 = vmatpush.bf16.msra.mxu0 0
    %139 = vmatpush.bf16.msra.mxu0 0
    %140 = vmatpush.bf16.msra.mxu0 %v62
    %141 = vmatpush.bf16.msra.mxu0 %v61
    %142 = vmatmul.bf16.gmra.mxu0 %v132
    %v143 = vpop.f32.mrf.mxu0
    %v144 = vadd.f32 %v129, %v143
    %v145 = vpop.f32.mrf.mxu0
    %v146 = vadd.f32 %v129, %v145
    %147 = vdwg.mxu0
    %v148 = vperm.slane %v47, 0
    %v149 = vadd.f32 %v144, %v148
    %v150 = vxor.u32 %v149, 2147483648
    %v151 = vmul.f32 %v150, 1.442695
    %v152 = vpow.pop %v151
    %v153 = vadd.f32 %v152, 1.0
    %v154 = vrcp.pop %v153
    %v155 = vmul.f32 %v153, %v154
    %v156 = vsub.f32 1.0, %v155
    %v157 = vmul.f32 %v154, %v156
    %v158 = vadd.f32 %v154, %v157
    %vm159 = vweird.f32 %v153
    %vm160 = vweird.f32 %v154
    %vm161 = vmor %vm159, %vm160
    %v162 = vsel %vm161, %v154, %v158
    %v163 = vand.u32 2147483647, %v153
    %vm164 = vcmp.eq.f32.partialorder %v163, 8.507059e+37
    %v165 = vand.u32 %v153, 2147483648
    %v166 = vor.u32 1.1754944e-38, %v165
    %v167 = vsel %vm164, %v166, %v162
    %v168 = vmul.f32 1.0, %v167
    %170 = vrot.lane.b32.xlu0 %v148, 64
    %v171 = vpop.permute.xlu0 %170
    %v173 = vmul.f32 %v168, %v171
    %175 = vrot.lane.b32.xlu0 %v173, 64
    %v176 = vpop.permute.xlu0 %175
    %v178 = vadd.f32 %v144, %v176
    %v179 = vtanh.pop %v178
    %v180 = vsub.f32 1.0, %v168
    %182 = vrot.lane.b32.xlu0 %v179, 96
    %v183 = vpop.permute.xlu0 %182
    %v185 = vmul.f32 %v180, %v183
    %v186 = vmul.f32 %v168, 0.0
    %v187 = vadd.f32 %v185, %v186
    %v188 = vpack.c.bf16 %v187, %v187
    %190 = vrot.lane.b32.xlu0 %v188, 96
    %v191 = vpop.permute.xlu0 %190
    %v193 = vsel %vm130, %v191, 0
    %195 = vmatpush.bf16.msra.mxu0 0
    %196 = vmatpush.bf16.msra.mxu0 0
    %197 = vmatpush.bf16.msra.mxu0 0
    %198 = vmatpush.bf16.msra.mxu0 0
    %199 = vmatpush.bf16.msra.mxu0 0
    %200 = vmatpush.bf16.msra.mxu0 0
    %201 = vmatpush.bf16.msra.mxu0 %v74
    %202 = vmatpush.bf16.msra.mxu0 %v73
    %203 = vmatmul.bf16.gmra.mxu0 %v193
    %v204 = vpop.f32.mrf.mxu0
    %v205 = vadd.f32 %v148, %v204
    %v206 = vpop.f32.mrf.mxu0
    %207 = vdwg.mxu0
    %v209 = vrot.slane %v205, 6
    %v211 = vadd.f32 %v144, %v209
    %v212 = vxor.u32 %v211, 2147483648
    %v213 = vmul.f32 %v212, 1.442695
    %v214 = vpow.pop %v213
    %v215 = vadd.f32 %v214, 1.0
    %v216 = vrcp.pop %v215
    %v217 = vmul.f32 %v215, %v216
    %v218 = vsub.f32 1.0, %v217
    %v219 = vmul.f32 %v216, %v218
    %v220 = vadd.f32 %v216, %v219
    %vm221 = vweird.f32 %v215
    %vm222 = vweird.f32 %v216
    %vm223 = vmor %vm221, %vm222
    %v224 = vsel %vm223, %v216, %v220
    %v225 = vand.u32 2147483647, %v215
    %vm226 = vcmp.eq.f32.partialorder %v225, 8.507059e+37
    %v227 = vand.u32 %v215, 2147483648
    %v228 = vor.u32 1.1754944e-38, %v227
    %v229 = vsel %vm226, %v228, %v224
    %v230 = vmul.f32 1.0, %v229
    %231 = vrot.lane.b32.xlu0 %v209, 64
    %v232 = vpop.permute.xlu0 %231
    %v234 = vmul.f32 %v230, %v232
    %236 = vrot.lane.b32.xlu0 %v234, 64
    %v237 = vpop.permute.xlu0 %236
    %v239 = vadd.f32 %v144, %v237
    %v240 = vtanh.pop %v239
    %v241 = vsub.f32 1.0, %v230
    %243 = vrot.lane.b32.xlu0 %v240, 96
    %v244 = vpop.permute.xlu0 %243
    %v246 = vmul.f32 %v241, %v244
    %v248 = vrot.slane %v187, 6
    %v250 = vmul.f32 %v230, %v248
    %v251 = vadd.f32 %v246, %v250
    %v252 = vpack.c.bf16 %v251, %v251
    %v254 = vrot.slane %v252, 1
    %255 = vrot.lane.b32.xlu0 %v254, 96
    %v256 = vpop.permute.xlu0 %255
    %v258 = vsel %vm130, %v256, 0
    %260 = vmatpush.bf16.msra.mxu0 0
    %261 = vmatpush.bf16.msra.mxu0 0
    %262 = vmatpush.bf16.msra.mxu0 0
    %263 = vmatpush.bf16.msra.mxu0 0
    %264 = vmatpush.bf16.msra.mxu0 0
    %265 = vmatpush.bf16.msra.mxu0 0
    %266 = vmatpush.bf16.msra.mxu0 %v74
    %267 = vmatpush.bf16.msra.mxu0 %v73
    %268 = vmatmul.bf16.gmra.mxu0 %v258
    %v269 = vpop.f32.mrf.mxu0
    %v270 = vadd.f32 %v148, %v269
    %v271 = vpop.f32.mrf.mxu0
    %272 = vdwg.mxu0
    %v274 = vrot.slane %v270, 4
    %v276 = vadd.f32 %v144, %v274
    %v277 = vxor.u32 %v276, 2147483648
    %v278 = vmul.f32 %v277, 1.442695
    %v279 = vpow.pop %v278
    %v280 = vadd.f32 %v279, 1.0
    %v281 = vrcp.pop %v280
    %v282 = vmul.f32 %v280, %v281
    %v283 = vsub.f32 1.0, %v282
    %v284 = vmul.f32 %v281, %v283
    %v285 = vadd.f32 %v281, %v284
    %vm286 = vweird.f32 %v280
    %vm287 = vweird.f32 %v281
    %vm288 = vmor %vm286, %vm287
    %v289 = vsel %vm288, %v281, %v285
    %v290 = vand.u32 2147483647, %v280
    %vm291 = vcmp.eq.f32.partialorder %v290, 8.507059e+37
    %v292 = vand.u32 %v280, 2147483648
    %v293 = vor.u32 1.1754944e-38, %v292
    %v294 = vsel %vm291, %v293, %v289
    %v295 = vmul.f32 1.0, %v294
    %296 = vrot.lane.b32.xlu0 %v274, 64
    %v297 = vpop.permute.xlu0 %296
    %v299 = vmul.f32 %v295, %v297
    %301 = vrot.lane.b32.xlu0 %v299, 64
    %v302 = vpop.permute.xlu0 %301
    %v304 = vadd.f32 %v144, %v302
    %v305 = vtanh.pop %v304
    %v306 = vsub.f32 1.0, %v295
    %308 = vrot.lane.b32.xlu0 %v305, 96
    %v309 = vpop.permute.xlu0 %308
    %v311 = vmul.f32 %v306, %v309
    %v313 = vrot.slane %v251, 6
    %v315 = vmul.f32 %v295, %v313
    %v316 = vadd.f32 %v311, %v315
    %v317 = vpack.c.bf16 %v316, %v316
    %v319 = vrot.slane %v317, 2
    %320 = vrot.lane.b32.xlu0 %v319, 96
    %v321 = vpop.permute.xlu0 %320
    %v323 = vsel %vm130, %v321, 0
    %325 = vmatpush.bf16.msra.mxu0 0
    %326 = vmatpush.bf16.msra.mxu0 0
    %327 = vmatpush.bf16.msra.mxu0 0
    %328 = vmatpush.bf16.msra.mxu0 0
    %329 = vmatpush.bf16.msra.mxu0 0
    %330 = vmatpush.bf16.msra.mxu0 0
    %331 = vmatpush.bf16.msra.mxu0 %v74
    %332 = vmatpush.bf16.msra.mxu0 %v73
    %333 = vmatmul.bf16.gmra.mxu0 %v323
    %v334 = vpop.f32.mrf.mxu0
    %v335 = vadd.f32 %v148, %v334
    %v336 = vpop.f32.mrf.mxu0
    %337 = vdwg.mxu0
    %v339 = vrot.slane %v335, 2
    %v341 = vadd.f32 %v144, %v339
    %v342 = vxor.u32 %v341, 2147483648
    %v343 = vmul.f32 %v342, 1.442695
    %v344 = vpow.pop %v343
    %v345 = vadd.f32 %v344, 1.0
    %v346 = vrcp.pop %v345
    %v347 = vmul.f32 %v345, %v346
    %v348 = vsub.f32 1.0, %v347
    %v349 = vmul.f32 %v346, %v348
    %v350 = vadd.f32 %v346, %v349
    %vm351 = vweird.f32 %v345
    %vm352 = vweird.f32 %v346
    %vm353 = vmor %vm351, %vm352
    %v354 = vsel %vm353, %v346, %v350
    %v355 = vand.u32 2147483647, %v345
    %vm356 = vcmp.eq.f32.partialorder %v355, 8.507059e+37
    %v357 = vand.u32 %v345, 2147483648
    %v358 = vor.u32 1.1754944e-38, %v357
    %v359 = vsel %vm356, %v358, %v354
    %v360 = vmul.f32 1.0, %v359
    %361 = vrot.lane.b32.xlu0 %v339, 64
    %v362 = vpop.permute.xlu0 %361
    %v364 = vmul.f32 %v360, %v362
    %366 = vrot.lane.b32.xlu0 %v364, 64
    %v367 = vpop.permute.xlu0 %366
    %v369 = vadd.f32 %v144, %v367
    %v370 = vtanh.pop %v369
    %v371 = vsub.f32 1.0, %v360
    %373 = vrot.lane.b32.xlu0 %v370, 96
    %v374 = vpop.permute.xlu0 %373
    %v376 = vmul.f32 %v371, %v374
    %v378 = vrot.slane %v316, 6
    %v380 = vmul.f32 %v360, %v378
    %v381 = vadd.f32 %v376, %v380
    %v382 = vpack.c.bf16 %v381, %v381
    %v384 = vrot.slane %v382, 3
    %385 = vrot.lane.b32.xlu0 %v384, 96
    %v386 = vpop.permute.xlu0 %385
    %v388 = vsel %vm130, %v386, 0
    %390 = vmatpush.bf16.msra.mxu0 0
    %391 = vmatpush.bf16.msra.mxu0 0
    %392 = vmatpush.bf16.msra.mxu0 0
    %393 = vmatpush.bf16.msra.mxu0 0
    %394 = vmatpush.bf16.msra.mxu0 0
    %395 = vmatpush.bf16.msra.mxu0 0
    %396 = vmatpush.bf16.msra.mxu0 %v74
    %397 = vmatpush.bf16.msra.mxu0 %v73
    %398 = vmatmul.bf16.gmra.mxu0 %v388
    %v399 = vpop.f32.mrf.mxu0
    %v400 = vadd.f32 %v148, %v399
    %v401 = vpop.f32.mrf.mxu0
    %402 = vdwg.mxu0
    %v403 = vadd.f32 %v146, %v400
    %v404 = vxor.u32 %v403, 2147483648
    %v405 = vmul.f32 %v404, 1.442695
    %v406 = vpow.pop %v405
    %v407 = vadd.f32 %v406, 1.0
    %v408 = vrcp.pop %v407
    %v409 = vmul.f32 %v407, %v408
    %v410 = vsub.f32 1.0, %v409
    %v411 = vmul.f32 %v408, %v410
    %v412 = vadd.f32 %v408, %v411
    %vm413 = vweird.f32 %v407
    %vm414 = vweird.f32 %v408
    %vm415 = vmor %vm413, %vm414
    %v416 = vsel %vm415, %v408, %v412
    %v417 = vand.u32 2147483647, %v407
    %vm418 = vcmp.eq.f32.partialorder %v417, 8.507059e+37
    %v419 = vand.u32 %v407, 2147483648
    %v420 = vor.u32 1.1754944e-38, %v419
    %v421 = vsel %vm418, %v420, %v416
    %v422 = vmul.f32 1.0, %v421
    %424 = vrot.lane.b32.xlu0 %v400, 64
    %v425 = vpop.permute.xlu0 %424
    %v427 = vmul.f32 %v422, %v425
    %429 = vrot.lane.b32.xlu0 %v427, 64
    %v430 = vpop.permute.xlu0 %429
    %v432 = vadd.f32 %v146, %v430
    %v433 = vtanh.pop %v432
    %v434 = vsub.f32 1.0, %v422
    %436 = vrot.lane.b32.xlu0 %v433, 96
    %v437 = vpop.permute.xlu0 %436
    %v439 = vmul.f32 %v434, %v437
    %v441 = vrot.slane %v381, 6
    %v443 = vmul.f32 %v422, %v441
    %v444 = vadd.f32 %v439, %v443
    %v445 = vpack.c.bf16 %v444, %v444
    %447 = vrot.lane.b32.xlu0 %v445, 96
    %v448 = vpop.permute.xlu0 %447
    %v450 = vsel %vm130, %v448, 0
    %452 = vmatpush.bf16.msra.mxu0 0
    %453 = vmatpush.bf16.msra.mxu0 0
    %454 = vmatpush.bf16.msra.mxu0 0
    %455 = vmatpush.bf16.msra.mxu0 0
    %456 = vmatpush.bf16.msra.mxu0 0
    %457 = vmatpush.bf16.msra.mxu0 0
    %458 = vmatpush.bf16.msra.mxu0 %v74
    %459 = vmatpush.bf16.msra.mxu0 %v73
    %460 = vmatmul.bf16.gmra.mxu0 %v450
    %v461 = vpop.f32.mrf.mxu0
    %v462 = vadd.f32 %v148, %v461
    %v463 = vpop.f32.mrf.mxu0
    %464 = vdwg.mxu0
    %v466 = vrot.slane %v462, 6
    %v468 = vadd.f32 %v146, %v466
    %v469 = vxor.u32 %v468, 2147483648
    %v470 = vmul.f32 %v469, 1.442695
    %v471 = vpow.pop %v470
    %v472 = vadd.f32 %v471, 1.0
    %v473 = vrcp.pop %v472
    %v474 = vmul.f32 %v472, %v473
    %v475 = vsub.f32 1.0, %v474
    %v476 = vmul.f32 %v473, %v475
    %v477 = vadd.f32 %v473, %v476
    %vm478 = vweird.f32 %v472
    %vm479 = vweird.f32 %v473
    %vm480 = vmor %vm478, %vm479
    %v481 = vsel %vm480, %v473, %v477
    %v482 = vand.u32 2147483647, %v472
    %vm483 = vcmp.eq.f32.partialorder %v482, 8.507059e+37
    %v484 = vand.u32 %v472, 2147483648
    %v485 = vor.u32 1.1754944e-38, %v484
    %v486 = vsel %vm483, %v485, %v481
    %v487 = vmul.f32 1.0, %v486
    %488 = vrot.lane.b32.xlu0 %v466, 64
    %v489 = vpop.permute.xlu0 %488
    %v491 = vmul.f32 %v487, %v489
    %493 = vrot.lane.b32.xlu0 %v491, 64
    %v494 = vpop.permute.xlu0 %493
    %v496 = vadd.f32 %v146, %v494
    %v497 = vtanh.pop %v496
    %v498 = vsub.f32 1.0, %v487
    %500 = vrot.lane.b32.xlu0 %v497, 96
    %v501 = vpop.permute.xlu0 %500
    %v503 = vmul.f32 %v498, %v501
    %v505 = vrot.slane %v444, 6
    %v507 = vmul.f32 %v487, %v505
    %v508 = vadd.f32 %v503, %v507
    %v509 = vpack.c.bf16 %v508, %v508
    %v511 = vrot.slane %v509, 1
    %512 = vrot.lane.b32.xlu0 %v511, 96
    %v513 = vpop.permute.xlu0 %512
    %v515 = vsel %vm130, %v513, 0
    %517 = vmatpush.bf16.msra.mxu0 0
    %518 = vmatpush.bf16.msra.mxu0 0
    %519 = vmatpush.bf16.msra.mxu0 0
    %520 = vmatpush.bf16.msra.mxu0 0
    %521 = vmatpush.bf16.msra.mxu0 0
    %522 = vmatpush.bf16.msra.mxu0 0
    %523 = vmatpush.bf16.msra.mxu0 %v74
    %524 = vmatpush.bf16.msra.mxu0 %v73
    %525 = vmatmul.bf16.gmra.mxu0 %v515
    %v526 = vpop.f32.mrf.mxu0
    %v527 = vadd.f32 %v148, %v526
    %v528 = vpop.f32.mrf.mxu0
    %529 = vdwg.mxu0
    %v531 = vrot.slane %v527, 4
    %v533 = vadd.f32 %v146, %v531
    %v534 = vxor.u32 %v533, 2147483648
    %v535 = vmul.f32 %v534, 1.442695
    %v536 = vpow.pop %v535
    %v537 = vadd.f32 %v536, 1.0
    %v538 = vrcp.pop %v537
    %v539 = vmul.f32 %v537, %v538
    %v540 = vsub.f32 1.0, %v539
    %v541 = vmul.f32 %v538, %v540
    %v542 = vadd.f32 %v538, %v541
    %vm543 = vweird.f32 %v537
    %vm544 = vweird.f32 %v538
    %vm545 = vmor %vm543, %vm544
    %v546 = vsel %vm545, %v538, %v542
    %v547 = vand.u32 2147483647, %v537
    %vm548 = vcmp.eq.f32.partialorder %v547, 8.507059e+37
    %v549 = vand.u32 %v537, 2147483648
    %v550 = vor.u32 1.1754944e-38, %v549
    %v551 = vsel %vm548, %v550, %v546
    %v552 = vmul.f32 1.0, %v551
    %553 = vrot.lane.b32.xlu0 %v531, 64
    %v554 = vpop.permute.xlu0 %553
    %v556 = vmul.f32 %v552, %v554
    %558 = vrot.lane.b32.xlu0 %v556, 64
    %v559 = vpop.permute.xlu0 %558
    %v561 = vadd.f32 %v146, %v559
    %v562 = vtanh.pop %v561
    %v563 = vsub.f32 1.0, %v552
    %565 = vrot.lane.b32.xlu0 %v562, 96
    %v566 = vpop.permute.xlu0 %565
    %v568 = vmul.f32 %v563, %v566
    %v570 = vrot.slane %v508, 6
    %v572 = vmul.f32 %v552, %v570
    %v573 = vadd.f32 %v568, %v572
    %v574 = vpack.c.bf16 %v573, %v573
    %v576 = vrot.slane %v574, 2
    %577 = vrot.lane.b32.xlu0 %v576, 96
    %v578 = vpop.permute.xlu0 %577
    %v580 = vsel %vm130, %v578, 0
    %582 = vmatpush.bf16.msra.mxu0 0
    %583 = vmatpush.bf16.msra.mxu0 0
    %584 = vmatpush.bf16.msra.mxu0 0
    %585 = vmatpush.bf16.msra.mxu0 0
    %586 = vmatpush.bf16.msra.mxu0 0
    %587 = vmatpush.bf16.msra.mxu0 0
    %588 = vmatpush.bf16.msra.mxu0 %v74
    %589 = vmatpush.bf16.msra.mxu0 %v73
    %590 = vmatmul.bf16.gmra.mxu0 %v580
    %v591 = vpop.f32.mrf.mxu0
    %v592 = vadd.f32 %v148, %v591
    %v593 = vpop.f32.mrf.mxu0
    %594 = vdwg.mxu0
    %v596 = vrot.slane %v592, 2
    %v598 = vadd.f32 %v146, %v596
    %v599 = vxor.u32 %v598, 2147483648
    %v600 = vmul.f32 %v599, 1.442695
    %v601 = vpow.pop %v600
    %v602 = vadd.f32 %v601, 1.0
    %v603 = vrcp.pop %v602
    %v604 = vmul.f32 %v602, %v603
    %v605 = vsub.f32 1.0, %v604
    %v606 = vmul.f32 %v603, %v605
    %v607 = vadd.f32 %v603, %v606
    %vm608 = vweird.f32 %v602
    %vm609 = vweird.f32 %v603
    %vm610 = vmor %vm608, %vm609
    %v611 = vsel %vm610, %v603, %v607
    %v612 = vand.u32 2147483647, %v602
    %vm613 = vcmp.eq.f32.partialorder %v612, 8.507059e+37
    %v614 = vand.u32 %v602, 2147483648
    %v615 = vor.u32 1.1754944e-38, %v614
    %v616 = vsel %vm613, %v615, %v611
    %v617 = vmul.f32 1.0, %v616
    %618 = vrot.lane.b32.xlu0 %v596, 64
    %v619 = vpop.permute.xlu0 %618
    %v621 = vmul.f32 %v617, %v619
    %623 = vrot.lane.b32.xlu0 %v621, 64
    %v624 = vpop.permute.xlu0 %623
    %v626 = vadd.f32 %v146, %v624
    %v627 = vtanh.pop %v626
    %v628 = vsub.f32 1.0, %v617
    %630 = vrot.lane.b32.xlu0 %v627, 96
    %v631 = vpop.permute.xlu0 %630
    %v633 = vmul.f32 %v628, %v631
    %v635 = vrot.slane %v573, 6
    %v637 = vmul.f32 %v617, %v635
    %v638 = vadd.f32 %v633, %v637
    %v639 = vpack.c.bf16 %v638, %v638
    %v640 = vperm.slane %v40, 0
    %v642 = vrot.slane %v639, 3
    %643 = vrot.lane.b32.xlu0 %v642, 96
    %v644 = vpop.permute.xlu0 %643
    %v646 = vsel %vm130, %v644, 0
    %648 = vmatpush.bf16.msra.mxu0 0
    %649 = vmatpush.bf16.msra.mxu0 0
    %650 = vmatpush.bf16.msra.mxu0 0
    %651 = vmatpush.bf16.msra.mxu0 0
    %652 = vmatpush.bf16.msra.mxu0 0
    %653 = vmatpush.bf16.msra.mxu0 0
    %654 = vmatpush.bf16.msra.mxu0 %v39
    %655 = vmatpush.bf16.msra.mxu0 %v38
    %656 = vmatmul.bf16.gmra.mxu0 %v646
    %v657 = vpop.f32.mrf.mxu0
    %v658 = vadd.f32 %v640, %v657
    %v659 = vpop.f32.mrf.mxu0
    %660 = vdwg.mxu0
    %v661 = vperm.slane %v63, 0
    %v662 = vadd.f32 %v111, %v661
    %v663 = vadd.f32 %v662, %v658
    %v664 = vxor.u32 %v663, 2147483648
    %v665 = vmul.f32 %v664, 1.442695
    %v666 = vpow.pop %v665
    %v667 = vadd.f32 %v666, 1.0
    %v668 = vrcp.pop %v667
    %v669 = vmul.f32 %v667, %v668
    %v670 = vsub.f32 1.0, %v669
    %v671 = vmul.f32 %v668, %v670
    %v672 = vadd.f32 %v668, %v671
    %vm673 = vweird.f32 %v667
    %vm674 = vweird.f32 %v668
    %vm675 = vmor %vm673, %vm674
    %v676 = vsel %vm675, %v668, %v672
    %v677 = vand.u32 2147483647, %v667
    %vm678 = vcmp.eq.f32.partialorder %v677, 8.507059e+37
    %v679 = vand.u32 %v667, 2147483648
    %v680 = vor.u32 1.1754944e-38, %v679
    %v681 = vsel %vm678, %v680, %v676
    %v682 = vmul.f32 1.0, %v681
    %684 = vrot.lane.b32.xlu0 %v658, 64
    %v685 = vpop.permute.xlu0 %684
    %v687 = vmul.f32 %v682, %v685
    %689 = vrot.lane.b32.xlu0 %v687, 64
    %v690 = vpop.permute.xlu0 %689
    %v692 = vadd.f32 %v662, %v690
    %v693 = vtanh.pop %v692
    %v694 = vsub.f32 1.0, %v682
    %696 = vrot.lane.b32.xlu0 %v693, 96
    %v697 = vpop.permute.xlu0 %696
    %v699 = vmul.f32 %v694, %v697
    %v701 = vrot.slane %v638, 6
    %v703 = vmul.f32 %v682, %v701
    %v704 = vadd.f32 %v699, %v703
    %v705 = vadd.f32 %v704, 0.0
    %v706 = vpack.c.bf16 %v704, %v704
    %708 = vrot.lane.b32.xlu0 %v706, 96
    %v709 = vpop.permute.xlu0 %708
    %v711 = vsel %vm130, %v709, 0
    %713 = vmatpush.bf16.msra.mxu0 0
    %714 = vmatpush.bf16.msra.mxu0 0
    %715 = vmatpush.bf16.msra.mxu0 0
    %716 = vmatpush.bf16.msra.mxu0 0
    %717 = vmatpush.bf16.msra.mxu0 0
    %718 = vmatpush.bf16.msra.mxu0 0
    %719 = vmatpush.bf16.msra.mxu0 %v39
    %720 = vmatpush.bf16.msra.mxu0 %v38
    %721 = vmatmul.bf16.gmra.mxu0 %v711
    %v722 = vpop.f32.mrf.mxu0
    %v723 = vadd.f32 %v640, %v722
    %v724 = vpop.f32.mrf.mxu0
    %725 = vdwg.mxu0
    %vm726 = vcmask 1042176
    %v727 = vsel %vm726, %v723, -inf
    %728 = vmax.xlane.f32.xlu0 %v727
    %v729 = vpop.xlane.xlu0 %728
    %vm730 = vcmp.ge.f32.partialorder %v723, %v729
    %731 = vrot.lane.b32.xlu0 %v77, 96
    %v732 = vpop.permute.xlu0 %731
    %v733 = vsel %vm730, %v732, 32
    %v734 = vsel %vm726, %v733, 2147483647
    %v735 = vand.u32 %v734, 65535
    %v736 = vshra.s32 %v734, 16
    %v737 = vcvt.s32.f32 %v735
    %v738 = vcvt.s32.f32 %v736
    %739 = vmin.xlane.f32.xlu0 %v738
    %v740 = vpop.xlane.xlu0 %739
    %vm741 = vcmp.eq.f32.partialorder %v738, %v740
    %v742 = vsel %vm741, %v737, inf
    %743 = vmin.xlane.f32.xlu0 %v742
    %v744 = vpop.xlane.xlu0 %743
    %v745 = vcvt.f32.s32 %v744
    %v746 = vcvt.f32.s32 %v740
    %v747 = vshll.u32 %v746, 16
    %v748 = vadd.s32 %v747, %v745
    %vm749 = vcmp.eq.s32.totalorder %v77, %v748
    %v750 = vsel %vm749, 1, 0
    %v751 = vcvt.s32.f32 %v750
    %v752 = vpack.c.bf16 %v751, %v751
    %v754 = vsel %vm130, %v752, 0
    %756 = vmatpush.bf16.msra.mxu0 0
    %757 = vmatpush.bf16.msra.mxu0 0
    %758 = vmatpush.bf16.msra.mxu0 0
    %759 = vmatpush.bf16.msra.mxu0 0
    %760 = vmatpush.bf16.msra.mxu0 0
    %761 = vmatpush.bf16.msra.mxu0 0
    %762 = vmatpush.bf16.msra.mxu0 %v68
    %763 = vmatpush.bf16.msra.mxu0 %v67
    %764 = vmatmul.bf16.gmra.mxu0 %v754
    %v765 = vpop.f32.mrf.mxu0
    %v766 = vadd.f32 %v111, %v765
    %v767 = vpop.f32.mrf.mxu0
    %768 = vdwg.mxu0
    %v769 = vadd.f32 %v766, %v723
    %v770 = vxor.u32 %v769, 2147483648
    %v771 = vmul.f32 %v770, 1.442695
    %v772 = vpow.pop %v771
    %v773 = vadd.f32 %v772, 1.0
    %v774 = vrcp.pop %v773
    %v775 = vmul.f32 %v773, %v774
    %v776 = vsub.f32 1.0, %v775
    %v777 = vmul.f32 %v774, %v776
    %v778 = vadd.f32 %v774, %v777
    %vm779 = vweird.f32 %v773
    %vm780 = vweird.f32 %v774
    %vm781 = vmor %vm779, %vm780
    %v782 = vsel %vm781, %v774, %v778
    %v783 = vand.u32 2147483647, %v773
    %vm784 = vcmp.eq.f32.partialorder %v783, 8.507059e+37
    %v785 = vand.u32 %v773, 2147483648
    %v786 = vor.u32 1.1754944e-38, %v785
    %v787 = vsel %vm784, %v786, %v782
    %v788 = vmul.f32 1.0, %v787
    %790 = vrot.lane.b32.xlu0 %v723, 64
    %v791 = vpop.permute.xlu0 %790
    %v793 = vmul.f32 %v788, %v791
    %795 = vrot.lane.b32.xlu0 %v793, 64
    %v796 = vpop.permute.xlu0 %795
    %v798 = vadd.f32 %v766, %v796
    %v799 = vtanh.pop %v798
    %v800 = vsub.f32 1.0, %v788
    %802 = vrot.lane.b32.xlu0 %v799, 96
    %v803 = vpop.permute.xlu0 %802
    %v805 = vmul.f32 %v800, %v803
    %v806 = vmul.f32 %v788, %v704
    %v807 = vadd.f32 %v805, %v806
    %v808 = vadd.f32 %v705, %v807
    %v809 = vpack.c.bf16 %v807, %v807
    %811 = vrot.lane.b32.xlu0 %v809, 96
    %v812 = vpop.permute.xlu0 %811
    %v814 = vsel %vm130, %v812, 0
    %816 = vmatpush.bf16.msra.mxu0 0
    %817 = vmatpush.bf16.msra.mxu0 0
    %818 = vmatpush.bf16.msra.mxu0 0
    %819 = vmatpush.bf16.msra.mxu0 0
    %820 = vmatpush.bf16.msra.mxu0 0
    %821 = vmatpush.bf16.msra.mxu0 0
    %822 = vmatpush.bf16.msra.mxu0 %v39
    %823 = vmatpush.bf16.msra.mxu0 %v38
    %824 = vmatmul.bf16.gmra.mxu0 %v814
    %v825 = vpop.f32.mrf.mxu0
    %v826 = vadd.f32 %v640, %v825
    %v827 = vpop.f32.mrf.mxu0
    %828 = vdwg.mxu0
    %v829 = vsel %vm726, %v826, -inf
    %830 = vmax.xlane.f32.xlu0 %v829
    %v831 = vpop.xlane.xlu0 %830
    %vm832 = vcmp.ge.f32.partialorder %v826, %v831
    %v833 = vsel %vm832, %v732, 32
    %v834 = vsel %vm726, %v833, 2147483647
    %v835 = vand.u32 %v834, 65535
    %v836 = vshra.s32 %v834, 16
    %v837 = vcvt.s32.f32 %v835
    %v838 = vcvt.s32.f32 %v836
    %839 = vmin.xlane.f32.xlu0 %v838
    %v840 = vpop.xlane.xlu0 %839
    %vm841 = vcmp.eq.f32.partialorder %v838, %v840
    %v842 = vsel %vm841, %v837, inf
    %843 = vmin.xlane.f32.xlu0 %v842
    %v844 = vpop.xlane.xlu0 %843
    %v845 = vcvt.f32.s32 %v844
    %v846 = vcvt.f32.s32 %v840
    %v847 = vshll.u32 %v846, 16
    %v848 = vadd.s32 %v847, %v845
    %vm849 = vcmp.eq.s32.totalorder %v77, %v848
    %v850 = vsel %vm849, 1, 0
    %v851 = vcvt.s32.f32 %v850
    %v852 = vpack.c.bf16 %v851, %v851
    %v854 = vsel %vm130, %v852, 0
    %856 = vmatpush.bf16.msra.mxu0 0
    %857 = vmatpush.bf16.msra.mxu0 0
    %858 = vmatpush.bf16.msra.mxu0 0
    %859 = vmatpush.bf16.msra.mxu0 0
    %860 = vmatpush.bf16.msra.mxu0 0
    %861 = vmatpush.bf16.msra.mxu0 0
    %862 = vmatpush.bf16.msra.mxu0 %v68
    %863 = vmatpush.bf16.msra.mxu0 %v67
    %864 = vmatmul.bf16.gmra.mxu0 %v854
    %v865 = vpop.f32.mrf.mxu0
    %v866 = vadd.f32 %v111, %v865
    %v867 = vpop.f32.mrf.mxu0
    %868 = vdwg.mxu0
    %v869 = vadd.f32 %v866, %v826
    %v870 = vxor.u32 %v869, 2147483648
    %v871 = vmul.f32 %v870, 1.442695
    %v872 = vpow.pop %v871
    %v873 = vadd.f32 %v872, 1.0
    %v874 = vrcp.pop %v873
    %v875 = vmul.f32 %v873, %v874
    %v876 = vsub.f32 1.0, %v875
    %v877 = vmul.f32 %v874, %v876
    %v878 = vadd.f32 %v874, %v877
    %vm879 = vweird.f32 %v873
    %vm880 = vweird.f32 %v874
    %vm881 = vmor %vm879, %vm880
    %v882 = vsel %vm881, %v874, %v878
    %v883 = vand.u32 2147483647, %v873
    %vm884 = vcmp.eq.f32.partialorder %v883, 8.507059e+37
    %v885 = vand.u32 %v873, 2147483648
    %v886 = vor.u32 1.1754944e-38, %v885
    %v887 = vsel %vm884, %v886, %v882
    %v888 = vmul.f32 1.0, %v887
    %890 = vrot.lane.b32.xlu0 %v826, 64
    %v891 = vpop.permute.xlu0 %890
    %v893 = vmul.f32 %v888, %v891
    %895 = vrot.lane.b32.xlu0 %v893, 64
    %v896 = vpop.permute.xlu0 %895
    %v898 = vadd.f32 %v866, %v896
    %v899 = vtanh.pop %v898
    %v900 = vsub.f32 1.0, %v888
    %902 = vrot.lane.b32.xlu0 %v899, 96
    %v903 = vpop.permute.xlu0 %902
    %v905 = vmul.f32 %v900, %v903
    %v906 = vmul.f32 %v888, %v807
    %v907 = vadd.f32 %v905, %v906
    %v908 = vadd.f32 %v808, %v907
    %v909 = vpack.c.bf16 %v907, %v907
    %911 = vrot.lane.b32.xlu0 %v909, 96
    %v912 = vpop.permute.xlu0 %911
    %v914 = vsel %vm130, %v912, 0
    %916 = vmatpush.bf16.msra.mxu0 0
    %917 = vmatpush.bf16.msra.mxu0 0
    %918 = vmatpush.bf16.msra.mxu0 0
    %919 = vmatpush.bf16.msra.mxu0 0
    %920 = vmatpush.bf16.msra.mxu0 0
    %921 = vmatpush.bf16.msra.mxu0 0
    %922 = vmatpush.bf16.msra.mxu0 %v39
    %923 = vmatpush.bf16.msra.mxu0 %v38
    %924 = vmatmul.bf16.gmra.mxu0 %v914
    %v925 = vpop.f32.mrf.mxu0
    %v926 = vadd.f32 %v640, %v925
    %v927 = vpop.f32.mrf.mxu0
    %928 = vdwg.mxu0
    %v929 = vsel %vm726, %v926, -inf
    %930 = vmax.xlane.f32.xlu0 %v929
    %v931 = vpop.xlane.xlu0 %930
    %vm932 = vcmp.ge.f32.partialorder %v926, %v931
    %v933 = vsel %vm932, %v732, 32
    %v934 = vsel %vm726, %v933, 2147483647
    %v935 = vand.u32 %v934, 65535
    %v936 = vshra.s32 %v934, 16
    %v937 = vcvt.s32.f32 %v935
    %v938 = vcvt.s32.f32 %v936
    %939 = vmin.xlane.f32.xlu0 %v938
    %v940 = vpop.xlane.xlu0 %939
    %vm941 = vcmp.eq.f32.partialorder %v938, %v940
    %v942 = vsel %vm941, %v937, inf
    %943 = vmin.xlane.f32.xlu0 %v942
    %v944 = vpop.xlane.xlu0 %943
    %v945 = vcvt.f32.s32 %v944
    %v946 = vcvt.f32.s32 %v940
    %v947 = vshll.u32 %v946, 16
    %v948 = vadd.s32 %v947, %v945
    %vm949 = vcmp.eq.s32.totalorder %v77, %v948
    %v950 = vsel %vm949, 1, 0
    %v951 = vcvt.s32.f32 %v950
    %v952 = vpack.c.bf16 %v951, %v951
    %v954 = vsel %vm130, %v952, 0
    %956 = vmatpush.bf16.msra.mxu0 0
    %957 = vmatpush.bf16.msra.mxu0 0
    %958 = vmatpush.bf16.msra.mxu0 0
    %959 = vmatpush.bf16.msra.mxu0 0
    %960 = vmatpush.bf16.msra.mxu0 0
    %961 = vmatpush.bf16.msra.mxu0 0
    %962 = vmatpush.bf16.msra.mxu0 %v68
    %963 = vmatpush.bf16.msra.mxu0 %v67
    %964 = vmatmul.bf16.gmra.mxu0 %v954
    %v965 = vpop.f32.mrf.mxu0
    %v966 = vadd.f32 %v111, %v965
    %v967 = vpop.f32.mrf.mxu0
    %968 = vdwg.mxu0
    %v969 = vadd.f32 %v966, %v926
    %v970 = vxor.u32 %v969, 2147483648
    %v971 = vmul.f32 %v970, 1.442695
    %v972 = vpow.pop %v971
    %v973 = vadd.f32 %v972, 1.0
    %v974 = vrcp.pop %v973
    %v975 = vmul.f32 %v973, %v974
    %v976 = vsub.f32 1.0, %v975
    %v977 = vmul.f32 %v974, %v976
    %v978 = vadd.f32 %v974, %v977
    %vm979 = vweird.f32 %v973
    %vm980 = vweird.f32 %v974
    %vm981 = vmor %vm979, %vm980
    %v982 = vsel %vm981, %v974, %v978
    %v983 = vand.u32 2147483647, %v973
    %vm984 = vcmp.eq.f32.partialorder %v983, 8.507059e+37
    %v985 = vand.u32 %v973, 2147483648
    %v986 = vor.u32 1.1754944e-38, %v985
    %v987 = vsel %vm984, %v986, %v982
    %v988 = vmul.f32 1.0, %v987
    %990 = vrot.lane.b32.xlu0 %v926, 64
    %v991 = vpop.permute.xlu0 %990
    %v993 = vmul.f32 %v988, %v991
    %995 = vrot.lane.b32.xlu0 %v993, 64
    %v996 = vpop.permute.xlu0 %995
    %v998 = vadd.f32 %v966, %v996
    %v999 = vtanh.pop %v998
    %v1000 = vsub.f32 1.0, %v988
    %1002 = vrot.lane.b32.xlu0 %v999, 96
    %v1003 = vpop.permute.xlu0 %1002
    %v1005 = vmul.f32 %v1000, %v1003
    %v1006 = vmul.f32 %v988, %v907
    %v1007 = vadd.f32 %v1005, %v1006
    %v1008 = vadd.f32 %v908, %v1007
    %v1009 = vpack.c.bf16 %v1007, %v1007
    %1011 = vrot.lane.b32.xlu0 %v1009, 96
    %v1012 = vpop.permute.xlu0 %1011
    %v1014 = vsel %vm130, %v1012, 0
    %1016 = vmatpush.bf16.msra.mxu0 0
    %1017 = vmatpush.bf16.msra.mxu0 0
    %1018 = vmatpush.bf16.msra.mxu0 0
    %1019 = vmatpush.bf16.msra.mxu0 0
    %1020 = vmatpush.bf16.msra.mxu0 0
    %1021 = vmatpush.bf16.msra.mxu0 0
    %1022 = vmatpush.bf16.msra.mxu0 %v39
    %1023 = vmatpush.bf16.msra.mxu0 %v38
    %1024 = vmatmul.bf16.gmra.mxu0 %v1014
    %v1025 = vpop.f32.mrf.mxu0
    %v1026 = vadd.f32 %v640, %v1025
    %v1027 = vpop.f32.mrf.mxu0
    %1028 = vdwg.mxu0
    %v1029 = vsel %vm726, %v1026, -inf
    %1030 = vmax.xlane.f32.xlu0 %v1029
    %v1031 = vpop.xlane.xlu0 %1030
    %vm1032 = vcmp.ge.f32.partialorder %v1026, %v1031
    %v1033 = vsel %vm1032, %v732, 32
    %v1034 = vsel %vm726, %v1033, 2147483647
    %v1035 = vand.u32 %v1034, 65535
    %v1036 = vshra.s32 %v1034, 16
    %v1037 = vcvt.s32.f32 %v1035
    %v1038 = vcvt.s32.f32 %v1036
    %1039 = vmin.xlane.f32.xlu0 %v1038
    %v1040 = vpop.xlane.xlu0 %1039
    %vm1041 = vcmp.eq.f32.partialorder %v1038, %v1040
    %v1042 = vsel %vm1041, %v1037, inf
    %1043 = vmin.xlane.f32.xlu0 %v1042
    %v1044 = vpop.xlane.xlu0 %1043
    %v1045 = vcvt.f32.s32 %v1044
    %v1046 = vcvt.f32.s32 %v1040
    %v1047 = vshll.u32 %v1046, 16
    %v1048 = vadd.s32 %v1047, %v1045
    %vm1049 = vcmp.eq.s32.totalorder %v77, %v1048
    %v1050 = vsel %vm1049, 1, 0
    %v1051 = vcvt.s32.f32 %v1050
    %v1052 = vpack.c.bf16 %v1051, %v1051
    %v1054 = vsel %vm130, %v1052, 0
    %1056 = vmatpush.bf16.msra.mxu0 0
    %1057 = vmatpush.bf16.msra.mxu0 0
    %1058 = vmatpush.bf16.msra.mxu0 0
    %1059 = vmatpush.bf16.msra.mxu0 0
    %1060 = vmatpush.bf16.msra.mxu0 0
    %1061 = vmatpush.bf16.msra.mxu0 0
    %1062 = vmatpush.bf16.msra.mxu0 %v68
    %1063 = vmatpush.bf16.msra.mxu0 %v67
    %1064 = vmatmul.bf16.gmra.mxu0 %v1054
    %v1065 = vpop.f32.mrf.mxu0
    %v1066 = vadd.f32 %v111, %v1065
    %v1067 = vpop.f32.mrf.mxu0
    %1068 = vdwg.mxu0
    %v1069 = vadd.f32 %v1066, %v1026
    %v1070 = vxor.u32 %v1069, 2147483648
    %v1071 = vmul.f32 %v1070, 1.442695
    %v1072 = vpow.pop %v1071
    %v1073 = vadd.f32 %v1072, 1.0
    %v1074 = vrcp.pop %v1073
    %v1075 = vmul.f32 %v1073, %v1074
    %v1076 = vsub.f32 1.0, %v1075
    %v1077 = vmul.f32 %v1074, %v1076
    %v1078 = vadd.f32 %v1074, %v1077
    %vm1079 = vweird.f32 %v1073
    %vm1080 = vweird.f32 %v1074
    %vm1081 = vmor %vm1079, %vm1080
    %v1082 = vsel %vm1081, %v1074, %v1078
    %v1083 = vand.u32 2147483647, %v1073
    %vm1084 = vcmp.eq.f32.partialorder %v1083, 8.507059e+37
    %v1085 = vand.u32 %v1073, 2147483648
    %v1086 = vor.u32 1.1754944e-38, %v1085
    %v1087 = vsel %vm1084, %v1086, %v1082
    %v1088 = vmul.f32 1.0, %v1087
    %1090 = vrot.lane.b32.xlu0 %v1026, 64
    %v1091 = vpop.permute.xlu0 %1090
    %v1093 = vmul.f32 %v1088, %v1091
    %1095 = vrot.lane.b32.xlu0 %v1093, 64
    %v1096 = vpop.permute.xlu0 %1095
    %v1098 = vadd.f32 %v1066, %v1096
    %v1099 = vtanh.pop %v1098
    %v1100 = vsub.f32 1.0, %v1088
    %1102 = vrot.lane.b32.xlu0 %v1099, 96
    %v1103 = vpop.permute.xlu0 %1102
    %v1105 = vmul.f32 %v1100, %v1103
    %v1106 = vmul.f32 %v1088, %v1007
    %v1107 = vadd.f32 %v1105, %v1106
    %v1108 = vadd.f32 %v1008, %v1107
    %v1109 = vpack.c.bf16 %v1107, %v1107
    %1111 = vrot.lane.b32.xlu0 %v1109, 96
    %v1112 = vpop.permute.xlu0 %1111
    %v1114 = vsel %vm130, %v1112, 0
    %1116 = vmatpush.bf16.msra.mxu0 0
    %1117 = vmatpush.bf16.msra.mxu0 0
    %1118 = vmatpush.bf16.msra.mxu0 0
    %1119 = vmatpush.bf16.msra.mxu0 0
    %1120 = vmatpush.bf16.msra.mxu0 0
    %1121 = vmatpush.bf16.msra.mxu0 0
    %1122 = vmatpush.bf16.msra.mxu0 %v39
    %1123 = vmatpush.bf16.msra.mxu0 %v38
    %1124 = vmatmul.bf16.gmra.mxu0 %v1114
    %v1125 = vpop.f32.mrf.mxu0
    %v1126 = vadd.f32 %v640, %v1125
    %v1127 = vpop.f32.mrf.mxu0
    %1128 = vdwg.mxu0
    %v1129 = vsel %vm726, %v1126, -inf
    %1130 = vmax.xlane.f32.xlu0 %v1129
    %v1131 = vpop.xlane.xlu0 %1130
    %vm1132 = vcmp.ge.f32.partialorder %v1126, %v1131
    %v1133 = vsel %vm1132, %v732, 32
    %v1134 = vsel %vm726, %v1133, 2147483647
    %v1135 = vand.u32 %v1134, 65535
    %v1136 = vshra.s32 %v1134, 16
    %v1137 = vcvt.s32.f32 %v1135
    %v1138 = vcvt.s32.f32 %v1136
    %1139 = vmin.xlane.f32.xlu0 %v1138
    %v1140 = vpop.xlane.xlu0 %1139
    %vm1141 = vcmp.eq.f32.partialorder %v1138, %v1140
    %v1142 = vsel %vm1141, %v1137, inf
    %1143 = vmin.xlane.f32.xlu0 %v1142
    %v1144 = vpop.xlane.xlu0 %1143
    %v1145 = vcvt.f32.s32 %v1144
    %v1146 = vcvt.f32.s32 %v1140
    %v1147 = vshll.u32 %v1146, 16
    %v1148 = vadd.s32 %v1147, %v1145
    %vm1149 = vcmp.eq.s32.totalorder %v77, %v1148
    %v1150 = vsel %vm1149, 1, 0
    %v1151 = vcvt.s32.f32 %v1150
    %v1152 = vpack.c.bf16 %v1151, %v1151
    %v1154 = vsel %vm130, %v1152, 0
    %1156 = vmatpush.bf16.msra.mxu0 0
    %1157 = vmatpush.bf16.msra.mxu0 0
    %1158 = vmatpush.bf16.msra.mxu0 0
    %1159 = vmatpush.bf16.msra.mxu0 0
    %1160 = vmatpush.bf16.msra.mxu0 0
    %1161 = vmatpush.bf16.msra.mxu0 0
    %1162 = vmatpush.bf16.msra.mxu0 %v68
    %1163 = vmatpush.bf16.msra.mxu0 %v67
    %1164 = vmatmul.bf16.gmra.mxu0 %v1154
    %v1165 = vpop.f32.mrf.mxu0
    %v1166 = vadd.f32 %v111, %v1165
    %v1167 = vpop.f32.mrf.mxu0
    %1168 = vdwg.mxu0
    %v1169 = vadd.f32 %v1166, %v1126
    %v1170 = vxor.u32 %v1169, 2147483648
    %v1171 = vmul.f32 %v1170, 1.442695
    %v1172 = vpow.pop %v1171
    %v1173 = vadd.f32 %v1172, 1.0
    %v1174 = vrcp.pop %v1173
    %v1175 = vmul.f32 %v1173, %v1174
    %v1176 = vsub.f32 1.0, %v1175
    %v1177 = vmul.f32 %v1174, %v1176
    %v1178 = vadd.f32 %v1174, %v1177
    %vm1179 = vweird.f32 %v1173
    %vm1180 = vweird.f32 %v1174
    %vm1181 = vmor %vm1179, %vm1180
    %v1182 = vsel %vm1181, %v1174, %v1178
    %v1183 = vand.u32 2147483647, %v1173
    %vm1184 = vcmp.eq.f32.partialorder %v1183, 8.507059e+37
    %v1185 = vand.u32 %v1173, 2147483648
    %v1186 = vor.u32 1.1754944e-38, %v1185
    %v1187 = vsel %vm1184, %v1186, %v1182
    %v1188 = vmul.f32 1.0, %v1187
    %1190 = vrot.lane.b32.xlu0 %v1126, 64
    %v1191 = vpop.permute.xlu0 %1190
    %v1193 = vmul.f32 %v1188, %v1191
    %1195 = vrot.lane.b32.xlu0 %v1193, 64
    %v1196 = vpop.permute.xlu0 %1195
    %v1198 = vadd.f32 %v1166, %v1196
    %v1199 = vtanh.pop %v1198
    %v1200 = vsub.f32 1.0, %v1188
    %1202 = vrot.lane.b32.xlu0 %v1199, 96
    %v1203 = vpop.permute.xlu0 %1202
    %v1205 = vmul.f32 %v1200, %v1203
    %v1206 = vmul.f32 %v1188, %v1107
    %v1207 = vadd.f32 %v1205, %v1206
    %v1208 = vadd.f32 %v1108, %v1207
    %v1209 = vpack.c.bf16 %v1207, %v1207
    %1211 = vrot.lane.b32.xlu0 %v1209, 96
    %v1212 = vpop.permute.xlu0 %1211
    %v1214 = vsel %vm130, %v1212, 0
    %1216 = vmatpush.bf16.msra.mxu0 0
    %1217 = vmatpush.bf16.msra.mxu0 0
    %1218 = vmatpush.bf16.msra.mxu0 0
    %1219 = vmatpush.bf16.msra.mxu0 0
    %1220 = vmatpush.bf16.msra.mxu0 0
    %1221 = vmatpush.bf16.msra.mxu0 0
    %1222 = vmatpush.bf16.msra.mxu0 %v39
    %1223 = vmatpush.bf16.msra.mxu0 %v38
    %1224 = vmatmul.bf16.gmra.mxu0 %v1214
    %v1225 = vpop.f32.mrf.mxu0
    %v1226 = vadd.f32 %v640, %v1225
    %v1227 = vpop.f32.mrf.mxu0
    %1228 = vdwg.mxu0
    %v1229 = vsel %vm726, %v1226, -inf
    %1230 = vmax.xlane.f32.xlu0 %v1229
    %v1231 = vpop.xlane.xlu0 %1230
    %vm1232 = vcmp.ge.f32.partialorder %v1226, %v1231
    %v1233 = vsel %vm1232, %v732, 32
    %v1234 = vsel %vm726, %v1233, 2147483647
    %v1235 = vand.u32 %v1234, 65535
    %v1236 = vshra.s32 %v1234, 16
    %v1237 = vcvt.s32.f32 %v1235
    %v1238 = vcvt.s32.f32 %v1236
    %1239 = vmin.xlane.f32.xlu0 %v1238
    %v1240 = vpop.xlane.xlu0 %1239
    %vm1241 = vcmp.eq.f32.partialorder %v1238, %v1240
    %v1242 = vsel %vm1241, %v1237, inf
    %1243 = vmin.xlane.f32.xlu0 %v1242
    %v1244 = vpop.xlane.xlu0 %1243
    %v1245 = vcvt.f32.s32 %v1244
    %v1246 = vcvt.f32.s32 %v1240
    %v1247 = vshll.u32 %v1246, 16
    %v1248 = vadd.s32 %v1247, %v1245
    %vm1249 = vcmp.eq.s32.totalorder %v77, %v1248
    %v1250 = vsel %vm1249, 1, 0
    %v1251 = vcvt.s32.f32 %v1250
    %v1252 = vpack.c.bf16 %v1251, %v1251
    %v1254 = vsel %vm130, %v1252, 0
    %1256 = vmatpush.bf16.msra.mxu0 0
    %1257 = vmatpush.bf16.msra.mxu0 0
    %1258 = vmatpush.bf16.msra.mxu0 0
    %1259 = vmatpush.bf16.msra.mxu0 0
    %1260 = vmatpush.bf16.msra.mxu0 0
    %1261 = vmatpush.bf16.msra.mxu0 0
    %1262 = vmatpush.bf16.msra.mxu0 %v68
    %1263 = vmatpush.bf16.msra.mxu0 %v67
    %1264 = vmatmul.bf16.gmra.mxu0 %v1254
    %v1265 = vpop.f32.mrf.mxu0
    %v1266 = vadd.f32 %v111, %v1265
    %v1267 = vpop.f32.mrf.mxu0
    %1268 = vdwg.mxu0
    %v1269 = vadd.f32 %v1266, %v1226
    %v1270 = vxor.u32 %v1269, 2147483648
    %v1271 = vmul.f32 %v1270, 1.442695
    %v1272 = vpow.pop %v1271
    %v1273 = vadd.f32 %v1272, 1.0
    %v1274 = vrcp.pop %v1273
    %v1275 = vmul.f32 %v1273, %v1274
    %v1276 = vsub.f32 1.0, %v1275
    %v1277 = vmul.f32 %v1274, %v1276
    %v1278 = vadd.f32 %v1274, %v1277
    %vm1279 = vweird.f32 %v1273
    %vm1280 = vweird.f32 %v1274
    %vm1281 = vmor %vm1279, %vm1280
    %v1282 = vsel %vm1281, %v1274, %v1278
    %v1283 = vand.u32 2147483647, %v1273
    %vm1284 = vcmp.eq.f32.partialorder %v1283, 8.507059e+37
    %v1285 = vand.u32 %v1273, 2147483648
    %v1286 = vor.u32 1.1754944e-38, %v1285
    %v1287 = vsel %vm1284, %v1286, %v1282
    %v1288 = vmul.f32 1.0, %v1287
    %1290 = vrot.lane.b32.xlu0 %v1226, 64
    %v1291 = vpop.permute.xlu0 %1290
    %v1293 = vmul.f32 %v1288, %v1291
    %1295 = vrot.lane.b32.xlu0 %v1293, 64
    %v1296 = vpop.permute.xlu0 %1295
    %v1298 = vadd.f32 %v1266, %v1296
    %v1299 = vtanh.pop %v1298
    %v1300 = vsub.f32 1.0, %v1288
    %1302 = vrot.lane.b32.xlu0 %v1299, 96
    %v1303 = vpop.permute.xlu0 %1302
    %v1305 = vmul.f32 %v1300, %v1303
    %v1306 = vmul.f32 %v1288, %v1207
    %v1307 = vadd.f32 %v1305, %v1306
    %v1308 = vadd.f32 %v1208, %v1307
    %v1309 = vpack.c.bf16 %v1307, %v1307
    %1311 = vrot.lane.b32.xlu0 %v1309, 96
    %v1312 = vpop.permute.xlu0 %1311
    %v1314 = vsel %vm130, %v1312, 0
    %1316 = vmatpush.bf16.msra.mxu0 0
    %1317 = vmatpush.bf16.msra.mxu0 0
    %1318 = vmatpush.bf16.msra.mxu0 0
    %1319 = vmatpush.bf16.msra.mxu0 0
    %1320 = vmatpush.bf16.msra.mxu0 0
    %1321 = vmatpush.bf16.msra.mxu0 0
    %1322 = vmatpush.bf16.msra.mxu0 %v39
    %1323 = vmatpush.bf16.msra.mxu0 %v38
    %1324 = vmatmul.bf16.gmra.mxu0 %v1314
    %v1325 = vpop.f32.mrf.mxu0
    %v1326 = vadd.f32 %v640, %v1325
    %v1327 = vpop.f32.mrf.mxu0
    %1328 = vdwg.mxu0
    %v1329 = vsel %vm726, %v1326, -inf
    %1330 = vmax.xlane.f32.xlu0 %v1329
    %v1331 = vpop.xlane.xlu0 %1330
    %vm1332 = vcmp.ge.f32.partialorder %v1326, %v1331
    %v1333 = vsel %vm1332, %v732, 32
    %v1334 = vsel %vm726, %v1333, 2147483647
    %v1335 = vand.u32 %v1334, 65535
    %v1336 = vshra.s32 %v1334, 16
    %v1337 = vcvt.s32.f32 %v1335
    %v1338 = vcvt.s32.f32 %v1336
    %1339 = vmin.xlane.f32.xlu0 %v1338
    %v1340 = vpop.xlane.xlu0 %1339
    %vm1341 = vcmp.eq.f32.partialorder %v1338, %v1340
    %v1342 = vsel %vm1341, %v1337, inf
    %1343 = vmin.xlane.f32.xlu0 %v1342
    %v1344 = vpop.xlane.xlu0 %1343
    %v1345 = vcvt.f32.s32 %v1344
    %v1346 = vcvt.f32.s32 %v1340
    %v1347 = vshll.u32 %v1346, 16
    %v1348 = vadd.s32 %v1347, %v1345
    %vm1349 = vcmp.eq.s32.totalorder %v77, %v1348
    %v1350 = vsel %vm1349, 1, 0
    %v1351 = vcvt.s32.f32 %v1350
    %v1352 = vpack.c.bf16 %v1351, %v1351
    %v1354 = vsel %vm130, %v1352, 0
    %1356 = vmatpush.bf16.msra.mxu0 0
    %1357 = vmatpush.bf16.msra.mxu0 0
    %1358 = vmatpush.bf16.msra.mxu0 0
    %1359 = vmatpush.bf16.msra.mxu0 0
    %1360 = vmatpush.bf16.msra.mxu0 0
    %1361 = vmatpush.bf16.msra.mxu0 0
    %1362 = vmatpush.bf16.msra.mxu0 %v68
    %1363 = vmatpush.bf16.msra.mxu0 %v67
    %1364 = vmatmul.bf16.gmra.mxu0 %v1354
    %v1365 = vpop.f32.mrf.mxu0
    %v1366 = vadd.f32 %v111, %v1365
    %v1367 = vpop.f32.mrf.mxu0
    %1368 = vdwg.mxu0
    %v1369 = vadd.f32 %v1366, %v1326
    %v1370 = vxor.u32 %v1369, 2147483648
    %v1371 = vmul.f32 %v1370, 1.442695
    %v1372 = vpow.pop %v1371
    %v1373 = vadd.f32 %v1372, 1.0
    %v1374 = vrcp.pop %v1373
    %v1375 = vmul.f32 %v1373, %v1374
    %v1376 = vsub.f32 1.0, %v1375
    %v1377 = vmul.f32 %v1374, %v1376
    %v1378 = vadd.f32 %v1374, %v1377
    %vm1379 = vweird.f32 %v1373
    %vm1380 = vweird.f32 %v1374
    %vm1381 = vmor %vm1379, %vm1380
    %v1382 = vsel %vm1381, %v1374, %v1378
    %v1383 = vand.u32 2147483647, %v1373
    %vm1384 = vcmp.eq.f32.partialorder %v1383, 8.507059e+37
    %v1385 = vand.u32 %v1373, 2147483648
    %v1386 = vor.u32 1.1754944e-38, %v1385
    %v1387 = vsel %vm1384, %v1386, %v1382
    %v1388 = vmul.f32 1.0, %v1387
    %1390 = vrot.lane.b32.xlu0 %v1326, 64
    %v1391 = vpop.permute.xlu0 %1390
    %v1393 = vmul.f32 %v1388, %v1391
    %1395 = vrot.lane.b32.xlu0 %v1393, 64
    %v1396 = vpop.permute.xlu0 %1395
    %v1398 = vadd.f32 %v1366, %v1396
    %v1399 = vtanh.pop %v1398
    %v1400 = vsub.f32 1.0, %v1388
    %1402 = vrot.lane.b32.xlu0 %v1399, 96
    %v1403 = vpop.permute.xlu0 %1402
    %v1405 = vmul.f32 %v1400, %v1403
    %v1406 = vmul.f32 %v1388, %v1307
    %v1407 = vadd.f32 %v1405, %v1406
    %v1408 = vadd.f32 %v1308, %v1407
    %v1409 = vpack.c.bf16 %v1407, %v1407
    %1411 = vrot.lane.b32.xlu0 %v1409, 96
    %v1412 = vpop.permute.xlu0 %1411
    %v1414 = vsel %vm130, %v1412, 0
    %1416 = vmatpush.bf16.msra.mxu0 0
    %1417 = vmatpush.bf16.msra.mxu0 0
    %1418 = vmatpush.bf16.msra.mxu0 0
    %1419 = vmatpush.bf16.msra.mxu0 0
    %1420 = vmatpush.bf16.msra.mxu0 0
    %1421 = vmatpush.bf16.msra.mxu0 0
    %1422 = vmatpush.bf16.msra.mxu0 %v39
    %1423 = vmatpush.bf16.msra.mxu0 %v38
    %1424 = vmatmul.bf16.gmra.mxu0 %v1414
    %v1425 = vpop.f32.mrf.mxu0
    %v1426 = vadd.f32 %v640, %v1425
    %v1427 = vpop.f32.mrf.mxu0
    %1428 = vdwg.mxu0
    %v1429 = vsel %vm726, %v1426, -inf
    %1430 = vmax.xlane.f32.xlu0 %v1429
    %v1431 = vpop.xlane.xlu0 %1430
    %vm1432 = vcmp.ge.f32.partialorder %v1426, %v1431
    %v1433 = vsel %vm1432, %v732, 32
    %v1434 = vsel %vm726, %v1433, 2147483647
    %v1435 = vand.u32 %v1434, 65535
    %v1436 = vshra.s32 %v1434, 16
    %v1437 = vcvt.s32.f32 %v1435
    %v1438 = vcvt.s32.f32 %v1436
    %1439 = vmin.xlane.f32.xlu0 %v1438
    %v1440 = vpop.xlane.xlu0 %1439
    %vm1441 = vcmp.eq.f32.partialorder %v1438, %v1440
    %v1442 = vsel %vm1441, %v1437, inf
    %1443 = vmin.xlane.f32.xlu0 %v1442
    %v1444 = vpop.xlane.xlu0 %1443
    %v1445 = vcvt.f32.s32 %v1444
    %v1446 = vcvt.f32.s32 %v1440
    %v1447 = vshll.u32 %v1446, 16
    %v1448 = vadd.s32 %v1447, %v1445
    %vm1449 = vcmp.eq.s32.totalorder %v77, %v1448
    %v1450 = vsel %vm1449, 1, 0
    %v1451 = vcvt.s32.f32 %v1450
    %v1452 = vpack.c.bf16 %v1451, %v1451
    %v1454 = vunpack.c.l.b16 %v852
    %v1455 = vpack.c.b16 %v1454, %v1454
    %v1456 = vrot.slane %v1455, 7
    %v1458 = vunpack.c.l.b16 %v952
    %v1459 = vpack.c.b16 %v1458, %v1458
    %v1460 = vrot.slane %v1459, 6
    %v1462 = vunpack.c.l.b16 %v1052
    %v1463 = vpack.c.b16 %v1462, %v1462
    %v1464 = vrot.slane %v1463, 5
    %v1466 = vunpack.c.l.b16 %v1152
    %v1467 = vpack.c.b16 %v1466, %v1466
    %v1469 = vunpack.c.l.b16 %v1252
    %v1470 = vpack.c.b16 %v1469, %v1469
    %v1471 = vrot.slane %v1470, 3
    %v1473 = vunpack.c.l.b16 %v1352
    %v1474 = vpack.c.b16 %v1473, %v1473
    %v1475 = vrot.slane %v1474, 2
    %v1477 = vunpack.c.l.b16 %v1452
    %v1478 = vpack.c.b16 %v1477, %v1477
    %v1479 = vrot.slane %v1478, 1
    %v1481 = vsel %vm97, %v752, %v1456
    %vm1482 = vcmask 1041408
    %v1484 = vsel %vm1482, %v1481, %v1460
    %vm1485 = vcmask 1042432
    %v1487 = vsel %vm1485, %v1484, %v1464
    %vm1488 = vcmask 1043456
    %v1490 = vsel %vm1488, %v1487, %v1467
    %vm1491 = vcmask 1044480
    %v1493 = vsel %vm1491, %v1490, %v1471
    %vm1494 = vcmask 1045504
    %v1496 = vsel %vm1494, %v1493, %v1475
    %vm1497 = vcmask 1046528
    %v1499 = vsel %vm1497, %v1496, %v1479
    %v1500 = vsel %vm130, %v1499, 0
    %1502 = vmatpush.bf16.msra.mxu0 0
    %1503 = vmatpush.bf16.msra.mxu0 0
    %1504 = vmatpush.bf16.msra.mxu0 0
    %1505 = vmatpush.bf16.msra.mxu0 0
    %1506 = vmatpush.bf16.msra.mxu0 0
    %1507 = vmatpush.bf16.msra.mxu0 0
    %1508 = vmatpush.bf16.msra.mxu0 %v62
    %1509 = vmatpush.bf16.msra.mxu0 %v61
    %1510 = vmatmul.bf16.gmra.mxu0 %v1500
    %v1511 = vpop.f32.mrf.mxu0
    %v1512 = vadd.f32 %v129, %v1511
    %v1513 = vpop.f32.mrf.mxu0
    %v1514 = vadd.f32 %v129, %v1513
    %1515 = vdwg.mxu0
    %v1517 = vrot.slane %v111, 6
    %v1519 = vrot.slane %v111, 4
    %v1521 = vrot.slane %v111, 2
    %v1523 = vsel %vm1482, %v111, %v1517
    %v1524 = vsel %vm1488, %v1523, %v1519
    %v1525 = vsel %vm1494, %v1524, %v1521
    %1526 = vmatpush.bf16.msra.mxu0 0
    %1527 = vmatpush.bf16.msra.mxu0 0
    %1528 = vmatpush.bf16.msra.mxu0 0
    %1529 = vmatpush.bf16.msra.mxu0 0
    %1530 = vmatpush.bf16.msra.mxu0 0
    %1531 = vmatpush.bf16.msra.mxu0 0
    %1532 = vmatpush.bf16.msra.mxu0 %v68
    %1533 = vmatpush.bf16.msra.mxu0 %v67
    %1534 = vmatmul.bf16.gmra.mxu0 %v1500
    %v1535 = vpop.f32.mrf.mxu0
    %v1536 = vadd.f32 %v1525, %v1535
    %v1537 = vpop.f32.mrf.mxu0
    %v1538 = vadd.f32 %v1525, %v1537
    %1539 = vdwg.mxu0
    %v1540 = vadd.f32 %v1512, %v148
    %v1541 = vxor.u32 %v1540, 2147483648
    %v1542 = vmul.f32 %v1541, 1.442695
    %v1543 = vpow.pop %v1542
    %v1544 = vadd.f32 %v1543, 1.0
    %v1545 = vrcp.pop %v1544
    %v1546 = vmul.f32 %v1544, %v1545
    %v1547 = vsub.f32 1.0, %v1546
    %v1548 = vmul.f32 %v1545, %v1547
    %v1549 = vadd.f32 %v1545, %v1548
    %vm1550 = vweird.f32 %v1544
    %vm1551 = vweird.f32 %v1545
    %vm1552 = vmor %vm1550, %vm1551
    %v1553 = vsel %vm1552, %v1545, %v1549
    %v1554 = vand.u32 2147483647, %v1544
    %vm1555 = vcmp.eq.f32.partialorder %v1554, 8.507059e+37
    %v1556 = vand.u32 %v1544, 2147483648
    %v1557 = vor.u32 1.1754944e-38, %v1556
    %v1558 = vsel %vm1555, %v1557, %v1553
    %v1559 = vmul.f32 1.0, %v1558
    %v1560 = vmul.f32 %v1559, %v171
    %1562 = vrot.lane.b32.xlu0 %v1560, 64
    %v1563 = vpop.permute.xlu0 %1562
    %v1565 = vadd.f32 %v1512, %v1563
    %v1566 = vtanh.pop %v1565
    %v1567 = vsub.f32 1.0, %v1559
    %1569 = vrot.lane.b32.xlu0 %v1566, 96
    %v1570 = vpop.permute.xlu0 %1569
    %v1572 = vmul.f32 %v1567, %v1570
    %v1573 = vmul.f32 %v1559, 0.0
    %v1574 = vadd.f32 %v1572, %v1573
    %v1575 = vpack.c.bf16 %v1574, %v1574
    %1577 = vrot.lane.b32.xlu0 %v1575, 96
    %v1578 = vpop.permute.xlu0 %1577
    %v1580 = vsel %vm130, %v1578, 0
    %1582 = vmatpush.bf16.msra.mxu0 0
    %1583 = vmatpush.bf16.msra.mxu0 0
    %1584 = vmatpush.bf16.msra.mxu0 0
    %1585 = vmatpush.bf16.msra.mxu0 0
    %1586 = vmatpush.bf16.msra.mxu0 0
    %1587 = vmatpush.bf16.msra.mxu0 0
    %1588 = vmatpush.bf16.msra.mxu0 %v74
    %1589 = vmatpush.bf16.msra.mxu0 %v73
    %1590 = vmatmul.bf16.gmra.mxu0 %v1580
    %v1591 = vpop.f32.mrf.mxu0
    %v1592 = vadd.f32 %v148, %v1591
    %v1593 = vpop.f32.mrf.mxu0
    %1594 = vdwg.mxu0
    %v1596 = vrot.slane %v1592, 6
    %v1598 = vadd.f32 %v1512, %v1596
    %v1599 = vxor.u32 %v1598, 2147483648
    %v1600 = vmul.f32 %v1599, 1.442695
    %v1601 = vpow.pop %v1600
    %v1602 = vadd.f32 %v1601, 1.0
    %v1603 = vrcp.pop %v1602
    %v1604 = vmul.f32 %v1602, %v1603
    %v1605 = vsub.f32 1.0, %v1604
    %v1606 = vmul.f32 %v1603, %v1605
    %v1607 = vadd.f32 %v1603, %v1606
    %vm1608 = vweird.f32 %v1602
    %vm1609 = vweird.f32 %v1603
    %vm1610 = vmor %vm1608, %vm1609
    %v1611 = vsel %vm1610, %v1603, %v1607
    %v1612 = vand.u32 2147483647, %v1602
    %vm1613 = vcmp.eq.f32.partialorder %v1612, 8.507059e+37
    %v1614 = vand.u32 %v1602, 2147483648
    %v1615 = vor.u32 1.1754944e-38, %v1614
    %v1616 = vsel %vm1613, %v1615, %v1611
    %v1617 = vmul.f32 1.0, %v1616
    %1618 = vrot.lane.b32.xlu0 %v1596, 64
    %v1619 = vpop.permute.xlu0 %1618
    %v1621 = vmul.f32 %v1617, %v1619
    %1623 = vrot.lane.b32.xlu0 %v1621, 64
    %v1624 = vpop.permute.xlu0 %1623
    %v1626 = vadd.f32 %v1512, %v1624
    %v1627 = vtanh.pop %v1626
    %v1628 = vsub.f32 1.0, %v1617
    %1630 = vrot.lane.b32.xlu0 %v1627, 96
    %v1631 = vpop.permute.xlu0 %1630
    %v1633 = vmul.f32 %v1628, %v1631
    %v1635 = vrot.slane %v1574, 6
    %v1637 = vmul.f32 %v1617, %v1635
    %v1638 = vadd.f32 %v1633, %v1637
    %v1639 = vpack.c.bf16 %v1638, %v1638
    %v1641 = vrot.slane %v1639, 1
    %1642 = vrot.lane.b32.xlu0 %v1641, 96
    %v1643 = vpop.permute.xlu0 %1642
    %v1645 = vsel %vm130, %v1643, 0
    %1647 = vmatpush.bf16.msra.mxu0 0
    %1648 = vmatpush.bf16.msra.mxu0 0
    %1649 = vmatpush.bf16.msra.mxu0 0
    %1650 = vmatpush.bf16.msra.mxu0 0
    %1651 = vmatpush.bf16.msra.mxu0 0
    %1652 = vmatpush.bf16.msra.mxu0 0
    %1653 = vmatpush.bf16.msra.mxu0 %v74
    %1654 = vmatpush.bf16.msra.mxu0 %v73
    %1655 = vmatmul.bf16.gmra.mxu0 %v1645
    %v1656 = vpop.f32.mrf.mxu0
    %v1657 = vadd.f32 %v148, %v1656
    %v1658 = vpop.f32.mrf.mxu0
    %1659 = vdwg.mxu0
    %v1661 = vrot.slane %v1657, 4
    %v1663 = vadd.f32 %v1512, %v1661
    %v1664 = vxor.u32 %v1663, 2147483648
    %v1665 = vmul.f32 %v1664, 1.442695
    %v1666 = vpow.pop %v1665
    %v1667 = vadd.f32 %v1666, 1.0
    %v1668 = vrcp.pop %v1667
    %v1669 = vmul.f32 %v1667, %v1668
    %v1670 = vsub.f32 1.0, %v1669
    %v1671 = vmul.f32 %v1668, %v1670
    %v1672 = vadd.f32 %v1668, %v1671
    %vm1673 = vweird.f32 %v1667
    %vm1674 = vweird.f32 %v1668
    %vm1675 = vmor %vm1673, %vm1674
    %v1676 = vsel %vm1675, %v1668, %v1672
    %v1677 = vand.u32 2147483647, %v1667
    %vm1678 = vcmp.eq.f32.partialorder %v1677, 8.507059e+37
    %v1679 = vand.u32 %v1667, 2147483648
    %v1680 = vor.u32 1.1754944e-38, %v1679
    %v1681 = vsel %vm1678, %v1680, %v1676
    %v1682 = vmul.f32 1.0, %v1681
    %1683 = vrot.lane.b32.xlu0 %v1661, 64
    %v1684 = vpop.permute.xlu0 %1683
    %v1686 = vmul.f32 %v1682, %v1684
    %1688 = vrot.lane.b32.xlu0 %v1686, 64
    %v1689 = vpop.permute.xlu0 %1688
    %v1691 = vadd.f32 %v1512, %v1689
    %v1692 = vtanh.pop %v1691
    %v1693 = vsub.f32 1.0, %v1682
    %1695 = vrot.lane.b32.xlu0 %v1692, 96
    %v1696 = vpop.permute.xlu0 %1695
    %v1698 = vmul.f32 %v1693, %v1696
    %v1700 = vrot.slane %v1638, 6
    %v1702 = vmul.f32 %v1682, %v1700
    %v1703 = vadd.f32 %v1698, %v1702
    %v1704 = vpack.c.bf16 %v1703, %v1703
    %v1706 = vrot.slane %v1704, 2
    %1707 = vrot.lane.b32.xlu0 %v1706, 96
    %v1708 = vpop.permute.xlu0 %1707
    %v1710 = vsel %vm130, %v1708, 0
    %1712 = vmatpush.bf16.msra.mxu0 0
    %1713 = vmatpush.bf16.msra.mxu0 0
    %1714 = vmatpush.bf16.msra.mxu0 0
    %1715 = vmatpush.bf16.msra.mxu0 0
    %1716 = vmatpush.bf16.msra.mxu0 0
    %1717 = vmatpush.bf16.msra.mxu0 0
    %1718 = vmatpush.bf16.msra.mxu0 %v74
    %1719 = vmatpush.bf16.msra.mxu0 %v73
    %1720 = vmatmul.bf16.gmra.mxu0 %v1710
    %v1721 = vpop.f32.mrf.mxu0
    %v1722 = vadd.f32 %v148, %v1721
    %v1723 = vpop.f32.mrf.mxu0
    %1724 = vdwg.mxu0
    %v1726 = vrot.slane %v1722, 2
    %v1728 = vadd.f32 %v1512, %v1726
    %v1729 = vxor.u32 %v1728, 2147483648
    %v1730 = vmul.f32 %v1729, 1.442695
    %v1731 = vpow.pop %v1730
    %v1732 = vadd.f32 %v1731, 1.0
    %v1733 = vrcp.pop %v1732
    %v1734 = vmul.f32 %v1732, %v1733
    %v1735 = vsub.f32 1.0, %v1734
    %v1736 = vmul.f32 %v1733, %v1735
    %v1737 = vadd.f32 %v1733, %v1736
    %vm1738 = vweird.f32 %v1732
    %vm1739 = vweird.f32 %v1733
    %vm1740 = vmor %vm1738, %vm1739
    %v1741 = vsel %vm1740, %v1733, %v1737
    %v1742 = vand.u32 2147483647, %v1732
    %vm1743 = vcmp.eq.f32.partialorder %v1742, 8.507059e+37
    %v1744 = vand.u32 %v1732, 2147483648
    %v1745 = vor.u32 1.1754944e-38, %v1744
    %v1746 = vsel %vm1743, %v1745, %v1741
    %v1747 = vmul.f32 1.0, %v1746
    %1748 = vrot.lane.b32.xlu0 %v1726, 64
    %v1749 = vpop.permute.xlu0 %1748
    %v1751 = vmul.f32 %v1747, %v1749
    %1753 = vrot.lane.b32.xlu0 %v1751, 64
    %v1754 = vpop.permute.xlu0 %1753
    %v1756 = vadd.f32 %v1512, %v1754
    %v1757 = vtanh.pop %v1756
    %v1758 = vsub.f32 1.0, %v1747
    %1760 = vrot.lane.b32.xlu0 %v1757, 96
    %v1761 = vpop.permute.xlu0 %1760
    %v1763 = vmul.f32 %v1758, %v1761
    %v1765 = vrot.slane %v1703, 6
    %v1767 = vmul.f32 %v1747, %v1765
    %v1768 = vadd.f32 %v1763, %v1767
    %v1769 = vpack.c.bf16 %v1768, %v1768
    %v1771 = vrot.slane %v1769, 3
    %1772 = vrot.lane.b32.xlu0 %v1771, 96
    %v1773 = vpop.permute.xlu0 %1772
    %v1775 = vsel %vm130, %v1773, 0
    %1777 = vmatpush.bf16.msra.mxu0 0
    %1778 = vmatpush.bf16.msra.mxu0 0
    %1779 = vmatpush.bf16.msra.mxu0 0
    %1780 = vmatpush.bf16.msra.mxu0 0
    %1781 = vmatpush.bf16.msra.mxu0 0
    %1782 = vmatpush.bf16.msra.mxu0 0
    %1783 = vmatpush.bf16.msra.mxu0 %v74
    %1784 = vmatpush.bf16.msra.mxu0 %v73
    %1785 = vmatmul.bf16.gmra.mxu0 %v1775
    %v1786 = vpop.f32.mrf.mxu0
    %v1787 = vadd.f32 %v148, %v1786
    %v1788 = vpop.f32.mrf.mxu0
    %1789 = vdwg.mxu0
    %v1790 = vadd.f32 %v1514, %v1787
    %v1791 = vxor.u32 %v1790, 2147483648
    %v1792 = vmul.f32 %v1791, 1.442695
    %v1793 = vpow.pop %v1792
    %v1794 = vadd.f32 %v1793, 1.0
    %v1795 = vrcp.pop %v1794
    %v1796 = vmul.f32 %v1794, %v1795
    %v1797 = vsub.f32 1.0, %v1796
    %v1798 = vmul.f32 %v1795, %v1797
    %v1799 = vadd.f32 %v1795, %v1798
    %vm1800 = vweird.f32 %v1794
    %vm1801 = vweird.f32 %v1795
    %vm1802 = vmor %vm1800, %vm1801
    %v1803 = vsel %vm1802, %v1795, %v1799
    %v1804 = vand.u32 2147483647, %v1794
    %vm1805 = vcmp.eq.f32.partialorder %v1804, 8.507059e+37
    %v1806 = vand.u32 %v1794, 2147483648
    %v1807 = vor.u32 1.1754944e-38, %v1806
    %v1808 = vsel %vm1805, %v1807, %v1803
    %v1809 = vmul.f32 1.0, %v1808
    %1811 = vrot.lane.b32.xlu0 %v1787, 64
    %v1812 = vpop.permute.xlu0 %1811
    %v1814 = vmul.f32 %v1809, %v1812
    %1816 = vrot.lane.b32.xlu0 %v1814, 64
    %v1817 = vpop.permute.xlu0 %1816
    %v1819 = vadd.f32 %v1514, %v1817
    %v1820 = vtanh.pop %v1819
    %v1821 = vsub.f32 1.0, %v1809
    %1823 = vrot.lane.b32.xlu0 %v1820, 96
    %v1824 = vpop.permute.xlu0 %1823
    %v1826 = vmul.f32 %v1821, %v1824
    %v1828 = vrot.slane %v1768, 6
    %v1830 = vmul.f32 %v1809, %v1828
    %v1831 = vadd.f32 %v1826, %v1830
    %v1832 = vpack.c.bf16 %v1831, %v1831
    %1834 = vrot.lane.b32.xlu0 %v1832, 96
    %v1835 = vpop.permute.xlu0 %1834
    %v1837 = vsel %vm130, %v1835, 0
    %1839 = vmatpush.bf16.msra.mxu0 0
    %1840 = vmatpush.bf16.msra.mxu0 0
    %1841 = vmatpush.bf16.msra.mxu0 0
    %1842 = vmatpush.bf16.msra.mxu0 0
    %1843 = vmatpush.bf16.msra.mxu0 0
    %1844 = vmatpush.bf16.msra.mxu0 0
    %1845 = vmatpush.bf16.msra.mxu0 %v74
    %1846 = vmatpush.bf16.msra.mxu0 %v73
    %1847 = vmatmul.bf16.gmra.mxu0 %v1837
    %v1848 = vpop.f32.mrf.mxu0
    %v1849 = vadd.f32 %v148, %v1848
    %v1850 = vpop.f32.mrf.mxu0
    %1851 = vdwg.mxu0
    %v1853 = vrot.slane %v1849, 6
    %v1855 = vadd.f32 %v1514, %v1853
    %v1856 = vxor.u32 %v1855, 2147483648
    %v1857 = vmul.f32 %v1856, 1.442695
    %v1858 = vpow.pop %v1857
    %v1859 = vadd.f32 %v1858, 1.0
    %v1860 = vrcp.pop %v1859
    %v1861 = vmul.f32 %v1859, %v1860
    %v1862 = vsub.f32 1.0, %v1861
    %v1863 = vmul.f32 %v1860, %v1862
    %v1864 = vadd.f32 %v1860, %v1863
    %vm1865 = vweird.f32 %v1859
    %vm1866 = vweird.f32 %v1860
    %vm1867 = vmor %vm1865, %vm1866
    %v1868 = vsel %vm1867, %v1860, %v1864
    %v1869 = vand.u32 2147483647, %v1859
    %vm1870 = vcmp.eq.f32.partialorder %v1869, 8.507059e+37
    %v1871 = vand.u32 %v1859, 2147483648
    %v1872 = vor.u32 1.1754944e-38, %v1871
    %v1873 = vsel %vm1870, %v1872, %v1868
    %v1874 = vmul.f32 1.0, %v1873
    %1875 = vrot.lane.b32.xlu0 %v1853, 64
    %v1876 = vpop.permute.xlu0 %1875
    %v1878 = vmul.f32 %v1874, %v1876
    %1880 = vrot.lane.b32.xlu0 %v1878, 64
    %v1881 = vpop.permute.xlu0 %1880
    %v1883 = vadd.f32 %v1514, %v1881
    %v1884 = vtanh.pop %v1883
    %v1885 = vsub.f32 1.0, %v1874
    %1887 = vrot.lane.b32.xlu0 %v1884, 96
    %v1888 = vpop.permute.xlu0 %1887
    %v1890 = vmul.f32 %v1885, %v1888
    %v1892 = vrot.slane %v1831, 6
    %v1894 = vmul.f32 %v1874, %v1892
    %v1895 = vadd.f32 %v1890, %v1894
    %v1896 = vpack.c.bf16 %v1895, %v1895
    %v1898 = vrot.slane %v1896, 1
    %1899 = vrot.lane.b32.xlu0 %v1898, 96
    %v1900 = vpop.permute.xlu0 %1899
    %v1902 = vsel %vm130, %v1900, 0
    %1904 = vmatpush.bf16.msra.mxu0 0
    %1905 = vmatpush.bf16.msra.mxu0 0
    %1906 = vmatpush.bf16.msra.mxu0 0
    %1907 = vmatpush.bf16.msra.mxu0 0
    %1908 = vmatpush.bf16.msra.mxu0 0
    %1909 = vmatpush.bf16.msra.mxu0 0
    %1910 = vmatpush.bf16.msra.mxu0 %v74
    %1911 = vmatpush.bf16.msra.mxu0 %v73
    %1912 = vmatmul.bf16.gmra.mxu0 %v1902
    %v1913 = vpop.f32.mrf.mxu0
    %v1914 = vadd.f32 %v148, %v1913
    %v1915 = vpop.f32.mrf.mxu0
    %1916 = vdwg.mxu0
    %v1918 = vrot.slane %v1914, 4
    %v1920 = vadd.f32 %v1514, %v1918
    %v1921 = vxor.u32 %v1920, 2147483648
    %v1922 = vmul.f32 %v1921, 1.442695
    %v1923 = vpow.pop %v1922
    %v1924 = vadd.f32 %v1923, 1.0
    %v1925 = vrcp.pop %v1924
    %v1926 = vmul.f32 %v1924, %v1925
    %v1927 = vsub.f32 1.0, %v1926
    %v1928 = vmul.f32 %v1925, %v1927
    %v1929 = vadd.f32 %v1925, %v1928
    %vm1930 = vweird.f32 %v1924
    %vm1931 = vweird.f32 %v1925
    %vm1932 = vmor %vm1930, %vm1931
    %v1933 = vsel %vm1932, %v1925, %v1929
    %v1934 = vand.u32 2147483647, %v1924
    %vm1935 = vcmp.eq.f32.partialorder %v1934, 8.507059e+37
    %v1936 = vand.u32 %v1924, 2147483648
    %v1937 = vor.u32 1.1754944e-38, %v1936
    %v1938 = vsel %vm1935, %v1937, %v1933
    %v1939 = vmul.f32 1.0, %v1938
    %1940 = vrot.lane.b32.xlu0 %v1918, 64
    %v1941 = vpop.permute.xlu0 %1940
    %v1943 = vmul.f32 %v1939, %v1941
    %1945 = vrot.lane.b32.xlu0 %v1943, 64
    %v1946 = vpop.permute.xlu0 %1945
    %v1948 = vadd.f32 %v1514, %v1946
    %v1949 = vtanh.pop %v1948
    %v1950 = vsub.f32 1.0, %v1939
    %1952 = vrot.lane.b32.xlu0 %v1949, 96
    %v1953 = vpop.permute.xlu0 %1952
    %v1955 = vmul.f32 %v1950, %v1953
    %v1957 = vrot.slane %v1895, 6
    %v1959 = vmul.f32 %v1939, %v1957
    %v1960 = vadd.f32 %v1955, %v1959
    %v1961 = vpack.c.bf16 %v1960, %v1960
    %v1963 = vrot.slane %v1961, 2
    %1964 = vrot.lane.b32.xlu0 %v1963, 96
    %v1965 = vpop.permute.xlu0 %1964
    %v1967 = vsel %vm130, %v1965, 0
    %1969 = vmatpush.bf16.msra.mxu0 0
    %1970 = vmatpush.bf16.msra.mxu0 0
    %1971 = vmatpush.bf16.msra.mxu0 0
    %1972 = vmatpush.bf16.msra.mxu0 0
    %1973 = vmatpush.bf16.msra.mxu0 0
    %1974 = vmatpush.bf16.msra.mxu0 0
    %1975 = vmatpush.bf16.msra.mxu0 %v74
    %1976 = vmatpush.bf16.msra.mxu0 %v73
    %1977 = vmatmul.bf16.gmra.mxu0 %v1967
    %v1978 = vpop.f32.mrf.mxu0
    %v1979 = vadd.f32 %v148, %v1978
    %v1980 = vpop.f32.mrf.mxu0
    %1981 = vdwg.mxu0
    %v1983 = vrot.slane %v1979, 2
    %v1985 = vadd.f32 %v1514, %v1983
    %v1986 = vxor.u32 %v1985, 2147483648
    %v1987 = vmul.f32 %v1986, 1.442695
    %v1988 = vpow.pop %v1987
    %v1989 = vadd.f32 %v1988, 1.0
    %v1990 = vrcp.pop %v1989
    %v1991 = vmul.f32 %v1989, %v1990
    %v1992 = vsub.f32 1.0, %v1991
    %v1993 = vmul.f32 %v1990, %v1992
    %v1994 = vadd.f32 %v1990, %v1993
    %vm1995 = vweird.f32 %v1989
    %vm1996 = vweird.f32 %v1990
    %vm1997 = vmor %vm1995, %vm1996
    %v1998 = vsel %vm1997, %v1990, %v1994
    %v1999 = vand.u32 2147483647, %v1989
    %vm2000 = vcmp.eq.f32.partialorder %v1999, 8.507059e+37
    %v2001 = vand.u32 %v1989, 2147483648
    %v2002 = vor.u32 1.1754944e-38, %v2001
    %v2003 = vsel %vm2000, %v2002, %v1998
    %v2004 = vmul.f32 1.0, %v2003
    %2005 = vrot.lane.b32.xlu0 %v1983, 64
    %v2006 = vpop.permute.xlu0 %2005
    %v2008 = vmul.f32 %v2004, %v2006
    %2010 = vrot.lane.b32.xlu0 %v2008, 64
    %v2011 = vpop.permute.xlu0 %2010
    %v2013 = vadd.f32 %v1514, %v2011
    %v2014 = vtanh.pop %v2013
    %v2015 = vsub.f32 1.0, %v2004
    %2017 = vrot.lane.b32.xlu0 %v2014, 96
    %v2018 = vpop.permute.xlu0 %2017
    %v2020 = vmul.f32 %v2015, %v2018
    %v2022 = vrot.slane %v1960, 6
    %v2024 = vmul.f32 %v2004, %v2022
    %v2025 = vadd.f32 %v2020, %v2024
    %v2026 = vpack.c.bf16 %v2025, %v2025
    %v2028 = vrot.slane %v2026, 3
    %2029 = vrot.lane.b32.xlu0 %v2028, 96
    %v2030 = vpop.permute.xlu0 %2029
    %v2032 = vsel %vm130, %v2030, 0
    %2034 = vmatpush.bf16.msra.mxu0 0
    %2035 = vmatpush.bf16.msra.mxu0 0
    %2036 = vmatpush.bf16.msra.mxu0 0
    %2037 = vmatpush.bf16.msra.mxu0 0
    %2038 = vmatpush.bf16.msra.mxu0 0
    %2039 = vmatpush.bf16.msra.mxu0 0
    %2040 = vmatpush.bf16.msra.mxu0 %v39
    %2041 = vmatpush.bf16.msra.mxu0 %v38
    %2042 = vmatmul.bf16.gmra.mxu0 %v2032
    %v2043 = vpop.f32.mrf.mxu0
    %v2044 = vadd.f32 %v640, %v2043
    %v2045 = vpop.f32.mrf.mxu0
    %2046 = vdwg.mxu0
    %v2047 = vadd.f32 %v1536, %v2044
    %v2048 = vxor.u32 %v2047, 2147483648
    %v2049 = vmul.f32 %v2048, 1.442695
    %v2050 = vpow.pop %v2049
    %v2051 = vadd.f32 %v2050, 1.0
    %v2052 = vrcp.pop %v2051
    %v2053 = vmul.f32 %v2051, %v2052
    %v2054 = vsub.f32 1.0, %v2053
    %v2055 = vmul.f32 %v2052, %v2054
    %v2056 = vadd.f32 %v2052, %v2055
    %vm2057 = vweird.f32 %v2051
    %vm2058 = vweird.f32 %v2052
    %vm2059 = vmor %vm2057, %vm2058
    %v2060 = vsel %vm2059, %v2052, %v2056
    %v2061 = vand.u32 2147483647, %v2051
    %vm2062 = vcmp.eq.f32.partialorder %v2061, 8.507059e+37
    %v2063 = vand.u32 %v2051, 2147483648
    %v2064 = vor.u32 1.1754944e-38, %v2063
    %v2065 = vsel %vm2062, %v2064, %v2060
    %v2066 = vmul.f32 1.0, %v2065
    %2068 = vrot.lane.b32.xlu0 %v2044, 64
    %v2069 = vpop.permute.xlu0 %2068
    %v2071 = vmul.f32 %v2066, %v2069
    %2073 = vrot.lane.b32.xlu0 %v2071, 64
    %v2074 = vpop.permute.xlu0 %2073
    %v2076 = vadd.f32 %v1536, %v2074
    %v2077 = vtanh.pop %v2076
    %v2078 = vsub.f32 1.0, %v2066
    %2080 = vrot.lane.b32.xlu0 %v2077, 96
    %v2081 = vpop.permute.xlu0 %2080
    %v2083 = vmul.f32 %v2078, %v2081
    %v2085 = vrot.slane %v2025, 6
    %v2087 = vmul.f32 %v2066, %v2085
    %v2088 = vadd.f32 %v2083, %v2087
    %v2089 = vadd.f32 %v2088, 0.0
    %v2090 = vpack.c.bf16 %v2088, %v2088
    %2092 = vrot.lane.b32.xlu0 %v2090, 96
    %v2093 = vpop.permute.xlu0 %2092
    %v2095 = vsel %vm130, %v2093, 0
    %2097 = vmatpush.bf16.msra.mxu0 0
    %2098 = vmatpush.bf16.msra.mxu0 0
    %2099 = vmatpush.bf16.msra.mxu0 0
    %2100 = vmatpush.bf16.msra.mxu0 0
    %2101 = vmatpush.bf16.msra.mxu0 0
    %2102 = vmatpush.bf16.msra.mxu0 0
    %2103 = vmatpush.bf16.msra.mxu0 %v39
    %2104 = vmatpush.bf16.msra.mxu0 %v38
    %2105 = vmatmul.bf16.gmra.mxu0 %v2095
    %v2106 = vpop.f32.mrf.mxu0
    %v2107 = vadd.f32 %v640, %v2106
    %v2108 = vpop.f32.mrf.mxu0
    %2109 = vdwg.mxu0
    %v2111 = vrot.slane %v2107, 6
    %v2113 = vadd.f32 %v1536, %v2111
    %v2114 = vxor.u32 %v2113, 2147483648
    %v2115 = vmul.f32 %v2114, 1.442695
    %v2116 = vpow.pop %v2115
    %v2117 = vadd.f32 %v2116, 1.0
    %v2118 = vrcp.pop %v2117
    %v2119 = vmul.f32 %v2117, %v2118
    %v2120 = vsub.f32 1.0, %v2119
    %v2121 = vmul.f32 %v2118, %v2120
    %v2122 = vadd.f32 %v2118, %v2121
    %vm2123 = vweird.f32 %v2117
    %vm2124 = vweird.f32 %v2118
    %vm2125 = vmor %vm2123, %vm2124
    %v2126 = vsel %vm2125, %v2118, %v2122
    %v2127 = vand.u32 2147483647, %v2117
    %vm2128 = vcmp.eq.f32.partialorder %v2127, 8.507059e+37
    %v2129 = vand.u32 %v2117, 2147483648
    %v2130 = vor.u32 1.1754944e-38, %v2129
    %v2131 = vsel %vm2128, %v2130, %v2126
    %v2132 = vmul.f32 1.0, %v2131
    %2133 = vrot.lane.b32.xlu0 %v2111, 64
    %v2134 = vpop.permute.xlu0 %2133
    %v2136 = vmul.f32 %v2132, %v2134
    %2138 = vrot.lane.b32.xlu0 %v2136, 64
    %v2139 = vpop.permute.xlu0 %2138
    %v2141 = vadd.f32 %v1536, %v2139
    %v2142 = vtanh.pop %v2141
    %v2143 = vsub.f32 1.0, %v2132
    %2145 = vrot.lane.b32.xlu0 %v2142, 96
    %v2146 = vpop.permute.xlu0 %2145
    %v2148 = vmul.f32 %v2143, %v2146
    %v2150 = vrot.slane %v2088, 6
    %v2152 = vmul.f32 %v2132, %v2150
    %v2153 = vadd.f32 %v2148, %v2152
    %v2155 = vrot.slane %v2153, 2
    %v2157 = vadd.f32 %v2089, %v2155
    %v2158 = vpack.c.bf16 %v2153, %v2153
    %v2160 = vrot.slane %v2158, 1
    %2161 = vrot.lane.b32.xlu0 %v2160, 96
    %v2162 = vpop.permute.xlu0 %2161
    %v2164 = vsel %vm130, %v2162, 0
    %2166 = vmatpush.bf16.msra.mxu0 0
    %2167 = vmatpush.bf16.msra.mxu0 0
    %2168 = vmatpush.bf16.msra.mxu0 0
    %2169 = vmatpush.bf16.msra.mxu0 0
    %2170 = vmatpush.bf16.msra.mxu0 0
    %2171 = vmatpush.bf16.msra.mxu0 0
    %2172 = vmatpush.bf16.msra.mxu0 %v39
    %2173 = vmatpush.bf16.msra.mxu0 %v38
    %2174 = vmatmul.bf16.gmra.mxu0 %v2164
    %v2175 = vpop.f32.mrf.mxu0
    %v2176 = vadd.f32 %v640, %v2175
    %v2177 = vpop.f32.mrf.mxu0
    %2178 = vdwg.mxu0
    %v2180 = vrot.slane %v2176, 4
    %v2182 = vadd.f32 %v1536, %v2180
    %v2183 = vxor.u32 %v2182, 2147483648
    %v2184 = vmul.f32 %v2183, 1.442695
    %v2185 = vpow.pop %v2184
    %v2186 = vadd.f32 %v2185, 1.0
    %v2187 = vrcp.pop %v2186
    %v2188 = vmul.f32 %v2186, %v2187
    %v2189 = vsub.f32 1.0, %v2188
    %v2190 = vmul.f32 %v2187, %v2189
    %v2191 = vadd.f32 %v2187, %v2190
    %vm2192 = vweird.f32 %v2186
    %vm2193 = vweird.f32 %v2187
    %vm2194 = vmor %vm2192, %vm2193
    %v2195 = vsel %vm2194, %v2187, %v2191
    %v2196 = vand.u32 2147483647, %v2186
    %vm2197 = vcmp.eq.f32.partialorder %v2196, 8.507059e+37
    %v2198 = vand.u32 %v2186, 2147483648
    %v2199 = vor.u32 1.1754944e-38, %v2198
    %v2200 = vsel %vm2197, %v2199, %v2195
    %v2201 = vmul.f32 1.0, %v2200
    %2202 = vrot.lane.b32.xlu0 %v2180, 64
    %v2203 = vpop.permute.xlu0 %2202
    %v2205 = vmul.f32 %v2201, %v2203
    %2207 = vrot.lane.b32.xlu0 %v2205, 64
    %v2208 = vpop.permute.xlu0 %2207
    %v2210 = vadd.f32 %v1536, %v2208
    %v2211 = vtanh.pop %v2210
    %v2212 = vsub.f32 1.0, %v2201
    %2214 = vrot.lane.b32.xlu0 %v2211, 96
    %v2215 = vpop.permute.xlu0 %2214
    %v2217 = vmul.f32 %v2212, %v2215
    %v2218 = vrot.slane %v2153, 6
    %v2220 = vmul.f32 %v2201, %v2218
    %v2221 = vadd.f32 %v2217, %v2220
    %v2223 = vrot.slane %v2221, 4
    %v2225 = vadd.f32 %v2157, %v2223
    %v2226 = vpack.c.bf16 %v2221, %v2221
    %v2228 = vrot.slane %v2226, 2
    %2229 = vrot.lane.b32.xlu0 %v2228, 96
    %v2230 = vpop.permute.xlu0 %2229
    %v2232 = vsel %vm130, %v2230, 0
    %2234 = vmatpush.bf16.msra.mxu0 0
    %2235 = vmatpush.bf16.msra.mxu0 0
    %2236 = vmatpush.bf16.msra.mxu0 0
    %2237 = vmatpush.bf16.msra.mxu0 0
    %2238 = vmatpush.bf16.msra.mxu0 0
    %2239 = vmatpush.bf16.msra.mxu0 0
    %2240 = vmatpush.bf16.msra.mxu0 %v39
    %2241 = vmatpush.bf16.msra.mxu0 %v38
    %2242 = vmatmul.bf16.gmra.mxu0 %v2232
    %v2243 = vpop.f32.mrf.mxu0
    %v2244 = vadd.f32 %v640, %v2243
    %v2245 = vpop.f32.mrf.mxu0
    %2246 = vdwg.mxu0
    %v2248 = vrot.slane %v2244, 2
    %v2250 = vadd.f32 %v1536, %v2248
    %v2251 = vxor.u32 %v2250, 2147483648
    %v2252 = vmul.f32 %v2251, 1.442695
    %v2253 = vpow.pop %v2252
    %v2254 = vadd.f32 %v2253, 1.0
    %v2255 = vrcp.pop %v2254
    %v2256 = vmul.f32 %v2254, %v2255
    %v2257 = vsub.f32 1.0, %v2256
    %v2258 = vmul.f32 %v2255, %v2257
    %v2259 = vadd.f32 %v2255, %v2258
    %vm2260 = vweird.f32 %v2254
    %vm2261 = vweird.f32 %v2255
    %vm2262 = vmor %vm2260, %vm2261
    %v2263 = vsel %vm2262, %v2255, %v2259
    %v2264 = vand.u32 2147483647, %v2254
    %vm2265 = vcmp.eq.f32.partialorder %v2264, 8.507059e+37
    %v2266 = vand.u32 %v2254, 2147483648
    %v2267 = vor.u32 1.1754944e-38, %v2266
    %v2268 = vsel %vm2265, %v2267, %v2263
    %v2269 = vmul.f32 1.0, %v2268
    %2270 = vrot.lane.b32.xlu0 %v2248, 64
    %v2271 = vpop.permute.xlu0 %2270
    %v2273 = vmul.f32 %v2269, %v2271
    %2275 = vrot.lane.b32.xlu0 %v2273, 64
    %v2276 = vpop.permute.xlu0 %2275
    %v2278 = vadd.f32 %v1536, %v2276
    %v2279 = vtanh.pop %v2278
    %v2280 = vsub.f32 1.0, %v2269
    %2282 = vrot.lane.b32.xlu0 %v2279, 96
    %v2283 = vpop.permute.xlu0 %2282
    %v2285 = vmul.f32 %v2280, %v2283
    %v2286 = vrot.slane %v2221, 6
    %v2288 = vmul.f32 %v2269, %v2286
    %v2289 = vadd.f32 %v2285, %v2288
    %v2291 = vrot.slane %v2289, 6
    %v2293 = vadd.f32 %v2225, %v2291
    %v2294 = vpack.c.bf16 %v2289, %v2289
    %v2296 = vrot.slane %v2294, 3
    %2297 = vrot.lane.b32.xlu0 %v2296, 96
    %v2298 = vpop.permute.xlu0 %2297
    %v2300 = vsel %vm130, %v2298, 0
    %2302 = vmatpush.bf16.msra.mxu0 0
    %2303 = vmatpush.bf16.msra.mxu0 0
    %2304 = vmatpush.bf16.msra.mxu0 0
    %2305 = vmatpush.bf16.msra.mxu0 0
    %2306 = vmatpush.bf16.msra.mxu0 0
    %2307 = vmatpush.bf16.msra.mxu0 0
    %2308 = vmatpush.bf16.msra.mxu0 %v39
    %2309 = vmatpush.bf16.msra.mxu0 %v38
    %2310 = vmatmul.bf16.gmra.mxu0 %v2300
    %v2311 = vpop.f32.mrf.mxu0
    %v2312 = vadd.f32 %v640, %v2311
    %v2313 = vpop.f32.mrf.mxu0
    %2314 = vdwg.mxu0
    %v2315 = vadd.f32 %v1538, %v2312
    %v2316 = vxor.u32 %v2315, 2147483648
    %v2317 = vmul.f32 %v2316, 1.442695
    %v2318 = vpow.pop %v2317
    %v2319 = vadd.f32 %v2318, 1.0
    %v2320 = vrcp.pop %v2319
    %v2321 = vmul.f32 %v2319, %v2320
    %v2322 = vsub.f32 1.0, %v2321
    %v2323 = vmul.f32 %v2320, %v2322
    %v2324 = vadd.f32 %v2320, %v2323
    %vm2325 = vweird.f32 %v2319
    %vm2326 = vweird.f32 %v2320
    %vm2327 = vmor %vm2325, %vm2326
    %v2328 = vsel %vm2327, %v2320, %v2324
    %v2329 = vand.u32 2147483647, %v2319
    %vm2330 = vcmp.eq.f32.partialorder %v2329, 8.507059e+37
    %v2331 = vand.u32 %v2319, 2147483648
    %v2332 = vor.u32 1.1754944e-38, %v2331
    %v2333 = vsel %vm2330, %v2332, %v2328
    %v2334 = vmul.f32 1.0, %v2333
    %2336 = vrot.lane.b32.xlu0 %v2312, 64
    %v2337 = vpop.permute.xlu0 %2336
    %v2339 = vmul.f32 %v2334, %v2337
    %2341 = vrot.lane.b32.xlu0 %v2339, 64
    %v2342 = vpop.permute.xlu0 %2341
    %v2344 = vadd.f32 %v1538, %v2342
    %v2345 = vtanh.pop %v2344
    %v2346 = vsub.f32 1.0, %v2334
    %2348 = vrot.lane.b32.xlu0 %v2345, 96
    %v2349 = vpop.permute.xlu0 %2348
    %v2351 = vmul.f32 %v2346, %v2349
    %v2352 = vmul.f32 %v2334, %v2291
    %v2353 = vadd.f32 %v2351, %v2352
    %v2354 = vadd.f32 %v2293, %v2353
    %v2355 = vpack.c.bf16 %v2353, %v2353
    %2357 = vrot.lane.b32.xlu0 %v2355, 96
    %v2358 = vpop.permute.xlu0 %2357
    %v2360 = vsel %vm130, %v2358, 0
    %2362 = vmatpush.bf16.msra.mxu0 0
    %2363 = vmatpush.bf16.msra.mxu0 0
    %2364 = vmatpush.bf16.msra.mxu0 0
    %2365 = vmatpush.bf16.msra.mxu0 0
    %2366 = vmatpush.bf16.msra.mxu0 0
    %2367 = vmatpush.bf16.msra.mxu0 0
    %2368 = vmatpush.bf16.msra.mxu0 %v39
    %2369 = vmatpush.bf16.msra.mxu0 %v38
    %2370 = vmatmul.bf16.gmra.mxu0 %v2360
    %v2371 = vpop.f32.mrf.mxu0
    %v2372 = vadd.f32 %v640, %v2371
    %v2373 = vpop.f32.mrf.mxu0
    %2374 = vdwg.mxu0
    %v2376 = vrot.slane %v2372, 6
    %v2378 = vadd.f32 %v1538, %v2376
    %v2379 = vxor.u32 %v2378, 2147483648
    %v2380 = vmul.f32 %v2379, 1.442695
    %v2381 = vpow.pop %v2380
    %v2382 = vadd.f32 %v2381, 1.0
    %v2383 = vrcp.pop %v2382
    %v2384 = vmul.f32 %v2382, %v2383
    %v2385 = vsub.f32 1.0, %v2384
    %v2386 = vmul.f32 %v2383, %v2385
    %v2387 = vadd.f32 %v2383, %v2386
    %vm2388 = vweird.f32 %v2382
    %vm2389 = vweird.f32 %v2383
    %vm2390 = vmor %vm2388, %vm2389
    %v2391 = vsel %vm2390, %v2383, %v2387
    %v2392 = vand.u32 2147483647, %v2382
    %vm2393 = vcmp.eq.f32.partialorder %v2392, 8.507059e+37
    %v2394 = vand.u32 %v2382, 2147483648
    %v2395 = vor.u32 1.1754944e-38, %v2394
    %v2396 = vsel %vm2393, %v2395, %v2391
    %v2397 = vmul.f32 1.0, %v2396
    %2398 = vrot.lane.b32.xlu0 %v2376, 64
    %v2399 = vpop.permute.xlu0 %2398
    %v2401 = vmul.f32 %v2397, %v2399
    %2403 = vrot.lane.b32.xlu0 %v2401, 64
    %v2404 = vpop.permute.xlu0 %2403
    %v2406 = vadd.f32 %v1538, %v2404
    %v2407 = vtanh.pop %v2406
    %v2408 = vsub.f32 1.0, %v2397
    %2410 = vrot.lane.b32.xlu0 %v2407, 96
    %v2411 = vpop.permute.xlu0 %2410
    %v2413 = vmul.f32 %v2408, %v2411
    %v2415 = vrot.slane %v2353, 6
    %v2417 = vmul.f32 %v2397, %v2415
    %v2418 = vadd.f32 %v2413, %v2417
    %v2420 = vrot.slane %v2418, 2
    %v2422 = vadd.f32 %v2354, %v2420
    %v2423 = vpack.c.bf16 %v2418, %v2418
    %v2425 = vrot.slane %v2423, 1
    %2426 = vrot.lane.b32.xlu0 %v2425, 96
    %v2427 = vpop.permute.xlu0 %2426
    %v2429 = vsel %vm130, %v2427, 0
    %2431 = vmatpush.bf16.msra.mxu0 0
    %2432 = vmatpush.bf16.msra.mxu0 0
    %2433 = vmatpush.bf16.msra.mxu0 0
    %2434 = vmatpush.bf16.msra.mxu0 0
    %2435 = vmatpush.bf16.msra.mxu0 0
    %2436 = vmatpush.bf16.msra.mxu0 0
    %2437 = vmatpush.bf16.msra.mxu0 %v39
    %2438 = vmatpush.bf16.msra.mxu0 %v38
    %2439 = vmatmul.bf16.gmra.mxu0 %v2429
    %v2440 = vpop.f32.mrf.mxu0
    %v2441 = vadd.f32 %v640, %v2440
    %v2442 = vpop.f32.mrf.mxu0
    %2443 = vdwg.mxu0
    %v2445 = vrot.slane %v2441, 4
    %v2447 = vadd.f32 %v1538, %v2445
    %v2448 = vxor.u32 %v2447, 2147483648
    %v2449 = vmul.f32 %v2448, 1.442695
    %v2450 = vpow.pop %v2449
    %v2451 = vadd.f32 %v2450, 1.0
    %v2452 = vrcp.pop %v2451
    %v2453 = vmul.f32 %v2451, %v2452
    %v2454 = vsub.f32 1.0, %v2453
    %v2455 = vmul.f32 %v2452, %v2454
    %v2456 = vadd.f32 %v2452, %v2455
    %vm2457 = vweird.f32 %v2451
    %vm2458 = vweird.f32 %v2452
    %vm2459 = vmor %vm2457, %vm2458
    %v2460 = vsel %vm2459, %v2452, %v2456
    %v2461 = vand.u32 2147483647, %v2451
    %vm2462 = vcmp.eq.f32.partialorder %v2461, 8.507059e+37
    %v2463 = vand.u32 %v2451, 2147483648
    %v2464 = vor.u32 1.1754944e-38, %v2463
    %v2465 = vsel %vm2462, %v2464, %v2460
    %v2466 = vmul.f32 1.0, %v2465
    %2467 = vrot.lane.b32.xlu0 %v2445, 64
    %v2468 = vpop.permute.xlu0 %2467
    %v2470 = vmul.f32 %v2466, %v2468
    %2472 = vrot.lane.b32.xlu0 %v2470, 64
    %v2473 = vpop.permute.xlu0 %2472
    %v2475 = vadd.f32 %v1538, %v2473
    %v2476 = vtanh.pop %v2475
    %v2477 = vsub.f32 1.0, %v2466
    %2479 = vrot.lane.b32.xlu0 %v2476, 96
    %v2480 = vpop.permute.xlu0 %2479
    %v2482 = vmul.f32 %v2477, %v2480
    %v2483 = vrot.slane %v2418, 6
    %v2485 = vmul.f32 %v2466, %v2483
    %v2486 = vadd.f32 %v2482, %v2485
    %v2488 = vrot.slane %v2486, 4
    %v2490 = vadd.f32 %v2422, %v2488
    %v2491 = vpack.c.bf16 %v2486, %v2486
    %v2493 = vrot.slane %v2491, 2
    %2494 = vrot.lane.b32.xlu0 %v2493, 96
    %v2495 = vpop.permute.xlu0 %2494
    %v2497 = vsel %vm130, %v2495, 0
    %2499 = vmatpush.bf16.msra.mxu0 0
    %2500 = vmatpush.bf16.msra.mxu0 0
    %2501 = vmatpush.bf16.msra.mxu0 0
    %2502 = vmatpush.bf16.msra.mxu0 0
    %2503 = vmatpush.bf16.msra.mxu0 0
    %2504 = vmatpush.bf16.msra.mxu0 0
    %2505 = vmatpush.bf16.msra.mxu0 %v39
    %2506 = vmatpush.bf16.msra.mxu0 %v38
    %2507 = vmatmul.bf16.gmra.mxu0 %v2497
    %v2508 = vpop.f32.mrf.mxu0
    %v2509 = vadd.f32 %v640, %v2508
    %v2510 = vpop.f32.mrf.mxu0
    %2511 = vdwg.mxu0
    %v2513 = vrot.slane %v2509, 2
    %v2515 = vadd.f32 %v1538, %v2513
    %v2516 = vxor.u32 %v2515, 2147483648
    %v2517 = vmul.f32 %v2516, 1.442695
    %v2518 = vpow.pop %v2517
    %v2519 = vadd.f32 %v2518, 1.0
    %v2520 = vrcp.pop %v2519
    %v2521 = vmul.f32 %v2519, %v2520
    %v2522 = vsub.f32 1.0, %v2521
    %v2523 = vmul.f32 %v2520, %v2522
    %v2524 = vadd.f32 %v2520, %v2523
    %vm2525 = vweird.f32 %v2519
    %vm2526 = vweird.f32 %v2520
    %vm2527 = vmor %vm2525, %vm2526
    %v2528 = vsel %vm2527, %v2520, %v2524
    %v2529 = vand.u32 2147483647, %v2519
    %vm2530 = vcmp.eq.f32.partialorder %v2529, 8.507059e+37
    %v2531 = vand.u32 %v2519, 2147483648
    %v2532 = vor.u32 1.1754944e-38, %v2531
    %v2533 = vsel %vm2530, %v2532, %v2528
    %v2534 = vmul.f32 1.0, %v2533
    %2535 = vrot.lane.b32.xlu0 %v2513, 64
    %v2536 = vpop.permute.xlu0 %2535
    %v2538 = vmul.f32 %v2534, %v2536
    %2540 = vrot.lane.b32.xlu0 %v2538, 64
    %v2541 = vpop.permute.xlu0 %2540
    %v2543 = vadd.f32 %v1538, %v2541
    %v2544 = vtanh.pop %v2543
    %v2545 = vsub.f32 1.0, %v2534
    %2547 = vrot.lane.b32.xlu0 %v2544, 96
    %v2548 = vpop.permute.xlu0 %2547
    %v2550 = vmul.f32 %v2545, %v2548
    %v2551 = vrot.slane %v2486, 6
    %v2553 = vmul.f32 %v2534, %v2551
    %v2554 = vadd.f32 %v2550, %v2553
    %v2556 = vrot.slane %v2554, 6
    %v2558 = vadd.f32 %v2490, %v2556
    %v2559 = vpack.c.bf16 %v2554, %v2554
    %v2561 = vrot.slane %v2559, 3
    %2562 = vrot.lane.b32.xlu0 %v2561, 96
    %v2563 = vpop.permute.xlu0 %2562
    %v2565 = vsel %vm130, %v2563, 0
    %2567 = vmatpush.bf16.msra.mxu0 0
    %2568 = vmatpush.bf16.msra.mxu0 0
    %2569 = vmatpush.bf16.msra.mxu0 0
    %2570 = vmatpush.bf16.msra.mxu0 0
    %2571 = vmatpush.bf16.msra.mxu0 0
    %2572 = vmatpush.bf16.msra.mxu0 0
    %2573 = vmatpush.bf16.msra.mxu0 %v39
    %2574 = vmatpush.bf16.msra.mxu0 %v38
    %2575 = vmatmul.bf16.gmra.mxu0 %v2565
    %v2576 = vpop.f32.mrf.mxu0
    %v2577 = vadd.f32 %v640, %v2576
    %v2578 = vpop.f32.mrf.mxu0
    %2579 = vdwg.mxu0
    %v2580 = vrot.slane %v2176, 7
    %v2582 = vrot.slane %v2244, 6
    %v2584 = vrot.slane %v2312, 5
    %v2586 = vrot.slane %v2372, 4
    %v2588 = vrot.slane %v2441, 3
    %v2591 = vrot.slane %v2577, 1
    %v2593 = vrot.slane %v2107, 1
    %v2595 = vrot.slane %v2244, 7
    %v2597 = vrot.slane %v2312, 6
    %v2599 = vrot.slane %v2372, 5
    %v2601 = vrot.slane %v2509, 3
    %v2603 = vrot.slane %v2577, 2
    %v2605 = vsel %vm97, %v2107, %v2580
    %v2606 = vsel %vm1482, %v2605, %v2582
    %v2607 = vsel %vm1485, %v2606, %v2584
    %v2608 = vsel %vm1488, %v2607, %v2586
    %v2609 = vsel %vm1491, %v2608, %v2588
    %v2610 = vsel %vm1494, %v2609, %v2513
    %v2611 = vsel %vm1497, %v2610, %v2591
    %v2612 = vsel %vm97, %v2593, %v2176
    %v2613 = vsel %vm1482, %v2612, %v2595
    %v2614 = vsel %vm1485, %v2613, %v2597
    %v2615 = vsel %vm1488, %v2614, %v2599
    %v2616 = vsel %vm1491, %v2615, %v2445
    %v2617 = vsel %vm1494, %v2616, %v2601
    %v2618 = vsel %vm1497, %v2617, %v2603
    %2621 = vrot.lane.b32.xlu0 %v2611, 32
    %v2622 = vpop.permute.xlu0 %2621
    %2623 = vrot.lane.b32.xlu0 %v2618, 32
    %v2624 = vpop.permute.xlu0 %2623
    %2627 = vst.msk [vmem:[#allocation5] sm:$0xff] %vm130, %v2622
    %2628 = vst.msk [vmem:[#allocation5 + $0x8] sm:$0xff] %vm130, %v2624
    %v2630 = vrot.slane %v2558, 6
    %v2632 = vrot.slane %v2558, 4
    %v2634 = vsel %vm1482, %v1408, %v2630
    %v2635 = vsel %vm1488, %v2634, %v2632
    %v2636 = vmul.f32 %v2635, 0.125
    %v2637 = vpack.c.bf16 %v2636, %v2636
    %v2639 = vunpack.c.l.b16 %v84
    %v2640 = vpack.c.b16 %v2639, %v2639
    %v2641 = vrot.slane %v2640, 7
    %v2643 = vunpack.c.l.b16 %v92
    %v2644 = vpack.c.b16 %v2643, %v2643
    %v2645 = vrot.slane %v2644, 6
    %v2648 = vsel %vm97, %v92, %v2641
    %v2650 = vsel %vm1482, %v2648, %v2645
    %v2651 = vsel %vm93, %v2650, 0
    %v2654 = vsel %vm97, %v42, 0
    %2656 = vmatpush.bf16.msra.mxu0 0
    %2657 = vmatpush.bf16.msra.mxu0 0
    %2658 = vmatpush.bf16.msra.mxu0 0
    %2659 = vmatpush.bf16.msra.mxu0 0
    %2660 = vmatpush.bf16.msra.mxu0 0
    %2661 = vmatpush.bf16.msra.mxu0 0
    %2662 = vmatpush.bf16.msra.mxu0 0
    %2663 = vmatpush.bf16.msra.mxu0 %v2654
    %2664 = vmatmul.bf16.gmra.mxu0 %v2651
    %v2665 = vpop.f32.mrf.mxu0
    %v2666 = vadd.f32 0.0, %v2665
    %v2667 = vpop.f32.mrf.mxu0
    %2668 = vdwg.mxu0
    %2670 = vrot.lane.b32.xlu0 %v2637, 96
    %v2671 = vpop.permute.xlu0 %2670
    %v2673 = vsel %vm130, %v2671, 0
    %2675 = vmatpush.bf16.msra.mxu0 0
    %2676 = vmatpush.bf16.msra.mxu0 0
    %2677 = vmatpush.bf16.msra.mxu0 0
    %2678 = vmatpush.bf16.msra.mxu0 0
    %2679 = vmatpush.bf16.msra.mxu0 0
    %2680 = vmatpush.bf16.msra.mxu0 0
    %2681 = vmatpush.bf16.msra.mxu0 %v53
    %2682 = vmatpush.bf16.msra.mxu0 %v52
    %2683 = vmatmul.bf16.gmra.mxu0 %v2673
    %v2684 = vpop.f32.mrf.mxu0
    %v2685 = vadd.f32 %v2666, %v2684
    %v2686 = vpop.f32.mrf.mxu0
    %2687 = vdwg.mxu0
    %v2688 = vtanh.pop %v2685
    %v2689 = vpack.c.bf16 %v2688, %v2688
    %v2690 = vperm.slane %v43, 0
    %vm2691 = vcmask 130048
    %v2693 = vsel %vm2691, %v2689, 0
    %2695 = vmatpush.bf16.msra.mxu0 0
    %2696 = vmatpush.bf16.msra.mxu0 0
    %2697 = vmatpush.bf16.msra.mxu0 0
    %2698 = vmatpush.bf16.msra.mxu0 0
    %2699 = vmatpush.bf16.msra.mxu0 0
    %2700 = vmatpush.bf16.msra.mxu0 0
    %2701 = vmatpush.bf16.msra.mxu0 0
    %2702 = vmatpush.bf16.msra.mxu0 %v56
    %2703 = vmatmul.bf16.gmra.mxu0 %v2693
    %v2704 = vpop.f32.mrf.mxu0
    %v2705 = vadd.f32 %v2690, %v2704
    %v2706 = vpop.f32.mrf.mxu0
    %2707 = vdwg.mxu0
    %vm2708 = vcmask 5120
    %2709 = vst.msk [vmem:[%s3] sm:$0x3f] %vm2708, %v2705
    // Predicated region
    $region18: #{cptg_forward.1} parent=1 // pred_check
      _
    $region19: #{cptg_forward.1} parent=1 // pred_check_branch
      %2711 = sbr.rel (0) target = $region21
    $region20: #{cptg_forward.1} parent=1 // pred_region
      _
    $region21: #{cptg_forward.1} parent=1 // pred_fallthru
      _
    // Predicated region
    $region22: #{cptg_forward.1} parent=1 // pred_check
      _
    $region23: #{cptg_forward.1} parent=1 // pred_check_branch
      %2713 = sbr.rel (0) target = $region25
    $region24: #{cptg_forward.1} parent=1 // pred_region
      %2715 = vsyncadd [#allocation4], 0
      %s2716 = sshll.u32 [#allocation5], 4
      %s2717 = int_to_ptr.vmem [resolvable:$true] %s2716
      %s2718 = sshll.u32 %s4, 4
      %s2719 = int_to_ptr.hbm [resolvable:$true] %s2718
      %2724 = dma.vmem_to_hbm [thread:$0]  %s2717, 256, %s2719, [#allocation4], 128, 128, 8
    $region25: #{cptg_forward.1} parent=1 // pred_fallthru
      _
    // Predicated region
    $region26: #{cptg_forward.1} parent=1 // pred_check
      _
    $region27: #{cptg_forward.1} parent=1 // pred_check_branch
      %2726 = sbr.rel (0) target = $region29
    $region28: #{cptg_forward.1} parent=1 // pred_region
      _
    $region29: #{cptg_forward.1} parent=1 // pred_fallthru
      _
    // Predicated region
    $region30: #{cptg_forward.1} parent=1 // pred_check
      _
    $region31: #{cptg_forward.1} parent=1 // pred_check_branch
      %2728 = sbr.rel (0) target = $region33
    $region32: #{cptg_forward.1} parent=1 // pred_region
      %2730 = dma.done [#allocation4], 256
    $region33: #{cptg_forward.1} parent=1 // pred_fallthru
      _
    %2731 = vsyncpa [#allocation3], 1
    %2732 = vsyncpa [#allocation4], 1

</llo_original>
